<compile_context>
chip_gen: v7x
topology: tpu7x:2x2x1
jax: 0.10.0
libtpu: 0.0.40
codegen_flags: <defaults>
</compile_context>

<pallas_src>
import functools

import jax
import jax.numpy as jnp
import numpy as np
from jax import lax
from jax.experimental import pallas as pl
from jax.experimental.pallas import tpu as pltpu

EPS = 1e-5
_LANE = 128  # lane-dense padding for the logits output


# ----------------------------------------------------------------------------
# Fused whole-network kernel
# ----------------------------------------------------------------------------
def _global_cnn_kernel(x_ref,
                       t1_ref, s1_ref, b1_ref,
                       t2_ref, s2_ref, b2_ref,
                       t3_ref, s3_ref, b3_ref,
                       t4_ref, s4_ref, b4_ref,
                       bns_ref, bnt_ref, wl_ref, bl_ref,
                       logits_ref, feat_ref,
                       slab1, slab2, slab3, slab4,
                       *, pool_dim, hidden):
    bt = x_ref.shape[0]
    p = pool_dim
    c = hidden

    def zero_pad_rows(slab):
        # Only the 1-row top/bottom halo needs zeros (left/right conv padding
        # is handled inside the Toeplitz weights); interiors are overwritten.
        rows, lanes = slab.shape[1], slab.shape[2]
        z = jnp.zeros((bt, 1, lanes), slab.dtype)
        slab[:, 0:1, :] = z
        slab[:, rows - 1:rows, :] = z

    def conv_bn_relu(slab, t_ref, sc_ref, sh_ref):
        """3x3 same-conv as three dense bf16 MXU matmuls + folded BN + ReLU."""
        h = slab.shape[1] - 2
        kdim = slab.shape[2]
        acc = None
        for dy in range(3):
            xs = slab[:, dy:dy + h, :].reshape(bt * h, kdim).astype(jnp.bfloat16)
            part = jnp.dot(xs, t_ref[dy], preferred_element_type=jnp.float32)
            acc = part if acc is None else acc + part
        # folded conv-bias + BatchNorm2d (running stats) + ReLU, in f32
        return jnp.maximum(acc * sc_ref[...] + sh_ref[...], 0.0)  # (bt*h, w*c)

    def pool_and_stash(y, slab_next):
        """p x p max pool, then one full-lane-width store into the next slab."""
        h = y.shape[0] // bt
        lanes = y.shape[1]
        # height pool: pairwise max over groups of p consecutive rows
        yr = y.reshape((bt * h) // p, p, lanes)
        yh = yr[:, 0, :]
        for i in range(1, p):
            yh = jnp.maximum(yh, yr[:, i, :])
        # width pool: pairwise max with lane-rolled copies; the selection of
        # every p-th C-block happens for free inside the next Toeplitz weight
        pm = yh
        for i in range(1, p):
            pm = jnp.maximum(pm, pltpu.roll(yh, shift=lanes - i * c, axis=1))
        slab_next[:, 1:h // p + 1, :] = pm.reshape(bt, h // p, lanes)

    zero_pad_rows(slab1)
    zero_pad_rows(slab2)
    zero_pad_rows(slab3)
    zero_pad_rows(slab4)

    # stash the (already channel-in-lane packed) input into slab 1's interior
    h1 = slab1.shape[1] - 2
    slab1[:, 1:h1 + 1, :] = x_ref[...]

    y1 = conv_bn_relu(slab1, t1_ref, s1_ref, b1_ref)
    pool_and_stash(y1, slab2)
    y2 = conv_bn_relu(slab2, t2_ref, s2_ref, b2_ref)
    pool_and_stash(y2, slab3)
    y3 = conv_bn_relu(slab3, t3_ref, s3_ref, b3_ref)
    pool_and_stash(y3, slab4)
    y4 = conv_bn_relu(slab4, t4_ref, s4_ref, b4_ref)   # (bt*h4, w4*c) f32

    # Head: adaptive_avg_pool2d(1) + flatten + Dropout(eval=id) + BN1d + Linear
    h4 = y4.shape[0] // bt
    w4 = y4.shape[1] // c
    acc_w = y4[:, 0:c]
    for j in range(1, w4):
        acc_w = acc_w + y4[:, j * c:(j + 1) * c]
    ar = acc_w.reshape(bt, h4, c)
    feat = ar[:, 0, :]
    for r in range(1, h4):
        feat = feat + ar[:, r, :]
    feat = feat * (1.0 / float(h4 * w4))               # (bt, c) f32
    feat_ref[...] = feat
    z = (feat * bns_ref[...] + bnt_ref[...]).astype(jnp.bfloat16)
    # Linear weight/bias are pre-padded to 128 output lanes -> dense store
    logits_ref[...] = (jnp.dot(z, wl_ref[...], preferred_element_type=jnp.float32)
                       + bl_ref[...])


# ----------------------------------------------------------------------------
# Host-side weight preparation
# ----------------------------------------------------------------------------
def _conv_toeplitz(w_hwio, w_out, in_stride):
    """Block-Toeplitz conv weight for the channel-in-lane packed layout.

    Input row layout: lane block (in_stride * j) holds input column j (other
    blocks may hold pooled garbage and get zero weights).  The conv's
    left/right zero padding is realised by simply omitting out-of-range taps.
    Returns (3, in_stride*w_out*cin, w_out*cout) in bf16 (one matrix per dy).
    """
    w_np = np.asarray(w_hwio, np.float32)              # (3, 3, cin, cout)
    cin, cout = w_np.shape[2], w_np.shape[3]
    n_blocks = in_stride * w_out
    t = np.zeros((3, n_blocks * cin, w_out * cout), np.float32)
    for dy in range(3):
        for wo in range(w_out):
            for dx in range(3):
                ic = wo + dx - 1                       # input column (padding=1)
                if 0 <= ic < w_out:
                    u = in_stride * ic
                    t[dy, u * cin:(u + 1) * cin,
                      wo * cout:(wo + 1) * cout] = w_np[dy, dx]
    return jnp.asarray(t, jnp.bfloat16)


def global_cnn_forward(x_nchw, params, features=False):
    """PyTorch-style NCHW input; full forward in a single fused pallas_call."""
    x = jnp.transpose(x_nchw, (0, 2, 3, 1)).astype(jnp.float32)  # NCHW -> NHWC
    B, H, W, Cin = x.shape
    p = params["pool_dim"]
    blocks = params["blocks"]
    hidden = blocks[0]["w_hwio"].shape[3]
    out_dim = params["w_lin"].shape[1]
    assert H % (p ** 3) == 0 and W % (p ** 3) == 0

    x_packed = x.reshape(B, H, W * Cin)               # channels folded into lanes

    hs = [H, H // p, H // p ** 2, H // p ** 3]
    ws = [W, W // p, W // p ** 2, W // p ** 3]
    strides = [1, p, p, p]                            # lane-block stride per block
    slab_lanes = [W * Cin, ws[0] * hidden, ws[1] * hidden, ws[2] * hidden]

    ins, in_specs = [], []

    def add_full(a):
        ins.append(a)
        in_specs.append(pl.BlockSpec(a.shape, lambda i, _nd=a.ndim: (0,) * _nd))

    add_full(x_packed)
    for k, blk in enumerate(blocks):
        t = _conv_toeplitz(blk["w_hwio"], ws[k], strides[k])
        sc = jnp.asarray(np.tile(np.asarray(blk["scale"], np.float32),
                                 ws[k]).reshape(1, -1))
        sh = jnp.asarray(np.tile(np.asarray(blk["shift"], np.float32),
                                 ws[k]).reshape(1, -1))
        add_full(t)
        add_full(sc)
        add_full(sh)

    add_full(params["bn1d_scale"])
    add_full(params["bn1d_shift"])
    # lane-dense head: pad the Linear weight/bias to 128 output lanes
    wl = np.zeros((hidden, _LANE), np.float32)
    wl[:, :out_dim] = np.asarray(params["w_lin"], np.float32)
    bl = np.zeros((1, _LANE), np.float32)
    bl[:, :out_dim] = np.asarray(params["b_lin"], np.float32)
    add_full(jnp.asarray(wl, jnp.bfloat16))
    add_full(jnp.asarray(bl, jnp.float32))

    out_shape = (jax.ShapeDtypeStruct((B, _LANE), jnp.float32),
                 jax.ShapeDtypeStruct((B, hidden), jnp.float32))
    out_specs = (pl.BlockSpec((B, _LANE), lambda i: (0, 0)),
                 pl.BlockSpec((B, hidden), lambda i: (0, 0)))

    # Padded activation staging slabs (rows = H_k + 2 halo rows).  Total VMEM
    # footprint (slabs + weights) is < 2 MiB here; set vmem_limit_bytes if the
    # problem is scaled up (v7x has only 64 MiB physical VMEM).
    scratch_shapes = [
        pltpu.VMEM((B, hs[0] + 2, slab_lanes[0]), jnp.float32),
        pltpu.VMEM((B, hs[1] + 2, slab_lanes[1]), jnp.float32),
        pltpu.VMEM((B, hs[2] + 2, slab_lanes[2]), jnp.float32),
        pltpu.VMEM((B, hs[3] + 2, slab_lanes[3]), jnp.float32),
    ]

    kernel = functools.partial(_global_cnn_kernel, pool_dim=p, hidden=hidden)

    logits_pad, feats = pl.pallas_call(
        kernel,
        out_shape=out_shape,
        grid=(1,),                                    # whole batch folded into M
        in_specs=in_specs,
        out_specs=out_specs,
        scratch_shapes=scratch_shapes,
        compiler_params=pltpu.CompilerParams(
            dimension_semantics=("arbitrary",)),
    )(*ins)

    logits = logits_pad[:, :out_dim]
    return (logits, feats) if features else logits


# ----------------------------------------------------------------------------
# Parameter construction (deterministic, synthetic)
# ----------------------------------------------------------------------------
def make_params(key, in_channels, hidden, out_dim, pool_dim):
    ks = iter(jax.random.split(key, 24))
    nxt = lambda: next(ks)
    blocks = []
    for cin in [in_channels, hidden, hidden, hidden]:
        cout = hidden
        w = 0.1 * jax.random.normal(nxt(), (3, 3, cin, cout), jnp.float32)  # HWIO
        b = 0.1 * jax.random.normal(nxt(), (cout,), jnp.float32)
        gamma = 1.0 + 0.1 * jax.random.normal(nxt(), (cout,), jnp.float32)
        beta = 0.1 * jax.random.normal(nxt(), (cout,), jnp.float32)
        mean = jnp.zeros((cout,), jnp.float32)   # BN running stats at init
        var = jnp.ones((cout,), jnp.float32)
        scale = gamma / jnp.sqrt(var + EPS)
        shift = beta + (b - mean) * scale
        blocks.append(dict(w_hwio=w, bias=b, gamma=gamma, beta=beta,
                           mean=mean, var=var, scale=scale, shift=shift))
    g1 = 1.0 + 0.1 * jax.random.normal(nxt(), (hidden,), jnp.float32)
    b1 = 0.1 * jax.random.normal(nxt(), (hidden,), jnp.float32)
    m1 = jnp.zeros((hidden,), jnp.float32)
    v1 = jnp.ones((hidden,), jnp.float32)
    s1 = g1 / jnp.sqrt(v1 + EPS)
    w_lin = 0.1 * jax.random.normal(nxt(), (hidden, out_dim), jnp.float32)
    b_lin = 0.1 * jax.random.normal(nxt(), (1, out_dim), jnp.float32)
    return dict(blocks=blocks,
                bn1d_scale=s1.reshape(1, hidden),
                bn1d_shift=(b1 - m1 * s1).reshape(1, hidden),
                w_lin=w_lin, b_lin=b_lin, pool_dim=pool_dim)


# ----------------------------------------------------------------------------
# Pure-JAX reference (f32) mirroring the PyTorch forward, inference mode
# ----------------------------------------------------------------------------
def reference_forward(x_nchw, params, features=False):
    x = jnp.transpose(x_nchw, (0, 2, 3, 1)).astype(jnp.float32)
    pools = [True, True, True, False]
    for blk, pool in zip(params["blocks"], pools):
        y = lax.conv_general_dilated(
            x, blk["w_hwio"], window_strides=(1, 1), padding="SAME",
            dimension_numbers=("NHWC", "HWIO", "NHWC")) + blk["bias"]
        y = blk["gamma"] * (y - blk["mean"]) / jnp.sqrt(blk["var"] + EPS) + blk["beta"]
        y = jnp.maximum(y, 0.0)
        if pool:
            p = params["pool_dim"]
            y = lax.reduce_window(y, -jnp.inf, lax.max,
                                  (1, p, p, 1), (1, p, p, 1), "VALID")
        x = y
    feat = jnp.mean(x, axis=(1, 2))
    z = feat * params["bn1d_scale"] + params["bn1d_shift"]
    logits = z @ params["w_lin"] + params["b_lin"]
    return (logits, feat) if features else logits


if __name__ == "__main__":
    key = jax.random.PRNGKey(0)
    kp, kx = jax.random.split(key)

    B, Cin, H, W = 2, 4, 16, 16
    hidden, pool_dim, out_dim = 32, 2, 8

    params = make_params(kp, Cin, hidden, out_dim, pool_dim)
    x = jax.random.normal(kx, (B, Cin, H, W), jnp.float32)  # PyTorch NCHW input

    logits, feats = global_cnn_forward(x, params, features=True)
    logits = jax.block_until_ready(logits)
    feats = jax.block_until_ready(feats)

    assert logits.shape == (B, out_dim) and feats.shape == (B, hidden)

    ref_logits, ref_feats = reference_forward(x, params, features=True)
    np.testing.assert_allclose(np.asarray(logits), np.asarray(ref_logits),
                               rtol=5e-2, atol=5e-2)
    np.testing.assert_allclose(np.asarray(feats), np.asarray(ref_feats),
                               rtol=5e-2, atol=5e-2)

    print("KERNEL_OK")
</pallas_src>

<mosaic_0001>
module attributes {stable_mosaic.version = 11 : i64} {
  func.func @_global_cnn_kernel(%arg0: i32, %arg1: memref<2x16x64xf32, #tpu.memory_space<vmem>>, %arg2: memref<3x64x512xbf16, #tpu.memory_space<vmem>>, %arg3: memref<1x512xf32, #tpu.memory_space<vmem>>, %arg4: memref<1x512xf32, #tpu.memory_space<vmem>>, %arg5: memref<3x512x256xbf16, #tpu.memory_space<vmem>>, %arg6: memref<1x256xf32, #tpu.memory_space<vmem>>, %arg7: memref<1x256xf32, #tpu.memory_space<vmem>>, %arg8: memref<3x256x128xbf16, #tpu.memory_space<vmem>>, %arg9: memref<1x128xf32, #tpu.memory_space<vmem>>, %arg10: memref<1x128xf32, #tpu.memory_space<vmem>>, %arg11: memref<3x128x64xbf16, #tpu.memory_space<vmem>>, %arg12: memref<1x64xf32, #tpu.memory_space<vmem>>, %arg13: memref<1x64xf32, #tpu.memory_space<vmem>>, %arg14: memref<1x32xf32, #tpu.memory_space<vmem>>, %arg15: memref<1x32xf32, #tpu.memory_space<vmem>>, %arg16: memref<32x128xbf16, #tpu.memory_space<vmem>>, %arg17: memref<1x128xf32, #tpu.memory_space<vmem>>, %arg18: memref<2x128xf32, #tpu.memory_space<vmem>>, %arg19: memref<2x32xf32, #tpu.memory_space<vmem>>, %arg20: memref<2x18x64xf32, #tpu.memory_space<vmem>>, %arg21: memref<2x10x512xf32, #tpu.memory_space<vmem>>, %arg22: memref<2x6x256xf32, #tpu.memory_space<vmem>>, %arg23: memref<2x4x128xf32, #tpu.memory_space<vmem>>) attributes {dimension_semantics = [#tpu.dimension_semantics<arbitrary>], iteration_bounds = array<i64: 1>, scalar_prefetch = 0 : i64, scratch_operands = 4 : i64, tpu.core_type = #tpu.core_type<tc>, window_params = [{pipeline_mode = #tpu.pipeline_mode<synchronous>, transform_indices = @transform_0, window_bounds = array<i64: 2, 16, 64>}, {pipeline_mode = #tpu.pipeline_mode<synchronous>, transform_indices = @transform_1, window_bounds = array<i64: 3, 64, 512>}, {pipeline_mode = #tpu.pipeline_mode<synchronous>, transform_indices = @transform_2, window_bounds = array<i64: 1, 512>}, {pipeline_mode = #tpu.pipeline_mode<synchronous>, transform_indices = @transform_3, window_bounds = array<i64: 1, 512>}, {pipeline_mode = #tpu.pipeline_mode<synchronous>, transform_indices = @transform_4, window_bounds = array<i64: 3, 512, 256>}, {pipeline_mode = #tpu.pipeline_mode<synchronous>, transform_indices = @transform_5, window_bounds = array<i64: 1, 256>}, {pipeline_mode = #tpu.pipeline_mode<synchronous>, transform_indices = @transform_6, window_bounds = array<i64: 1, 256>}, {pipeline_mode = #tpu.pipeline_mode<synchronous>, transform_indices = @transform_7, window_bounds = array<i64: 3, 256, 128>}, {pipeline_mode = #tpu.pipeline_mode<synchronous>, transform_indices = @transform_8, window_bounds = array<i64: 1, 128>}, {pipeline_mode = #tpu.pipeline_mode<synchronous>, transform_indices = @transform_9, window_bounds = array<i64: 1, 128>}, {pipeline_mode = #tpu.pipeline_mode<synchronous>, transform_indices = @transform_10, window_bounds = array<i64: 3, 128, 64>}, {pipeline_mode = #tpu.pipeline_mode<synchronous>, transform_indices = @transform_11, window_bounds = array<i64: 1, 64>}, {pipeline_mode = #tpu.pipeline_mode<synchronous>, transform_indices = @transform_12, window_bounds = array<i64: 1, 64>}, {pipeline_mode = #tpu.pipeline_mode<synchronous>, transform_indices = @transform_13, window_bounds = array<i64: 1, 32>}, {pipeline_mode = #tpu.pipeline_mode<synchronous>, transform_indices = @transform_14, window_bounds = array<i64: 1, 32>}, {pipeline_mode = #tpu.pipeline_mode<synchronous>, transform_indices = @transform_15, window_bounds = array<i64: 32, 128>}, {pipeline_mode = #tpu.pipeline_mode<synchronous>, transform_indices = @transform_16, window_bounds = array<i64: 1, 128>}, {pipeline_mode = #tpu.pipeline_mode<synchronous>, transform_indices = @transform_17, window_bounds = array<i64: 2, 128>}, {pipeline_mode = #tpu.pipeline_mode<synchronous>, transform_indices = @transform_18, window_bounds = array<i64: 2, 32>}]} {
    %cst = arith.constant 0.000000e+00 : f32
    %0 = vector.broadcast %cst : f32 to vector<2x1x64xf32>
    %c0 = arith.constant 0 : index
    %c0_0 = arith.constant 0 : index
    %c0_1 = arith.constant 0 : index
    %1 = vector.load %arg20[%c0, %c0_0, %c0_1] : memref<2x18x64xf32, #tpu.memory_space<vmem>>, vector<2x1x64xf32>
    tpu.vector_store %arg20[%c0, %c0_0, %c0_1], %0 {strides = array<i32>} : memref<2x18x64xf32, #tpu.memory_space<vmem>>, vector<2x1x64xf32>,
    %c0_2 = arith.constant 0 : index
    %c17 = arith.constant 17 : index
    %c0_3 = arith.constant 0 : index
    %2 = vector.load %arg20[%c0_2, %c17, %c0_3] : memref<2x18x64xf32, #tpu.memory_space<vmem>>, vector<2x1x64xf32>
    tpu.vector_store %arg20[%c0_2, %c17, %c0_3], %0 {strides = array<i32>} : memref<2x18x64xf32, #tpu.memory_space<vmem>>, vector<2x1x64xf32>,
    %cst_4 = arith.constant 0.000000e+00 : f32
    %3 = vector.broadcast %cst_4 : f32 to vector<2x1x512xf32>
    %c0_5 = arith.constant 0 : index
    %c0_6 = arith.constant 0 : index
    %c0_7 = arith.constant 0 : index
    %4 = vector.load %arg21[%c0_5, %c0_6, %c0_7] : memref<2x10x512xf32, #tpu.memory_space<vmem>>, vector<2x1x512xf32>
    tpu.vector_store %arg21[%c0_5, %c0_6, %c0_7], %3 {strides = array<i32>} : memref<2x10x512xf32, #tpu.memory_space<vmem>>, vector<2x1x512xf32>,
    %c0_8 = arith.constant 0 : index
    %c9 = arith.constant 9 : index
    %c0_9 = arith.constant 0 : index
    %5 = vector.load %arg21[%c0_8, %c9, %c0_9] : memref<2x10x512xf32, #tpu.memory_space<vmem>>, vector<2x1x512xf32>
    tpu.vector_store %arg21[%c0_8, %c9, %c0_9], %3 {strides = array<i32>} : memref<2x10x512xf32, #tpu.memory_space<vmem>>, vector<2x1x512xf32>,
    %cst_10 = arith.constant 0.000000e+00 : f32
    %6 = vector.broadcast %cst_10 : f32 to vector<2x1x256xf32>
    %c0_11 = arith.constant 0 : index
    %c0_12 = arith.constant 0 : index
    %c0_13 = arith.constant 0 : index
    %7 = vector.load %arg22[%c0_11, %c0_12, %c0_13] : memref<2x6x256xf32, #tpu.memory_space<vmem>>, vector<2x1x256xf32>
    tpu.vector_store %arg22[%c0_11, %c0_12, %c0_13], %6 {strides = array<i32>} : memref<2x6x256xf32, #tpu.memory_space<vmem>>, vector<2x1x256xf32>,
    %c0_14 = arith.constant 0 : index
    %c5 = arith.constant 5 : index
    %c0_15 = arith.constant 0 : index
    %8 = vector.load %arg22[%c0_14, %c5, %c0_15] : memref<2x6x256xf32, #tpu.memory_space<vmem>>, vector<2x1x256xf32>
    tpu.vector_store %arg22[%c0_14, %c5, %c0_15], %6 {strides = array<i32>} : memref<2x6x256xf32, #tpu.memory_space<vmem>>, vector<2x1x256xf32>,
    %cst_16 = arith.constant 0.000000e+00 : f32
    %9 = vector.broadcast %cst_16 : f32 to vector<2x1x128xf32>
    %c0_17 = arith.constant 0 : index
    %c0_18 = arith.constant 0 : index
    %c0_19 = arith.constant 0 : index
    %10 = vector.load %arg23[%c0_17, %c0_18, %c0_19] : memref<2x4x128xf32, #tpu.memory_space<vmem>>, vector<2x1x128xf32>
    tpu.vector_store %arg23[%c0_17, %c0_18, %c0_19], %9 {strides = array<i32>} : memref<2x4x128xf32, #tpu.memory_space<vmem>>, vector<2x1x128xf32>,
    %c0_20 = arith.constant 0 : index
    %c3 = arith.constant 3 : index
    %c0_21 = arith.constant 0 : index
    %11 = vector.load %arg23[%c0_20, %c3, %c0_21] : memref<2x4x128xf32, #tpu.memory_space<vmem>>, vector<2x1x128xf32>
    tpu.vector_store %arg23[%c0_20, %c3, %c0_21], %9 {strides = array<i32>} : memref<2x4x128xf32, #tpu.memory_space<vmem>>, vector<2x1x128xf32>,
    %c0_22 = arith.constant 0 : index
    %c0_23 = arith.constant 0 : index
    %c0_24 = arith.constant 0 : index
    %12 = vector.load %arg1[%c0_22, %c0_23, %c0_24] : memref<2x16x64xf32, #tpu.memory_space<vmem>>, vector<2x16x64xf32>
    %c0_25 = arith.constant 0 : index
    %c1 = arith.constant 1 : index
    %c0_26 = arith.constant 0 : index
    %13 = vector.load %arg20[%c0_25, %c1, %c0_26] : memref<2x18x64xf32, #tpu.memory_space<vmem>>, vector<2x16x64xf32>
    tpu.vector_store %arg20[%c0_25, %c1, %c0_26], %12 {strides = array<i32>} : memref<2x18x64xf32, #tpu.memory_space<vmem>>, vector<2x16x64xf32>,
    %c0_27 = arith.constant 0 : index
    %c0_28 = arith.constant 0 : index
    %c0_29 = arith.constant 0 : index
    %14 = vector.load %arg20[%c0_27, %c0_28, %c0_29] : memref<2x18x64xf32, #tpu.memory_space<vmem>>, vector<2x16x64xf32>
    %15 = vector.shape_cast %14 : vector<2x16x64xf32> to vector<32x64xf32>
    %16 = arith.truncf %15 : vector<32x64xf32> to vector<32x64xbf16>
    %c0_30 = arith.constant 0 : index
    %c0_31 = arith.constant 0 : index
    %c0_32 = arith.constant 0 : index
    %17 = vector.load %arg2[%c0_30, %c0_31, %c0_32] : memref<3x64x512xbf16, #tpu.memory_space<vmem>>, vector<1x64x512xbf16>
    %18 = vector.shape_cast %17 : vector<1x64x512xbf16> to vector<64x512xbf16>
    %cst_33 = arith.constant dense<0.000000e+00> : vector<32x512xf32>
    %19 = tpu.matmul %16, %18, %cst_33 {dimension_numbers = #tpu.dot_dimension_numbers<[1], [0], [0], [1], [0, 0, 1, 1], [], []>} : vector<32x64xbf16>, vector<64x512xbf16>, vector<32x512xf32> -> vector<32x512xf32>
    %c0_34 = arith.constant 0 : index
    %c1_35 = arith.constant 1 : index
    %c0_36 = arith.constant 0 : index
    %20 = vector.load %arg20[%c0_34, %c1_35, %c0_36] : memref<2x18x64xf32, #tpu.memory_space<vmem>>, vector<2x16x64xf32>
    %21 = vector.shape_cast %20 : vector<2x16x64xf32> to vector<32x64xf32>
    %22 = arith.truncf %21 : vector<32x64xf32> to vector<32x64xbf16>
    %c1_37 = arith.constant 1 : index
    %c0_38 = arith.constant 0 : index
    %c0_39 = arith.constant 0 : index
    %23 = vector.load %arg2[%c1_37, %c0_38, %c0_39] : memref<3x64x512xbf16, #tpu.memory_space<vmem>>, vector<1x64x512xbf16>
    %24 = vector.shape_cast %23 : vector<1x64x512xbf16> to vector<64x512xbf16>
    %cst_40 = arith.constant dense<0.000000e+00> : vector<32x512xf32>
    %25 = tpu.matmul %22, %24, %cst_40 {dimension_numbers = #tpu.dot_dimension_numbers<[1], [0], [0], [1], [0, 0, 1, 1], [], []>} : vector<32x64xbf16>, vector<64x512xbf16>, vector<32x512xf32> -> vector<32x512xf32>
    %26 = arith.addf %19, %25 : vector<32x512xf32>
    %c0_41 = arith.constant 0 : index
    %c2 = arith.constant 2 : index
    %c0_42 = arith.constant 0 : index
    %27 = vector.load %arg20[%c0_41, %c2, %c0_42] : memref<2x18x64xf32, #tpu.memory_space<vmem>>, vector<2x16x64xf32>
    %28 = vector.shape_cast %27 : vector<2x16x64xf32> to vector<32x64xf32>
    %29 = arith.truncf %28 : vector<32x64xf32> to vector<32x64xbf16>
    %c2_43 = arith.constant 2 : index
    %c0_44 = arith.constant 0 : index
    %c0_45 = arith.constant 0 : index
    %30 = vector.load %arg2[%c2_43, %c0_44, %c0_45] : memref<3x64x512xbf16, #tpu.memory_space<vmem>>, vector<1x64x512xbf16>
    %31 = vector.shape_cast %30 : vector<1x64x512xbf16> to vector<64x512xbf16>
    %cst_46 = arith.constant dense<0.000000e+00> : vector<32x512xf32>
    %32 = tpu.matmul %29, %31, %cst_46 {dimension_numbers = #tpu.dot_dimension_numbers<[1], [0], [0], [1], [0, 0, 1, 1], [], []>} : vector<32x64xbf16>, vector<64x512xbf16>, vector<32x512xf32> -> vector<32x512xf32>
    %33 = arith.addf %26, %32 : vector<32x512xf32>
    %c0_47 = arith.constant 0 : index
    %c0_48 = arith.constant 0 : index
    %34 = vector.load %arg3[%c0_47, %c0_48] : memref<1x512xf32, #tpu.memory_space<vmem>>, vector<1x512xf32>
    %35 = vector.broadcast %34 : vector<1x512xf32> to vector<32x512xf32>
    %36 = arith.mulf %33, %35 : vector<32x512xf32>
    %c0_49 = arith.constant 0 : index
    %c0_50 = arith.constant 0 : index
    %37 = vector.load %arg4[%c0_49, %c0_50] : memref<1x512xf32, #tpu.memory_space<vmem>>, vector<1x512xf32>
    %38 = vector.broadcast %37 : vector<1x512xf32> to vector<32x512xf32>
    %39 = arith.addf %36, %38 : vector<32x512xf32>
    %cst_51 = arith.constant 0.000000e+00 : f32
    %40 = vector.broadcast %cst_51 : f32 to vector<32x512xf32>
    %41 = arith.maximumf %39, %40 : vector<32x512xf32>
    %42 = vector.shape_cast %41 : vector<32x512xf32> to vector<16x2x512xf32>
    %43 = vector.extract_strided_slice %42 {offsets = [0, 0, 0], sizes = [16, 1, 512], strides = [1, 1, 1]} : vector<16x2x512xf32> to vector<16x1x512xf32>
    %44 = vector.shape_cast %43 : vector<16x1x512xf32> to vector<16x512xf32>
    %45 = vector.extract_strided_slice %42 {offsets = [0, 1, 0], sizes = [16, 1, 512], strides = [1, 1, 1]} : vector<16x2x512xf32> to vector<16x1x512xf32>
    %46 = vector.shape_cast %45 : vector<16x1x512xf32> to vector<16x512xf32>
    %47 = arith.maximumf %44, %46 : vector<16x512xf32>
    %c480_i32 = arith.constant 480 : i32
    %48 = tpu.dynamic_rotate %47 by %c480_i32 dim 1 : vector<16x512xf32>, i32 -> vector<16x512xf32>
    %49 = arith.maximumf %47, %48 : vector<16x512xf32>
    %50 = vector.shape_cast %49 : vector<16x512xf32> to vector<2x8x512xf32>
    %c0_52 = arith.constant 0 : index
    %c1_53 = arith.constant 1 : index
    %c0_54 = arith.constant 0 : index
    %51 = vector.load %arg21[%c0_52, %c1_53, %c0_54] : memref<2x10x512xf32, #tpu.memory_space<vmem>>, vector<2x8x512xf32>
    tpu.vector_store %arg21[%c0_52, %c1_53, %c0_54], %50 {strides = array<i32>} : memref<2x10x512xf32, #tpu.memory_space<vmem>>, vector<2x8x512xf32>,
    %c0_55 = arith.constant 0 : index
    %c0_56 = arith.constant 0 : index
    %c0_57 = arith.constant 0 : index
    %52 = vector.load %arg21[%c0_55, %c0_56, %c0_57] : memref<2x10x512xf32, #tpu.memory_space<vmem>>, vector<2x8x512xf32>
    %53 = vector.shape_cast %52 : vector<2x8x512xf32> to vector<16x512xf32>
    %54 = arith.truncf %53 : vector<16x512xf32> to vector<16x512xbf16>
    %c0_58 = arith.constant 0 : index
    %c0_59 = arith.constant 0 : index
    %c0_60 = arith.constant 0 : index
    %55 = vector.load %arg5[%c0_58, %c0_59, %c0_60] : memref<3x512x256xbf16, #tpu.memory_space<vmem>>, vector<1x512x256xbf16>
    %56 = vector.shape_cast %55 : vector<1x512x256xbf16> to vector<512x256xbf16>
    %cst_61 = arith.constant dense<0.000000e+00> : vector<16x256xf32>
    %57 = tpu.matmul %54, %56, %cst_61 {dimension_numbers = #tpu.dot_dimension_numbers<[1], [0], [0], [1], [0, 0, 1, 1], [], []>} : vector<16x512xbf16>, vector<512x256xbf16>, vector<16x256xf32> -> vector<16x256xf32>
    %c0_62 = arith.constant 0 : index
    %c1_63 = arith.constant 1 : index
    %c0_64 = arith.constant 0 : index
    %58 = vector.load %arg21[%c0_62, %c1_63, %c0_64] : memref<2x10x512xf32, #tpu.memory_space<vmem>>, vector<2x8x512xf32>
    %59 = vector.shape_cast %58 : vector<2x8x512xf32> to vector<16x512xf32>
    %60 = arith.truncf %59 : vector<16x512xf32> to vector<16x512xbf16>
    %c1_65 = arith.constant 1 : index
    %c0_66 = arith.constant 0 : index
    %c0_67 = arith.constant 0 : index
    %61 = vector.load %arg5[%c1_65, %c0_66, %c0_67] : memref<3x512x256xbf16, #tpu.memory_space<vmem>>, vector<1x512x256xbf16>
    %62 = vector.shape_cast %61 : vector<1x512x256xbf16> to vector<512x256xbf16>
    %cst_68 = arith.constant dense<0.000000e+00> : vector<16x256xf32>
    %63 = tpu.matmul %60, %62, %cst_68 {dimension_numbers = #tpu.dot_dimension_numbers<[1], [0], [0], [1], [0, 0, 1, 1], [], []>} : vector<16x512xbf16>, vector<512x256xbf16>, vector<16x256xf32> -> vector<16x256xf32>
    %64 = arith.addf %57, %63 : vector<16x256xf32>
    %c0_69 = arith.constant 0 : index
    %c2_70 = arith.constant 2 : index
    %c0_71 = arith.constant 0 : index
    %65 = vector.load %arg21[%c0_69, %c2_70, %c0_71] : memref<2x10x512xf32, #tpu.memory_space<vmem>>, vector<2x8x512xf32>
    %66 = vector.shape_cast %65 : vector<2x8x512xf32> to vector<16x512xf32>
    %67 = arith.truncf %66 : vector<16x512xf32> to vector<16x512xbf16>
    %c2_72 = arith.constant 2 : index
    %c0_73 = arith.constant 0 : index
    %c0_74 = arith.constant 0 : index
    %68 = vector.load %arg5[%c2_72, %c0_73, %c0_74] : memref<3x512x256xbf16, #tpu.memory_space<vmem>>, vector<1x512x256xbf16>
    %69 = vector.shape_cast %68 : vector<1x512x256xbf16> to vector<512x256xbf16>
    %cst_75 = arith.constant dense<0.000000e+00> : vector<16x256xf32>
    %70 = tpu.matmul %67, %69, %cst_75 {dimension_numbers = #tpu.dot_dimension_numbers<[1], [0], [0], [1], [0, 0, 1, 1], [], []>} : vector<16x512xbf16>, vector<512x256xbf16>, vector<16x256xf32> -> vector<16x256xf32>
    %71 = arith.addf %64, %70 : vector<16x256xf32>
    %c0_76 = arith.constant 0 : index
    %c0_77 = arith.constant 0 : index
    %72 = vector.load %arg6[%c0_76, %c0_77] : memref<1x256xf32, #tpu.memory_space<vmem>>, vector<1x256xf32>
    %73 = vector.broadcast %72 : vector<1x256xf32> to vector<16x256xf32>
    %74 = arith.mulf %71, %73 : vector<16x256xf32>
    %c0_78 = arith.constant 0 : index
    %c0_79 = arith.constant 0 : index
    %75 = vector.load %arg7[%c0_78, %c0_79] : memref<1x256xf32, #tpu.memory_space<vmem>>, vector<1x256xf32>
    %76 = vector.broadcast %75 : vector<1x256xf32> to vector<16x256xf32>
    %77 = arith.addf %74, %76 : vector<16x256xf32>
    %cst_80 = arith.constant 0.000000e+00 : f32
    %78 = vector.broadcast %cst_80 : f32 to vector<16x256xf32>
    %79 = arith.maximumf %77, %78 : vector<16x256xf32>
    %80 = vector.shape_cast %79 : vector<16x256xf32> to vector<8x2x256xf32>
    %81 = vector.extract_strided_slice %80 {offsets = [0, 0, 0], sizes = [8, 1, 256], strides = [1, 1, 1]} : vector<8x2x256xf32> to vector<8x1x256xf32>
    %82 = vector.shape_cast %81 : vector<8x1x256xf32> to vector<8x256xf32>
    %83 = vector.extract_strided_slice %80 {offsets = [0, 1, 0], sizes = [8, 1, 256], strides = [1, 1, 1]} : vector<8x2x256xf32> to vector<8x1x256xf32>
    %84 = vector.shape_cast %83 : vector<8x1x256xf32> to vector<8x256xf32>
    %85 = arith.maximumf %82, %84 : vector<8x256xf32>
    %c224_i32 = arith.constant 224 : i32
    %86 = tpu.dynamic_rotate %85 by %c224_i32 dim 1 : vector<8x256xf32>, i32 -> vector<8x256xf32>
    %87 = arith.maximumf %85, %86 : vector<8x256xf32>
    %88 = vector.shape_cast %87 : vector<8x256xf32> to vector<2x4x256xf32>
    %c0_81 = arith.constant 0 : index
    %c1_82 = arith.constant 1 : index
    %c0_83 = arith.constant 0 : index
    %89 = vector.load %arg22[%c0_81, %c1_82, %c0_83] : memref<2x6x256xf32, #tpu.memory_space<vmem>>, vector<2x4x256xf32>
    tpu.vector_store %arg22[%c0_81, %c1_82, %c0_83], %88 {strides = array<i32>} : memref<2x6x256xf32, #tpu.memory_space<vmem>>, vector<2x4x256xf32>,
    %c0_84 = arith.constant 0 : index
    %c0_85 = arith.constant 0 : index
    %c0_86 = arith.constant 0 : index
    %90 = vector.load %arg22[%c0_84, %c0_85, %c0_86] : memref<2x6x256xf32, #tpu.memory_space<vmem>>, vector<2x4x256xf32>
    %91 = vector.shape_cast %90 : vector<2x4x256xf32> to vector<8x256xf32>
    %92 = arith.truncf %91 : vector<8x256xf32> to vector<8x256xbf16>
    %c0_87 = arith.constant 0 : index
    %c0_88 = arith.constant 0 : index
    %c0_89 = arith.constant 0 : index
    %93 = vector.load %arg8[%c0_87, %c0_88, %c0_89] : memref<3x256x128xbf16, #tpu.memory_space<vmem>>, vector<1x256x128xbf16>
    %94 = vector.shape_cast %93 : vector<1x256x128xbf16> to vector<256x128xbf16>
    %cst_90 = arith.constant dense<0.000000e+00> : vector<8x128xf32>
    %95 = tpu.matmul %92, %94, %cst_90 {dimension_numbers = #tpu.dot_dimension_numbers<[1], [0], [0], [1], [0, 0, 1, 1], [], []>} : vector<8x256xbf16>, vector<256x128xbf16>, vector<8x128xf32> -> vector<8x128xf32>
    %c0_91 = arith.constant 0 : index
    %c1_92 = arith.constant 1 : index
    %c0_93 = arith.constant 0 : index
    %96 = vector.load %arg22[%c0_91, %c1_92, %c0_93] : memref<2x6x256xf32, #tpu.memory_space<vmem>>, vector<2x4x256xf32>
    %97 = vector.shape_cast %96 : vector<2x4x256xf32> to vector<8x256xf32>
    %98 = arith.truncf %97 : vector<8x256xf32> to vector<8x256xbf16>
    %c1_94 = arith.constant 1 : index
    %c0_95 = arith.constant 0 : index
    %c0_96 = arith.constant 0 : index
    %99 = vector.load %arg8[%c1_94, %c0_95, %c0_96] : memref<3x256x128xbf16, #tpu.memory_space<vmem>>, vector<1x256x128xbf16>
    %100 = vector.shape_cast %99 : vector<1x256x128xbf16> to vector<256x128xbf16>
    %cst_97 = arith.constant dense<0.000000e+00> : vector<8x128xf32>
    %101 = tpu.matmul %98, %100, %cst_97 {dimension_numbers = #tpu.dot_dimension_numbers<[1], [0], [0], [1], [0, 0, 1, 1], [], []>} : vector<8x256xbf16>, vector<256x128xbf16>, vector<8x128xf32> -> vector<8x128xf32>
    %102 = arith.addf %95, %101 : vector<8x128xf32>
    %c0_98 = arith.constant 0 : index
    %c2_99 = arith.constant 2 : index
    %c0_100 = arith.constant 0 : index
    %103 = vector.load %arg22[%c0_98, %c2_99, %c0_100] : memref<2x6x256xf32, #tpu.memory_space<vmem>>, vector<2x4x256xf32>
    %104 = vector.shape_cast %103 : vector<2x4x256xf32> to vector<8x256xf32>
    %105 = arith.truncf %104 : vector<8x256xf32> to vector<8x256xbf16>
    %c2_101 = arith.constant 2 : index
    %c0_102 = arith.constant 0 : index
    %c0_103 = arith.constant 0 : index
    %106 = vector.load %arg8[%c2_101, %c0_102, %c0_103] : memref<3x256x128xbf16, #tpu.memory_space<vmem>>, vector<1x256x128xbf16>
    %107 = vector.shape_cast %106 : vector<1x256x128xbf16> to vector<256x128xbf16>
    %cst_104 = arith.constant dense<0.000000e+00> : vector<8x128xf32>
    %108 = tpu.matmul %105, %107, %cst_104 {dimension_numbers = #tpu.dot_dimension_numbers<[1], [0], [0], [1], [0, 0, 1, 1], [], []>} : vector<8x256xbf16>, vector<256x128xbf16>, vector<8x128xf32> -> vector<8x128xf32>
    %109 = arith.addf %102, %108 : vector<8x128xf32>
    %c0_105 = arith.constant 0 : index
    %c0_106 = arith.constant 0 : index
    %110 = vector.load %arg9[%c0_105, %c0_106] : memref<1x128xf32, #tpu.memory_space<vmem>>, vector<1x128xf32>
    %111 = vector.broadcast %110 : vector<1x128xf32> to vector<8x128xf32>
    %112 = arith.mulf %109, %111 : vector<8x128xf32>
    %c0_107 = arith.constant 0 : index
    %c0_108 = arith.constant 0 : index
    %113 = vector.load %arg10[%c0_107, %c0_108] : memref<1x128xf32, #tpu.memory_space<vmem>>, vector<1x128xf32>
    %114 = vector.broadcast %113 : vector<1x128xf32> to vector<8x128xf32>
    %115 = arith.addf %112, %114 : vector<8x128xf32>
    %cst_109 = arith.constant 0.000000e+00 : f32
    %116 = vector.broadcast %cst_109 : f32 to vector<8x128xf32>
    %117 = arith.maximumf %115, %116 : vector<8x128xf32>
    %118 = vector.shape_cast %117 : vector<8x128xf32> to vector<4x2x128xf32>
    %119 = vector.extract_strided_slice %118 {offsets = [0, 0, 0], sizes = [4, 1, 128], strides = [1, 1, 1]} : vector<4x2x128xf32> to vector<4x1x128xf32>
    %120 = vector.shape_cast %119 : vector<4x1x128xf32> to vector<4x128xf32>
    %121 = vector.extract_strided_slice %118 {offsets = [0, 1, 0], sizes = [4, 1, 128], strides = [1, 1, 1]} : vector<4x2x128xf32> to vector<4x1x128xf32>
    %122 = vector.shape_cast %121 : vector<4x1x128xf32> to vector<4x128xf32>
    %123 = arith.maximumf %120, %122 : vector<4x128xf32>
    %c96_i32 = arith.constant 96 : i32
    %124 = tpu.dynamic_rotate %123 by %c96_i32 dim 1 : vector<4x128xf32>, i32 -> vector<4x128xf32>
    %125 = arith.maximumf %123, %124 : vector<4x128xf32>
    %126 = vector.shape_cast %125 : vector<4x128xf32> to vector<2x2x128xf32>
    %c0_110 = arith.constant 0 : index
    %c1_111 = arith.constant 1 : index
    %c0_112 = arith.constant 0 : index
    %127 = vector.load %arg23[%c0_110, %c1_111, %c0_112] : memref<2x4x128xf32, #tpu.memory_space<vmem>>, vector<2x2x128xf32>
    tpu.vector_store %arg23[%c0_110, %c1_111, %c0_112], %126 {strides = array<i32>} : memref<2x4x128xf32, #tpu.memory_space<vmem>>, vector<2x2x128xf32>,
    %c0_113 = arith.constant 0 : index
    %c0_114 = arith.constant 0 : index
    %c0_115 = arith.constant 0 : index
    %128 = vector.load %arg23[%c0_113, %c0_114, %c0_115] : memref<2x4x128xf32, #tpu.memory_space<vmem>>, vector<2x2x128xf32>
    %129 = vector.shape_cast %128 : vector<2x2x128xf32> to vector<4x128xf32>
    %130 = arith.truncf %129 : vector<4x128xf32> to vector<4x128xbf16>
    %c0_116 = arith.constant 0 : index
    %c0_117 = arith.constant 0 : index
    %c0_118 = arith.constant 0 : index
    %131 = vector.load %arg11[%c0_116, %c0_117, %c0_118] : memref<3x128x64xbf16, #tpu.memory_space<vmem>>, vector<1x128x64xbf16>
    %132 = vector.shape_cast %131 : vector<1x128x64xbf16> to vector<128x64xbf16>
    %cst_119 = arith.constant dense<0.000000e+00> : vector<4x64xf32>
    %133 = tpu.matmul %130, %132, %cst_119 {dimension_numbers = #tpu.dot_dimension_numbers<[1], [0], [0], [1], [0, 0, 1, 1], [], []>} : vector<4x128xbf16>, vector<128x64xbf16>, vector<4x64xf32> -> vector<4x64xf32>
    %c0_120 = arith.constant 0 : index
    %c1_121 = arith.constant 1 : index
    %c0_122 = arith.constant 0 : index
    %134 = vector.load %arg23[%c0_120, %c1_121, %c0_122] : memref<2x4x128xf32, #tpu.memory_space<vmem>>, vector<2x2x128xf32>
    %135 = vector.shape_cast %134 : vector<2x2x128xf32> to vector<4x128xf32>
    %136 = arith.truncf %135 : vector<4x128xf32> to vector<4x128xbf16>
    %c1_123 = arith.constant 1 : index
    %c0_124 = arith.constant 0 : index
    %c0_125 = arith.constant 0 : index
    %137 = vector.load %arg11[%c1_123, %c0_124, %c0_125] : memref<3x128x64xbf16, #tpu.memory_space<vmem>>, vector<1x128x64xbf16>
    %138 = vector.shape_cast %137 : vector<1x128x64xbf16> to vector<128x64xbf16>
    %cst_126 = arith.constant dense<0.000000e+00> : vector<4x64xf32>
    %139 = tpu.matmul %136, %138, %cst_126 {dimension_numbers = #tpu.dot_dimension_numbers<[1], [0], [0], [1], [0, 0, 1, 1], [], []>} : vector<4x128xbf16>, vector<128x64xbf16>, vector<4x64xf32> -> vector<4x64xf32>
    %140 = arith.addf %133, %139 : vector<4x64xf32>
    %c0_127 = arith.constant 0 : index
    %c2_128 = arith.constant 2 : index
    %c0_129 = arith.constant 0 : index
    %141 = vector.load %arg23[%c0_127, %c2_128, %c0_129] : memref<2x4x128xf32, #tpu.memory_space<vmem>>, vector<2x2x128xf32>
    %142 = vector.shape_cast %141 : vector<2x2x128xf32> to vector<4x128xf32>
    %143 = arith.truncf %142 : vector<4x128xf32> to vector<4x128xbf16>
    %c2_130 = arith.constant 2 : index
    %c0_131 = arith.constant 0 : index
    %c0_132 = arith.constant 0 : index
    %144 = vector.load %arg11[%c2_130, %c0_131, %c0_132] : memref<3x128x64xbf16, #tpu.memory_space<vmem>>, vector<1x128x64xbf16>
    %145 = vector.shape_cast %144 : vector<1x128x64xbf16> to vector<128x64xbf16>
    %cst_133 = arith.constant dense<0.000000e+00> : vector<4x64xf32>
    %146 = tpu.matmul %143, %145, %cst_133 {dimension_numbers = #tpu.dot_dimension_numbers<[1], [0], [0], [1], [0, 0, 1, 1], [], []>} : vector<4x128xbf16>, vector<128x64xbf16>, vector<4x64xf32> -> vector<4x64xf32>
    %147 = arith.addf %140, %146 : vector<4x64xf32>
    %c0_134 = arith.constant 0 : index
    %c0_135 = arith.constant 0 : index
    %148 = vector.load %arg12[%c0_134, %c0_135] : memref<1x64xf32, #tpu.memory_space<vmem>>, vector<1x64xf32>
    %149 = vector.broadcast %148 : vector<1x64xf32> to vector<4x64xf32>
    %150 = arith.mulf %147, %149 : vector<4x64xf32>
    %c0_136 = arith.constant 0 : index
    %c0_137 = arith.constant 0 : index
    %151 = vector.load %arg13[%c0_136, %c0_137] : memref<1x64xf32, #tpu.memory_space<vmem>>, vector<1x64xf32>
    %152 = vector.broadcast %151 : vector<1x64xf32> to vector<4x64xf32>
    %153 = arith.addf %150, %152 : vector<4x64xf32>
    %cst_138 = arith.constant 0.000000e+00 : f32
    %154 = vector.broadcast %cst_138 : f32 to vector<4x64xf32>
    %155 = arith.maximumf %153, %154 : vector<4x64xf32>
    %156 = vector.extract_strided_slice %155 {offsets = [0, 0], sizes = [4, 32], strides = [1, 1]} : vector<4x64xf32> to vector<4x32xf32>
    %157 = vector.extract_strided_slice %155 {offsets = [0, 32], sizes = [4, 32], strides = [1, 1]} : vector<4x64xf32> to vector<4x32xf32>
    %158 = arith.addf %156, %157 : vector<4x32xf32>
    %159 = vector.shape_cast %158 : vector<4x32xf32> to vector<2x2x32xf32>
    %160 = vector.extract_strided_slice %159 {offsets = [0, 0, 0], sizes = [2, 1, 32], strides = [1, 1, 1]} : vector<2x2x32xf32> to vector<2x1x32xf32>
    %161 = vector.shape_cast %160 : vector<2x1x32xf32> to vector<2x32xf32>
    %162 = vector.extract_strided_slice %159 {offsets = [0, 1, 0], sizes = [2, 1, 32], strides = [1, 1, 1]} : vector<2x2x32xf32> to vector<2x1x32xf32>
    %163 = vector.shape_cast %162 : vector<2x1x32xf32> to vector<2x32xf32>
    %164 = arith.addf %161, %163 : vector<2x32xf32>
    %cst_139 = arith.constant 2.500000e-01 : f32
    %165 = vector.broadcast %cst_139 : f32 to vector<2x32xf32>
    %166 = arith.mulf %164, %165 : vector<2x32xf32>
    %c0_140 = arith.constant 0 : index
    %c0_141 = arith.constant 0 : index
    %167 = vector.load %arg19[%c0_140, %c0_141] : memref<2x32xf32, #tpu.memory_space<vmem>>, vector<2x32xf32>
    tpu.vector_store %arg19[%c0_140, %c0_141], %166 {strides = array<i32>} : memref<2x32xf32, #tpu.memory_space<vmem>>, vector<2x32xf32>,
    %c0_142 = arith.constant 0 : index
    %c0_143 = arith.constant 0 : index
    %168 = vector.load %arg14[%c0_142, %c0_143] : memref<1x32xf32, #tpu.memory_space<vmem>>, vector<1x32xf32>
    %169 = vector.broadcast %168 : vector<1x32xf32> to vector<2x32xf32>
    %170 = arith.mulf %166, %169 : vector<2x32xf32>
    %c0_144 = arith.constant 0 : index
    %c0_145 = arith.constant 0 : index
    %171 = vector.load %arg15[%c0_144, %c0_145] : memref<1x32xf32, #tpu.memory_space<vmem>>, vector<1x32xf32>
    %172 = vector.broadcast %171 : vector<1x32xf32> to vector<2x32xf32>
    %173 = arith.addf %170, %172 : vector<2x32xf32>
    %174 = arith.truncf %173 : vector<2x32xf32> to vector<2x32xbf16>
    %c0_146 = arith.constant 0 : index
    %c0_147 = arith.constant 0 : index
    %175 = vector.load %arg16[%c0_146, %c0_147] : memref<32x128xbf16, #tpu.memory_space<vmem>>, vector<32x128xbf16>
    %cst_148 = arith.constant dense<0.000000e+00> : vector<2x128xf32>
    %176 = tpu.matmul %174, %175, %cst_148 {dimension_numbers = #tpu.dot_dimension_numbers<[1], [0], [0], [1], [0, 0, 1, 1], [], []>} : vector<2x32xbf16>, vector<32x128xbf16>, vector<2x128xf32> -> vector<2x128xf32>
    %c0_149 = arith.constant 0 : index
    %c0_150 = arith.constant 0 : index
    %177 = vector.load %arg17[%c0_149, %c0_150] : memref<1x128xf32, #tpu.memory_space<vmem>>, vector<1x128xf32>
    %178 = vector.broadcast %177 : vector<1x128xf32> to vector<2x128xf32>
    %179 = arith.addf %176, %178 : vector<2x128xf32>
    %c0_151 = arith.constant 0 : index
    %c0_152 = arith.constant 0 : index
    %180 = vector.load %arg18[%c0_151, %c0_152] : memref<2x128xf32, #tpu.memory_space<vmem>>, vector<2x128xf32>
    tpu.vector_store %arg18[%c0_151, %c0_152], %179 {strides = array<i32>} : memref<2x128xf32, #tpu.memory_space<vmem>>, vector<2x128xf32>,
    return
  }
  func.func @transform_0(%arg0: i32) -> (i32, i32, i32) {
    %c0_i32 = arith.constant 0 : i32
    %c0_i32_0 = arith.constant 0 : i32
    %c0_i32_1 = arith.constant 0 : i32
    %c0_i32_2 = arith.constant 0 : i32
    return %c0_i32, %c0_i32_0, %c0_i32_1 : i32, i32, i32
  }
  func.func @transform_1(%arg0: i32) -> (i32, i32, i32) {
    %c0_i32 = arith.constant 0 : i32
    %c0_i32_0 = arith.constant 0 : i32
    %c0_i32_1 = arith.constant 0 : i32
    %c0_i32_2 = arith.constant 0 : i32
    return %c0_i32, %c0_i32_0, %c0_i32_1 : i32, i32, i32
  }
  func.func @transform_2(%arg0: i32) -> (i32, i32) {
    %c0_i32 = arith.constant 0 : i32
    %c0_i32_0 = arith.constant 0 : i32
    %c0_i32_1 = arith.constant 0 : i32
    return %c0_i32, %c0_i32_0 : i32, i32
  }
  func.func @transform_3(%arg0: i32) -> (i32, i32) {
    %c0_i32 = arith.constant 0 : i32
    %c0_i32_0 = arith.constant 0 : i32
    %c0_i32_1 = arith.constant 0 : i32
    return %c0_i32, %c0_i32_0 : i32, i32
  }
  func.func @transform_4(%arg0: i32) -> (i32, i32, i32) {
    %c0_i32 = arith.constant 0 : i32
    %c0_i32_0 = arith.constant 0 : i32
    %c0_i32_1 = arith.constant 0 : i32
    %c0_i32_2 = arith.constant 0 : i32
    return %c0_i32, %c0_i32_0, %c0_i32_1 : i32, i32, i32
  }
  func.func @transform_5(%arg0: i32) -> (i32, i32) {
    %c0_i32 = arith.constant 0 : i32
    %c0_i32_0 = arith.constant 0 : i32
    %c0_i32_1 = arith.constant 0 : i32
    return %c0_i32, %c0_i32_0 : i32, i32
  }
  func.func @transform_6(%arg0: i32) -> (i32, i32) {
    %c0_i32 = arith.constant 0 : i32
    %c0_i32_0 = arith.constant 0 : i32
    %c0_i32_1 = arith.constant 0 : i32
    return %c0_i32, %c0_i32_0 : i32, i32
  }
  func.func @transform_7(%arg0: i32) -> (i32, i32, i32) {
    %c0_i32 = arith.constant 0 : i32
    %c0_i32_0 = arith.constant 0 : i32
    %c0_i32_1 = arith.constant 0 : i32
    %c0_i32_2 = arith.constant 0 : i32
    return %c0_i32, %c0_i32_0, %c0_i32_1 : i32, i32, i32
  }
  func.func @transform_8(%arg0: i32) -> (i32, i32) {
    %c0_i32 = arith.constant 0 : i32
    %c0_i32_0 = arith.constant 0 : i32
    %c0_i32_1 = arith.constant 0 : i32
    return %c0_i32, %c0_i32_0 : i32, i32
  }
  func.func @transform_9(%arg0: i32) -> (i32, i32) {
    %c0_i32 = arith.constant 0 : i32
    %c0_i32_0 = arith.constant 0 : i32
    %c0_i32_1 = arith.constant 0 : i32
    return %c0_i32, %c0_i32_0 : i32, i32
  }
  func.func @transform_10(%arg0: i32) -> (i32, i32, i32) {
    %c0_i32 = arith.constant 0 : i32
    %c0_i32_0 = arith.constant 0 : i32
    %c0_i32_1 = arith.constant 0 : i32
    %c0_i32_2 = arith.constant 0 : i32
    return %c0_i32, %c0_i32_0, %c0_i32_1 : i32, i32, i32
  }
  func.func @transform_11(%arg0: i32) -> (i32, i32) {
    %c0_i32 = arith.constant 0 : i32
    %c0_i32_0 = arith.constant 0 : i32
    %c0_i32_1 = arith.constant 0 : i32
    return %c0_i32, %c0_i32_0 : i32, i32
  }
  func.func @transform_12(%arg0: i32) -> (i32, i32) {
    %c0_i32 = arith.constant 0 : i32
    %c0_i32_0 = arith.constant 0 : i32
    %c0_i32_1 = arith.constant 0 : i32
    return %c0_i32, %c0_i32_0 : i32, i32
  }
  func.func @transform_13(%arg0: i32) -> (i32, i32) {
    %c0_i32 = arith.constant 0 : i32
    %c0_i32_0 = arith.constant 0 : i32
    %c0_i32_1 = arith.constant 0 : i32
    return %c0_i32, %c0_i32_0 : i32, i32
  }
  func.func @transform_14(%arg0: i32) -> (i32, i32) {
    %c0_i32 = arith.constant 0 : i32
    %c0_i32_0 = arith.constant 0 : i32
    %c0_i32_1 = arith.constant 0 : i32
    return %c0_i32, %c0_i32_0 : i32, i32
  }
  func.func @transform_15(%arg0: i32) -> (i32, i32) {
    %c0_i32 = arith.constant 0 : i32
    %c0_i32_0 = arith.constant 0 : i32
    %c0_i32_1 = arith.constant 0 : i32
    return %c0_i32, %c0_i32_0 : i32, i32
  }
  func.func @transform_16(%arg0: i32) -> (i32, i32) {
    %c0_i32 = arith.constant 0 : i32
    %c0_i32_0 = arith.constant 0 : i32
    %c0_i32_1 = arith.constant 0 : i32
    return %c0_i32, %c0_i32_0 : i32, i32
  }
  func.func @transform_17(%arg0: i32) -> (i32, i32) {
    %c0_i32 = arith.constant 0 : i32
    %c0_i32_0 = arith.constant 0 : i32
    %c0_i32_1 = arith.constant 0 : i32
    return %c0_i32, %c0_i32_0 : i32, i32
  }
  func.func @transform_18(%arg0: i32) -> (i32, i32) {
    %c0_i32 = arith.constant 0 : i32
    %c0_i32_0 = arith.constant 0 : i32
    %c0_i32_1 = arith.constant 0 : i32
    return %c0_i32, %c0_i32_0 : i32, i32
  }
}

</mosaic_0001>

<llo_original>
// kernel: tpu_custom_call.1
$region0: #{tpu_custom_call.1}
  #allocation0 [shape = 'u32[]', space=smem, size = 0x4, offset = 0x4, fixed_abs, tag = 'smem constant byte address 0x4 - core index']
  #allocation1 [shape = 'u32[144,128]{1,0:T(1,128)}', space=vmem, size = 0x12000, scoped, tag = 'internal scratch']
  #allocation2 [shape = 'f32[2,18,64]{2,1,0:T(8,128)}', space=vmem, size = 0x6000, scoped, tag = 'scratch operand']
  #allocation3 [shape = 'f32[2,10,512]{2,1,0:T(8,128)}', space=vmem, size = 0x10000, scoped, tag = 'scratch operand']
  #allocation4 [shape = 'f32[2,6,256]{2,1,0:T(8,128)}', space=vmem, size = 0x4000, scoped, tag = 'scratch operand']
  #allocation5 [shape = 'f32[2,4,128]{2,1,0:T(4,128)}', space=vmem, size = 0x1000, scoped, tag = 'scratch operand']
  %s0 = inlined_call_operand.vmem [shape: f32[2,16,64], index: 0, kind: input, shape index: {}]
  %s1 = inlined_call_operand.hbm [shape: bf16[3,64,512], index: 1, kind: input, shape index: {}]
  %s2 = inlined_call_operand.vmem [shape: f32[1,512], index: 2, kind: input, shape index: {}]
  %s3 = inlined_call_operand.vmem [shape: f32[1,512], index: 3, kind: input, shape index: {}]
  %s4 = inlined_call_operand.hbm [shape: bf16[3,512,256], index: 4, kind: input, shape index: {}]
  %s5 = inlined_call_operand.vmem [shape: f32[1,256], index: 5, kind: input, shape index: {}]
  %s6 = inlined_call_operand.vmem [shape: f32[1,256], index: 6, kind: input, shape index: {}]
  %s7 = inlined_call_operand.hbm [shape: bf16[3,256,128], index: 7, kind: input, shape index: {}]
  %s8 = inlined_call_operand.vmem [shape: f32[1,128], index: 8, kind: input, shape index: {}]
  %s9 = inlined_call_operand.vmem [shape: f32[1,128], index: 9, kind: input, shape index: {}]
  %s10 = inlined_call_operand.vmem [shape: bf16[3,128,64], index: 10, kind: input, shape index: {}]
  %s11 = inlined_call_operand.vmem [shape: f32[1,64], index: 11, kind: input, shape index: {}]
  %s12 = inlined_call_operand.vmem [shape: f32[1,64], index: 12, kind: input, shape index: {}]
  %s13 = inlined_call_operand.vmem [shape: f32[1,32], index: 13, kind: input, shape index: {}]
  %s14 = inlined_call_operand.vmem [shape: f32[1,32], index: 14, kind: input, shape index: {}]
  %s15 = inlined_call_operand.vmem [shape: bf16[32,128], index: 15, kind: input, shape index: {}]
  %s16 = inlined_call_operand.vmem [shape: f32[1,128], index: 16, kind: input, shape index: {}]
  %s17 = inlined_call_operand.hbm [shape: f32[2,128], index: 17, kind: output, shape index: {0}]
  %s18 = inlined_call_operand.hbm [shape: f32[2,32], index: 18, kind: output, shape index: {1}]
  %19 = xla_tuple %s17, %s18
  %s20 = sld [smem:[#allocation0]]
  $region98: #{tpu_custom_call.1} parent=0
    _
  %s22 = ssub.s32 1, %s20
  %s23 = scalar_select 0, %s22, %s20
  $region1: #{tpu_custom_call.1} parent=0
    #allocation6 [shape = 'u8[196608]{0}', space=vmem, size = 0x30000, scoped, tag = 'input window, operand 1, single buffered']
    #allocation7 [shape = 's32[1]{0}', space=sflag, size = 0x4, scoped, tag = 'scoped memory for tpu_custom_call.1']
    #allocation8 [shape = 's32[1]{0}', space=sflag, size = 0x4, scoped, tag = 'scoped memory for tpu_custom_call.1']
    #allocation9 [shape = 'u8[786432]{0}', space=vmem, size = 0xc0000, scoped, tag = 'input window, operand 4, single buffered']
    #allocation10 [shape = 's32[1]{0}', space=sflag, size = 0x4, scoped, tag = 'scoped memory for tpu_custom_call.1']
    #allocation11 [shape = 'u8[196608]{0}', space=vmem, size = 0x30000, scoped, tag = 'input window, operand 7, single buffered']
    #allocation12 [shape = 'u8[1024]{0}', space=vmem, size = 0x400, scoped, tag = 'output window, operand 0, single buffered']
    #allocation13 [shape = 'u8[1024]{0}', space=vmem, size = 0x400, scoped, tag = 'output window, operand 1, single buffered']
    #allocation14 [shape = 's32[1]{0}', space=sflag, size = 0x4, scoped, tag = 'scoped memory for tpu_custom_call.1']
    %24 = vsyncpa [#allocation7], 0
    %25 = vsyncpa [#allocation10], 0
    %26 = vsyncpa [#allocation8], 0
    %27 = vsyncpa [#allocation14], 0
    // Predicated region
    $region2: #{tpu_custom_call.1} parent=1 // pred_check
      _
    $region3: #{tpu_custom_call.1} parent=1 // pred_check_branch
      %29 = sbr.rel (0) target = $region5
    $region4: #{tpu_custom_call.1} parent=1 // pred_region
      _
    $region5: #{tpu_custom_call.1} parent=1 // pred_fallthru
      _
    // Predicated region
    $region6: #{tpu_custom_call.1} parent=1 // pred_check
      _
    $region7: #{tpu_custom_call.1} parent=1 // pred_check_branch
      %31 = sbr.rel (0) target = $region9
    $region8: #{tpu_custom_call.1} parent=1 // pred_region
      %s33 = ssub.s32 6144, 6144
      %34 = vsyncadd [#allocation7], %s33
      %s35 = sshll.u32 [#allocation6], 4
      %s36 = int_to_ptr.vmem [resolvable:$true] %s35
      %41 = dma.hbm_to_vmem [thread:$0]  %s1, 6144, %s36, [#allocation7], 256, 256, 16
    $region9: #{tpu_custom_call.1} parent=1 // pred_fallthru
      _
    // Predicated region
    $region10: #{tpu_custom_call.1} parent=1 // pred_check
      _
    $region11: #{tpu_custom_call.1} parent=1 // pred_check_branch
      %43 = sbr.rel (0) target = $region13
    $region12: #{tpu_custom_call.1} parent=1 // pred_region
      _
    $region13: #{tpu_custom_call.1} parent=1 // pred_fallthru
      _
    // Predicated region
    $region14: #{tpu_custom_call.1} parent=1 // pred_check
      _
    $region15: #{tpu_custom_call.1} parent=1 // pred_check_branch
      %45 = sbr.rel (0) target = $region17
    $region16: #{tpu_custom_call.1} parent=1 // pred_region
      _
    $region17: #{tpu_custom_call.1} parent=1 // pred_fallthru
      _
    // Predicated region
    $region18: #{tpu_custom_call.1} parent=1 // pred_check
      _
    $region19: #{tpu_custom_call.1} parent=1 // pred_check_branch
      %47 = sbr.rel (0) target = $region21
    $region20: #{tpu_custom_call.1} parent=1 // pred_region
      %s49 = ssub.s32 24576, 24576
      %50 = vsyncadd [#allocation10], %s49
      %s51 = sshll.u32 [#allocation9], 4
      %s52 = int_to_ptr.vmem [resolvable:$true] %s51
      %57 = dma.hbm_to_vmem [thread:$0]  %s4, 24576, %s52, [#allocation10], 128, 128, 8
    $region21: #{tpu_custom_call.1} parent=1 // pred_fallthru
      _
    // Predicated region
    $region22: #{tpu_custom_call.1} parent=1 // pred_check
      _
    $region23: #{tpu_custom_call.1} parent=1 // pred_check_branch
      %59 = sbr.rel (0) target = $region25
    $region24: #{tpu_custom_call.1} parent=1 // pred_region
      _
    $region25: #{tpu_custom_call.1} parent=1 // pred_fallthru
      _
    // Predicated region
    $region26: #{tpu_custom_call.1} parent=1 // pred_check
      _
    $region27: #{tpu_custom_call.1} parent=1 // pred_check_branch
      %61 = sbr.rel (0) target = $region29
    $region28: #{tpu_custom_call.1} parent=1 // pred_region
      _
    $region29: #{tpu_custom_call.1} parent=1 // pred_fallthru
      _
    // Predicated region
    $region30: #{tpu_custom_call.1} parent=1 // pred_check
      _
    $region31: #{tpu_custom_call.1} parent=1 // pred_check_branch
      %63 = sbr.rel (0) target = $region33
    $region32: #{tpu_custom_call.1} parent=1 // pred_region
      %s65 = ssub.s32 6144, 6144
      %66 = vsyncadd [#allocation10], %s65
      %s67 = sshll.u32 [#allocation11], 4
      %s68 = int_to_ptr.vmem [resolvable:$true] %s67
      %73 = dma.hbm_to_vmem [thread:$0]  %s7, 6144, %s68, [#allocation10], 64, 64, 4
    $region33: #{tpu_custom_call.1} parent=1 // pred_fallthru
      _
    // Predicated region
    $region34: #{tpu_custom_call.1} parent=1 // pred_check
      _
    $region35: #{tpu_custom_call.1} parent=1 // pred_check_branch
      %75 = sbr.rel (0) target = $region37
    $region36: #{tpu_custom_call.1} parent=1 // pred_region
      _
    $region37: #{tpu_custom_call.1} parent=1 // pred_fallthru
      _
    // Predicated region
    $region38: #{tpu_custom_call.1} parent=1 // pred_check
      _
    $region39: #{tpu_custom_call.1} parent=1 // pred_check_branch
      %77 = sbr.rel (0) target = $region41
    $region40: #{tpu_custom_call.1} parent=1 // pred_region
      _
    $region41: #{tpu_custom_call.1} parent=1 // pred_fallthru
      _
    // Predicated region
    $region42: #{tpu_custom_call.1} parent=1 // pred_check
      _
    $region43: #{tpu_custom_call.1} parent=1 // pred_check_branch
      %79 = sbr.rel (0) target = $region45
    $region44: #{tpu_custom_call.1} parent=1 // pred_region
      _
    $region45: #{tpu_custom_call.1} parent=1 // pred_fallthru
      _
    // Predicated region
    $region46: #{tpu_custom_call.1} parent=1 // pred_check
      _
    $region47: #{tpu_custom_call.1} parent=1 // pred_check_branch
      %81 = sbr.rel (0) target = $region49
    $region48: #{tpu_custom_call.1} parent=1 // pred_region
      _
    $region49: #{tpu_custom_call.1} parent=1 // pred_fallthru
      _
    // Predicated region
    $region50: #{tpu_custom_call.1} parent=1 // pred_check
      _
    $region51: #{tpu_custom_call.1} parent=1 // pred_check_branch
      %83 = sbr.rel (0) target = $region53
    $region52: #{tpu_custom_call.1} parent=1 // pred_region
      _
    $region53: #{tpu_custom_call.1} parent=1 // pred_fallthru
      _
    // Predicated region
    $region54: #{tpu_custom_call.1} parent=1 // pred_check
      _
    $region55: #{tpu_custom_call.1} parent=1 // pred_check_branch
      %85 = sbr.rel (0) target = $region57
    $region56: #{tpu_custom_call.1} parent=1 // pred_region
      _
    $region57: #{tpu_custom_call.1} parent=1 // pred_fallthru
      _
    // Predicated region
    $region58: #{tpu_custom_call.1} parent=1 // pred_check
      _
    $region59: #{tpu_custom_call.1} parent=1 // pred_check_branch
      %87 = sbr.rel (0) target = $region61
    $region60: #{tpu_custom_call.1} parent=1 // pred_region
      _
    $region61: #{tpu_custom_call.1} parent=1 // pred_fallthru
      _
    // Predicated region
    $region62: #{tpu_custom_call.1} parent=1 // pred_check
      _
    $region63: #{tpu_custom_call.1} parent=1 // pred_check_branch
      %89 = sbr.rel (0) target = $region65
    $region64: #{tpu_custom_call.1} parent=1 // pred_region
      _
    $region65: #{tpu_custom_call.1} parent=1 // pred_fallthru
      _
    // Predicated region
    $region66: #{tpu_custom_call.1} parent=1 // pred_check
      _
    $region67: #{tpu_custom_call.1} parent=1 // pred_check_branch
      %91 = sbr.rel (0) target = $region69
    $region68: #{tpu_custom_call.1} parent=1 // pred_region
      _
    $region69: #{tpu_custom_call.1} parent=1 // pred_fallthru
      _
    // Predicated region
    $region70: #{tpu_custom_call.1} parent=1 // pred_check
      _
    $region71: #{tpu_custom_call.1} parent=1 // pred_check_branch
      %93 = sbr.rel (0) target = $region73
    $region72: #{tpu_custom_call.1} parent=1 // pred_region
      %94 = dma.done [#allocation7], 6144
    $region73: #{tpu_custom_call.1} parent=1 // pred_fallthru
      _
    // Predicated region
    $region74: #{tpu_custom_call.1} parent=1 // pred_check
      _
    $region75: #{tpu_custom_call.1} parent=1 // pred_check_branch
      %96 = sbr.rel (0) target = $region77
    $region76: #{tpu_custom_call.1} parent=1 // pred_region
      %97 = dma.done [#allocation10], 24576
    $region77: #{tpu_custom_call.1} parent=1 // pred_fallthru
      _
    // Predicated region
    $region78: #{tpu_custom_call.1} parent=1 // pred_check
      _
    $region79: #{tpu_custom_call.1} parent=1 // pred_check_branch
      %99 = sbr.rel (0) target = $region81
    $region80: #{tpu_custom_call.1} parent=1 // pred_region
      %100 = dma.done [#allocation10], 6144
    $region81: #{tpu_custom_call.1} parent=1 // pred_fallthru
      _
    %vm102 = vcmask 516096
    %103 = vst.msk [vmem:[#allocation2] sm:$0x1] %vm102, 0.0
    %104 = vst.msk [vmem:[#allocation2 + $0x18] sm:$0x1] %vm102, 0.0
    %105 = vst.msk [vmem:[#allocation2 + $0x11] sm:$0x1] %vm102, 0.0
    %106 = vst.msk [vmem:[#allocation2 + $0x29] sm:$0x1] %vm102, 0.0
    %v107 = vlaneseq
    %vm108 = vcmp.ge.s32.totalorder %v107, 0
    %vm109 = vcmp.lt.s32.totalorder %v107, 512
    %vm110 = vmand %vm108, %vm109
    %111 = vst.msk [vmem:[#allocation3] ss:$8 sm:$0xf] %vm110, 0.0
    %112 = vst.msk [vmem:[#allocation3] ss:$8 sm:$0x0] %vm110, 0.0
    %s113 = scalar_lea.vmem [#allocation3], 64
    %114 = vst.msk [vmem:[%s113] ss:$8 sm:$0xf] %vm110, 0.0
    %115 = vst.msk [vmem:[%s113] ss:$8 sm:$0x0] %vm110, 0.0
    %s116 = scalar_lea.vmem [#allocation3], 33
    %117 = vst.msk [vmem:[%s116] ss:$8 sm:$0xf] %vm110, 0.0
    %118 = vst.msk [vmem:[%s116] ss:$8 sm:$0x0] %vm110, 0.0
    %s119 = scalar_lea.vmem [#allocation3], 97
    %120 = vst.msk [vmem:[%s119] ss:$8 sm:$0xf] %vm110, 0.0
    %121 = vst.msk [vmem:[%s119] ss:$8 sm:$0x0] %vm110, 0.0
    %vm122 = vcmp.lt.s32.totalorder %v107, 256
    %vm123 = vmand %vm108, %vm122
    %124 = vst.msk [vmem:[#allocation4] ss:$8 sm:$0x3] %vm123, 0.0
    %125 = vst.msk [vmem:[#allocation4] ss:$8 sm:$0x0] %vm123, 0.0
    %s126 = scalar_lea.vmem [#allocation4], 16
    %127 = vst.msk [vmem:[%s126] ss:$8 sm:$0x3] %vm123, 0.0
    %128 = vst.msk [vmem:[%s126] ss:$8 sm:$0x0] %vm123, 0.0
    %s129 = scalar_lea.vmem [#allocation4], 5
    %130 = vst.msk [vmem:[%s129] ss:$8 sm:$0x3] %vm123, 0.0
    %131 = vst.msk [vmem:[%s129] ss:$8 sm:$0x0] %vm123, 0.0
    %s132 = scalar_lea.vmem [#allocation4], 21
    %133 = vst.msk [vmem:[%s132] ss:$8 sm:$0x3] %vm123, 0.0
    %134 = vst.msk [vmem:[%s132] ss:$8 sm:$0x0] %vm123, 0.0
    %135 = vst [vmem:[#allocation5] sm:$0x1] 0.0
    %136 = vst [vmem:[#allocation5 + $0x4] sm:$0x1] 0.0
    %137 = vst [vmem:[#allocation5 + $0x3] sm:$0x1] 0.0
    %138 = vst [vmem:[#allocation5 + $0x7] sm:$0x1] 0.0
    %v139 = vld [vmem:[%s0] sm:$0xff]
    %v140 = vld [vmem:[%s0 + $0x8] sm:$0xff]
    %v141 = vld [vmem:[%s0 + $0x10] sm:$0xff]
    %v142 = vld [vmem:[%s0 + $0x18] sm:$0xff]
    %vm143 = vcmask 523264
    %144 = vst.msk [vmem:[#allocation2 + $0x1] sm:$0xff] %vm143, %v139
    %145 = vst.msk [vmem:[#allocation2 + $0x9] sm:$0xff] %vm143, %v140
    %146 = vst.msk [vmem:[#allocation2 + $0x19] sm:$0xff] %vm143, %v141
    %147 = vst.msk [vmem:[#allocation2 + $0x21] sm:$0xff] %vm143, %v142
    %v148 = vld [vmem:[#allocation2] sm:$0xff]
    %v149 = vld [vmem:[#allocation2 + $0x8] sm:$0xff]
    %v150 = vld [vmem:[#allocation2 + $0x18] sm:$0xff]
    %v151 = vld [vmem:[#allocation2 + $0x20] sm:$0xff]
    %v152 = vpack.c.bf16 %v149, %v148
    %v153 = vpack.c.bf16 %v151, %v150
    %v154 = vld [vmem:[#allocation6] sm:$0xff]
    %v155 = vld [vmem:[#allocation6 + $0x8] sm:$0xff]
    %v156 = vld [vmem:[#allocation6 + $0x10] sm:$0xff]
    %v157 = vld [vmem:[#allocation6 + $0x18] sm:$0xff]
    %v158 = vld [vmem:[#allocation6 + $0x20] sm:$0xff]
    %v159 = vld [vmem:[#allocation6 + $0x28] sm:$0xff]
    %v160 = vld [vmem:[#allocation6 + $0x30] sm:$0xff]
    %v161 = vld [vmem:[#allocation6 + $0x38] sm:$0xff]
    %v162 = vld [vmem:[#allocation6 + $0x40] sm:$0xff]
    %v163 = vld [vmem:[#allocation6 + $0x48] sm:$0xff]
    %v164 = vld [vmem:[#allocation6 + $0x50] sm:$0xff]
    %v165 = vld [vmem:[#allocation6 + $0x58] sm:$0xff]
    %v166 = vld [vmem:[#allocation6 + $0x60] sm:$0xff]
    %v167 = vld [vmem:[#allocation6 + $0x68] sm:$0xff]
    %v168 = vld [vmem:[#allocation6 + $0x70] sm:$0xff]
    %v169 = vld [vmem:[#allocation6 + $0x78] sm:$0xff]
    %v170 = vld [vmem:[#allocation2 + $0x1] sm:$0xff]
    %v171 = vld [vmem:[#allocation2 + $0x9] sm:$0xff]
    %v172 = vld [vmem:[#allocation2 + $0x19] sm:$0xff]
    %v173 = vld [vmem:[#allocation2 + $0x21] sm:$0xff]
    %v174 = vpack.c.bf16 %v171, %v170
    %v175 = vpack.c.bf16 %v173, %v172
    %s176 = scalar_lea.vmem [#allocation6], 128
    %v177 = vld [vmem:[%s176] sm:$0xff]
    %v178 = vld [vmem:[%s176 + $0x8] sm:$0xff]
    %v179 = vld [vmem:[%s176 + $0x10] sm:$0xff]
    %v180 = vld [vmem:[%s176 + $0x18] sm:$0xff]
    %v181 = vld [vmem:[%s176 + $0x20] sm:$0xff]
    %v182 = vld [vmem:[%s176 + $0x28] sm:$0xff]
    %v183 = vld [vmem:[%s176 + $0x30] sm:$0xff]
    %v184 = vld [vmem:[%s176 + $0x38] sm:$0xff]
    %v185 = vld [vmem:[%s176 + $0x40] sm:$0xff]
    %v186 = vld [vmem:[%s176 + $0x48] sm:$0xff]
    %v187 = vld [vmem:[%s176 + $0x50] sm:$0xff]
    %v188 = vld [vmem:[%s176 + $0x58] sm:$0xff]
    %v189 = vld [vmem:[%s176 + $0x60] sm:$0xff]
    %v190 = vld [vmem:[%s176 + $0x68] sm:$0xff]
    %v191 = vld [vmem:[%s176 + $0x70] sm:$0xff]
    %v192 = vld [vmem:[%s176 + $0x78] sm:$0xff]
    %v209 = vunpack.c.l.b16 %v177
    %v210 = vunpack.c.h.b16 %v177
    %v211 = vunpack.c.l.b16 %v178
    %v212 = vunpack.c.h.b16 %v178
    %v213 = vunpack.c.l.b16 %v179
    %v214 = vunpack.c.h.b16 %v179
    %v215 = vunpack.c.l.b16 %v180
    %v216 = vunpack.c.h.b16 %v180
    %v217 = vunpack.c.l.b16 %v181
    %v218 = vunpack.c.h.b16 %v181
    %v219 = vunpack.c.l.b16 %v182
    %v220 = vunpack.c.h.b16 %v182
    %v221 = vunpack.c.l.b16 %v183
    %v222 = vunpack.c.h.b16 %v183
    %v223 = vunpack.c.l.b16 %v184
    %v224 = vunpack.c.h.b16 %v184
    %v225 = vunpack.c.l.b16 %v185
    %v226 = vunpack.c.h.b16 %v185
    %v227 = vunpack.c.l.b16 %v186
    %v228 = vunpack.c.h.b16 %v186
    %v229 = vunpack.c.l.b16 %v187
    %v230 = vunpack.c.h.b16 %v187
    %v231 = vunpack.c.l.b16 %v188
    %v232 = vunpack.c.h.b16 %v188
    %v233 = vunpack.c.l.b16 %v189
    %v234 = vunpack.c.h.b16 %v189
    %v235 = vunpack.c.l.b16 %v190
    %v236 = vunpack.c.h.b16 %v190
    %v237 = vunpack.c.l.b16 %v191
    %v238 = vunpack.c.h.b16 %v191
    %v239 = vunpack.c.l.b16 %v192
    %v240 = vunpack.c.h.b16 %v192
    %v241 = vpack.c.b16 %v213, %v209
    %v242 = vpack.c.b16 %v214, %v210
    %v243 = vpack.c.b16 %v215, %v211
    %v244 = vpack.c.b16 %v216, %v212
    %v245 = vpack.c.b16 %v221, %v217
    %v246 = vpack.c.b16 %v222, %v218
    %v247 = vpack.c.b16 %v223, %v219
    %v248 = vpack.c.b16 %v224, %v220
    %v249 = vpack.c.b16 %v229, %v225
    %v250 = vpack.c.b16 %v230, %v226
    %v251 = vpack.c.b16 %v231, %v227
    %v252 = vpack.c.b16 %v232, %v228
    %v253 = vpack.c.b16 %v237, %v233
    %v254 = vpack.c.b16 %v238, %v234
    %v255 = vpack.c.b16 %v239, %v235
    %v256 = vpack.c.b16 %v240, %v236
    %v274 = vsel %vm143, %v174, 0
    %v277 = vsel %vm143, %v175, 0
    %279 = vmatprep.subr.bf16.mxu0 %v242
    %280 = vmatpush1.bf16.msra.mxu0 %v241
    %281 = vmatprep.subr.bf16.mxu0 %v246
    %282 = vmatpush1.bf16.msra.mxu0 %v245
    %283 = vmatprep.subr.bf16.mxu0 %v250
    %284 = vmatpush1.bf16.msra.mxu0 %v249
    %285 = vmatprep.subr.bf16.mxu0 %v254
    %286 = vmatpush1.bf16.msra.mxu0 %v253
    %287 = vmatprep.subr.bf16.mxu0 0
    %288 = vmatpush1.bf16.msra.mxu0 0
    %289 = vmatprep.subr.bf16.mxu0 0
    %290 = vmatpush1.bf16.msra.mxu0 0
    %291 = vmatprep.subr.bf16.mxu0 0
    %292 = vmatpush1.bf16.msra.mxu0 0
    %293 = vmatprep.subr.bf16.mxu0 0
    %294 = vmatpush1.bf16.msra.mxu0 0
    %295 = vmatprep.subr.bf16.mxu0 0
    %296 = vmatpush1.bf16.msra.mxu0 0
    %297 = vmatprep.subr.bf16.mxu0 0
    %298 = vmatpush1.bf16.msra.mxu0 0
    %299 = vmatprep.subr.bf16.mxu0 0
    %300 = vmatpush1.bf16.msra.mxu0 0
    %301 = vmatprep.subr.bf16.mxu0 0
    %302 = vmatpush1.bf16.msra.mxu0 0
    %303 = vmatprep.subr.bf16.mxu0 0
    %304 = vmatpush1.bf16.msra.mxu0 0
    %305 = vmatprep.subr.bf16.mxu0 0
    %306 = vmatpush1.bf16.msra.mxu0 0
    %307 = vmatprep.subr.bf16.mxu0 0
    %308 = vmatpush1.bf16.msra.mxu0 0
    %309 = vmatprep.subr.bf16.mxu0 0
    %310 = vmatpush1.bf16.msra.mxu0 0
    %311 = vmatprep.mubr.bf16.mxu0 0
    %312 = vmatmul.mubr.bf16.gmra.mrb[0].mxu0 %v274
    %v313 = vpop.f32.mrb[0].mxu0
    %v314 = vadd.f32 0.0, %v313
    %v315 = vpop.f32.mrb[0].mxu0
    %v316 = vadd.f32 0.0, %v315
    %v317 = vpop.f32.mrb[0].mxu0
    %v318 = vadd.f32 0.0, %v317
    %v319 = vpop.f32.mrb[0].mxu0
    %v320 = vadd.f32 0.0, %v319
    %321 = vmatprep.mubr.bf16.mxu0 0
    %322 = vmatmul.mubr.bf16.gmra.mrb[0].mxu0 %v277
    %v323 = vpop.f32.mrb[0].mxu0
    %v324 = vadd.f32 0.0, %v323
    %v325 = vpop.f32.mrb[0].mxu0
    %v326 = vadd.f32 0.0, %v325
    %v327 = vpop.f32.mrb[0].mxu0
    %v328 = vadd.f32 0.0, %v327
    %v329 = vpop.f32.mrb[0].mxu0
    %v330 = vadd.f32 0.0, %v329
    %331 = vdwg.mxu0
    %332 = vmatprep.subr.bf16.mxu0 %v244
    %333 = vmatpush1.bf16.msra.mxu0 %v243
    %334 = vmatprep.subr.bf16.mxu0 %v248
    %335 = vmatpush1.bf16.msra.mxu0 %v247
    %336 = vmatprep.subr.bf16.mxu0 %v252
    %337 = vmatpush1.bf16.msra.mxu0 %v251
    %338 = vmatprep.subr.bf16.mxu0 %v256
    %339 = vmatpush1.bf16.msra.mxu0 %v255
    %340 = vmatprep.subr.bf16.mxu0 0
    %341 = vmatpush1.bf16.msra.mxu0 0
    %342 = vmatprep.subr.bf16.mxu0 0
    %343 = vmatpush1.bf16.msra.mxu0 0
    %344 = vmatprep.subr.bf16.mxu0 0
    %345 = vmatpush1.bf16.msra.mxu0 0
    %346 = vmatprep.subr.bf16.mxu0 0
    %347 = vmatpush1.bf16.msra.mxu0 0
    %348 = vmatprep.subr.bf16.mxu0 0
    %349 = vmatpush1.bf16.msra.mxu0 0
    %350 = vmatprep.subr.bf16.mxu0 0
    %351 = vmatpush1.bf16.msra.mxu0 0
    %352 = vmatprep.subr.bf16.mxu0 0
    %353 = vmatpush1.bf16.msra.mxu0 0
    %354 = vmatprep.subr.bf16.mxu0 0
    %355 = vmatpush1.bf16.msra.mxu0 0
    %356 = vmatprep.subr.bf16.mxu0 0
    %357 = vmatpush1.bf16.msra.mxu0 0
    %358 = vmatprep.subr.bf16.mxu0 0
    %359 = vmatpush1.bf16.msra.mxu0 0
    %360 = vmatprep.subr.bf16.mxu0 0
    %361 = vmatpush1.bf16.msra.mxu0 0
    %362 = vmatprep.subr.bf16.mxu0 0
    %363 = vmatpush1.bf16.msra.mxu0 0
    %364 = vmatprep.mubr.bf16.mxu0 0
    %365 = vmatmul.mubr.bf16.gmra.mrb[0].mxu0 %v274
    %v366 = vpop.f32.mrb[0].mxu0
    %v367 = vadd.f32 0.0, %v366
    %v368 = vpop.f32.mrb[0].mxu0
    %v369 = vadd.f32 0.0, %v368
    %v370 = vpop.f32.mrb[0].mxu0
    %v371 = vadd.f32 0.0, %v370
    %v372 = vpop.f32.mrb[0].mxu0
    %v373 = vadd.f32 0.0, %v372
    %374 = vmatprep.mubr.bf16.mxu0 0
    %375 = vmatmul.mubr.bf16.gmra.mrb[0].mxu0 %v277
    %v376 = vpop.f32.mrb[0].mxu0
    %v377 = vadd.f32 0.0, %v376
    %v378 = vpop.f32.mrb[0].mxu0
    %v379 = vadd.f32 0.0, %v378
    %v380 = vpop.f32.mrb[0].mxu0
    %v381 = vadd.f32 0.0, %v380
    %v382 = vpop.f32.mrb[0].mxu0
    %v383 = vadd.f32 0.0, %v382
    %384 = vdwg.mxu0
    %v401 = vunpack.c.l.b16 %v154
    %v402 = vunpack.c.h.b16 %v154
    %v403 = vunpack.c.l.b16 %v155
    %v404 = vunpack.c.h.b16 %v155
    %v405 = vunpack.c.l.b16 %v156
    %v406 = vunpack.c.h.b16 %v156
    %v407 = vunpack.c.l.b16 %v157
    %v408 = vunpack.c.h.b16 %v157
    %v409 = vunpack.c.l.b16 %v158
    %v410 = vunpack.c.h.b16 %v158
    %v411 = vunpack.c.l.b16 %v159
    %v412 = vunpack.c.h.b16 %v159
    %v413 = vunpack.c.l.b16 %v160
    %v414 = vunpack.c.h.b16 %v160
    %v415 = vunpack.c.l.b16 %v161
    %v416 = vunpack.c.h.b16 %v161
    %v417 = vunpack.c.l.b16 %v162
    %v418 = vunpack.c.h.b16 %v162
    %v419 = vunpack.c.l.b16 %v163
    %v420 = vunpack.c.h.b16 %v163
    %v421 = vunpack.c.l.b16 %v164
    %v422 = vunpack.c.h.b16 %v164
    %v423 = vunpack.c.l.b16 %v165
    %v424 = vunpack.c.h.b16 %v165
    %v425 = vunpack.c.l.b16 %v166
    %v426 = vunpack.c.h.b16 %v166
    %v427 = vunpack.c.l.b16 %v167
    %v428 = vunpack.c.h.b16 %v167
    %v429 = vunpack.c.l.b16 %v168
    %v430 = vunpack.c.h.b16 %v168
    %v431 = vunpack.c.l.b16 %v169
    %v432 = vunpack.c.h.b16 %v169
    %v433 = vpack.c.b16 %v405, %v401
    %v434 = vpack.c.b16 %v406, %v402
    %v435 = vpack.c.b16 %v407, %v403
    %v436 = vpack.c.b16 %v408, %v404
    %v437 = vpack.c.b16 %v413, %v409
    %v438 = vpack.c.b16 %v414, %v410
    %v439 = vpack.c.b16 %v415, %v411
    %v440 = vpack.c.b16 %v416, %v412
    %v441 = vpack.c.b16 %v421, %v417
    %v442 = vpack.c.b16 %v422, %v418
    %v443 = vpack.c.b16 %v423, %v419
    %v444 = vpack.c.b16 %v424, %v420
    %v445 = vpack.c.b16 %v429, %v425
    %v446 = vpack.c.b16 %v430, %v426
    %v447 = vpack.c.b16 %v431, %v427
    %v448 = vpack.c.b16 %v432, %v428
    %v466 = vsel %vm143, %v152, 0
    %v469 = vsel %vm143, %v153, 0
    %471 = vmatprep.subr.bf16.mxu0 %v434
    %472 = vmatpush1.bf16.msra.mxu0 %v433
    %473 = vmatprep.subr.bf16.mxu0 %v438
    %474 = vmatpush1.bf16.msra.mxu0 %v437
    %475 = vmatprep.subr.bf16.mxu0 %v442
    %476 = vmatpush1.bf16.msra.mxu0 %v441
    %477 = vmatprep.subr.bf16.mxu0 %v446
    %478 = vmatpush1.bf16.msra.mxu0 %v445
    %479 = vmatprep.subr.bf16.mxu0 0
    %480 = vmatpush1.bf16.msra.mxu0 0
    %481 = vmatprep.subr.bf16.mxu0 0
    %482 = vmatpush1.bf16.msra.mxu0 0
    %483 = vmatprep.subr.bf16.mxu0 0
    %484 = vmatpush1.bf16.msra.mxu0 0
    %485 = vmatprep.subr.bf16.mxu0 0
    %486 = vmatpush1.bf16.msra.mxu0 0
    %487 = vmatprep.subr.bf16.mxu0 0
    %488 = vmatpush1.bf16.msra.mxu0 0
    %489 = vmatprep.subr.bf16.mxu0 0
    %490 = vmatpush1.bf16.msra.mxu0 0
    %491 = vmatprep.subr.bf16.mxu0 0
    %492 = vmatpush1.bf16.msra.mxu0 0
    %493 = vmatprep.subr.bf16.mxu0 0
    %494 = vmatpush1.bf16.msra.mxu0 0
    %495 = vmatprep.subr.bf16.mxu0 0
    %496 = vmatpush1.bf16.msra.mxu0 0
    %497 = vmatprep.subr.bf16.mxu0 0
    %498 = vmatpush1.bf16.msra.mxu0 0
    %499 = vmatprep.subr.bf16.mxu0 0
    %500 = vmatpush1.bf16.msra.mxu0 0
    %501 = vmatprep.subr.bf16.mxu0 0
    %502 = vmatpush1.bf16.msra.mxu0 0
    %503 = vmatprep.mubr.bf16.mxu0 0
    %504 = vmatmul.mubr.bf16.gmra.mrb[0].mxu0 %v466
    %v505 = vpop.f32.mrb[0].mxu0
    %v506 = vadd.f32 %v314, %v505
    %v507 = vpop.f32.mrb[0].mxu0
    %v508 = vadd.f32 %v316, %v507
    %v509 = vpop.f32.mrb[0].mxu0
    %v510 = vadd.f32 %v318, %v509
    %v511 = vpop.f32.mrb[0].mxu0
    %v512 = vadd.f32 %v320, %v511
    %513 = vmatprep.mubr.bf16.mxu0 0
    %514 = vmatmul.mubr.bf16.gmra.mrb[0].mxu0 %v469
    %v515 = vpop.f32.mrb[0].mxu0
    %v516 = vadd.f32 %v324, %v515
    %v517 = vpop.f32.mrb[0].mxu0
    %v518 = vadd.f32 %v326, %v517
    %v519 = vpop.f32.mrb[0].mxu0
    %v520 = vadd.f32 %v328, %v519
    %v521 = vpop.f32.mrb[0].mxu0
    %v522 = vadd.f32 %v330, %v521
    %523 = vdwg.mxu0
    %524 = vmatprep.subr.bf16.mxu0 %v436
    %525 = vmatpush1.bf16.msra.mxu0 %v435
    %526 = vmatprep.subr.bf16.mxu0 %v440
    %527 = vmatpush1.bf16.msra.mxu0 %v439
    %528 = vmatprep.subr.bf16.mxu0 %v444
    %529 = vmatpush1.bf16.msra.mxu0 %v443
    %530 = vmatprep.subr.bf16.mxu0 %v448
    %531 = vmatpush1.bf16.msra.mxu0 %v447
    %532 = vmatprep.subr.bf16.mxu0 0
    %533 = vmatpush1.bf16.msra.mxu0 0
    %534 = vmatprep.subr.bf16.mxu0 0
    %535 = vmatpush1.bf16.msra.mxu0 0
    %536 = vmatprep.subr.bf16.mxu0 0
    %537 = vmatpush1.bf16.msra.mxu0 0
    %538 = vmatprep.subr.bf16.mxu0 0
    %539 = vmatpush1.bf16.msra.mxu0 0
    %540 = vmatprep.subr.bf16.mxu0 0
    %541 = vmatpush1.bf16.msra.mxu0 0
    %542 = vmatprep.subr.bf16.mxu0 0
    %543 = vmatpush1.bf16.msra.mxu0 0
    %544 = vmatprep.subr.bf16.mxu0 0
    %545 = vmatpush1.bf16.msra.mxu0 0
    %546 = vmatprep.subr.bf16.mxu0 0
    %547 = vmatpush1.bf16.msra.mxu0 0
    %548 = vmatprep.subr.bf16.mxu0 0
    %549 = vmatpush1.bf16.msra.mxu0 0
    %550 = vmatprep.subr.bf16.mxu0 0
    %551 = vmatpush1.bf16.msra.mxu0 0
    %552 = vmatprep.subr.bf16.mxu0 0
    %553 = vmatpush1.bf16.msra.mxu0 0
    %554 = vmatprep.subr.bf16.mxu0 0
    %555 = vmatpush1.bf16.msra.mxu0 0
    %556 = vmatprep.mubr.bf16.mxu0 0
    %557 = vmatmul.mubr.bf16.gmra.mrb[0].mxu0 %v466
    %v558 = vpop.f32.mrb[0].mxu0
    %v559 = vadd.f32 %v367, %v558
    %v560 = vpop.f32.mrb[0].mxu0
    %v561 = vadd.f32 %v369, %v560
    %v562 = vpop.f32.mrb[0].mxu0
    %v563 = vadd.f32 %v371, %v562
    %v564 = vpop.f32.mrb[0].mxu0
    %v565 = vadd.f32 %v373, %v564
    %566 = vmatprep.mubr.bf16.mxu0 0
    %567 = vmatmul.mubr.bf16.gmra.mrb[0].mxu0 %v469
    %v568 = vpop.f32.mrb[0].mxu0
    %v569 = vadd.f32 %v377, %v568
    %v570 = vpop.f32.mrb[0].mxu0
    %v571 = vadd.f32 %v379, %v570
    %v572 = vpop.f32.mrb[0].mxu0
    %v573 = vadd.f32 %v381, %v572
    %v574 = vpop.f32.mrb[0].mxu0
    %v575 = vadd.f32 %v383, %v574
    %576 = vdwg.mxu0
    %v577 = vld [vmem:[#allocation2 + $0x2] sm:$0xff]
    %v578 = vld [vmem:[#allocation2 + $0xa] sm:$0xff]
    %v579 = vld [vmem:[#allocation2 + $0x1a] sm:$0xff]
    %v580 = vld [vmem:[#allocation2 + $0x22] sm:$0xff]
    %v581 = vpack.c.bf16 %v578, %v577
    %v582 = vpack.c.bf16 %v580, %v579
    %s583 = scalar_lea.vmem [#allocation6], 256
    %v584 = vld [vmem:[%s583] sm:$0xff]
    %v585 = vld [vmem:[%s583 + $0x8] sm:$0xff]
    %v586 = vld [vmem:[%s583 + $0x10] sm:$0xff]
    %v587 = vld [vmem:[%s583 + $0x18] sm:$0xff]
    %v588 = vld [vmem:[%s583 + $0x20] sm:$0xff]
    %v589 = vld [vmem:[%s583 + $0x28] sm:$0xff]
    %v590 = vld [vmem:[%s583 + $0x30] sm:$0xff]
    %v591 = vld [vmem:[%s583 + $0x38] sm:$0xff]
    %v592 = vld [vmem:[%s583 + $0x40] sm:$0xff]
    %v593 = vld [vmem:[%s583 + $0x48] sm:$0xff]
    %v594 = vld [vmem:[%s583 + $0x50] sm:$0xff]
    %v595 = vld [vmem:[%s583 + $0x58] sm:$0xff]
    %v596 = vld [vmem:[%s583 + $0x60] sm:$0xff]
    %v597 = vld [vmem:[%s583 + $0x68] sm:$0xff]
    %v598 = vld [vmem:[%s583 + $0x70] sm:$0xff]
    %v599 = vld [vmem:[%s583 + $0x78] sm:$0xff]
    %v616 = vunpack.c.l.b16 %v584
    %v617 = vunpack.c.h.b16 %v584
    %v618 = vunpack.c.l.b16 %v585
    %v619 = vunpack.c.h.b16 %v585
    %v620 = vunpack.c.l.b16 %v586
    %v621 = vunpack.c.h.b16 %v586
    %v622 = vunpack.c.l.b16 %v587
    %v623 = vunpack.c.h.b16 %v587
    %v624 = vunpack.c.l.b16 %v588
    %v625 = vunpack.c.h.b16 %v588
    %v626 = vunpack.c.l.b16 %v589
    %v627 = vunpack.c.h.b16 %v589
    %v628 = vunpack.c.l.b16 %v590
    %v629 = vunpack.c.h.b16 %v590
    %v630 = vunpack.c.l.b16 %v591
    %v631 = vunpack.c.h.b16 %v591
    %v632 = vunpack.c.l.b16 %v592
    %v633 = vunpack.c.h.b16 %v592
    %v634 = vunpack.c.l.b16 %v593
    %v635 = vunpack.c.h.b16 %v593
    %v636 = vunpack.c.l.b16 %v594
    %v637 = vunpack.c.h.b16 %v594
    %v638 = vunpack.c.l.b16 %v595
    %v639 = vunpack.c.h.b16 %v595
    %v640 = vunpack.c.l.b16 %v596
    %v641 = vunpack.c.h.b16 %v596
    %v642 = vunpack.c.l.b16 %v597
    %v643 = vunpack.c.h.b16 %v597
    %v644 = vunpack.c.l.b16 %v598
    %v645 = vunpack.c.h.b16 %v598
    %v646 = vunpack.c.l.b16 %v599
    %v647 = vunpack.c.h.b16 %v599
    %v648 = vpack.c.b16 %v620, %v616
    %v649 = vpack.c.b16 %v621, %v617
    %v650 = vpack.c.b16 %v622, %v618
    %v651 = vpack.c.b16 %v623, %v619
    %v652 = vpack.c.b16 %v628, %v624
    %v653 = vpack.c.b16 %v629, %v625
    %v654 = vpack.c.b16 %v630, %v626
    %v655 = vpack.c.b16 %v631, %v627
    %v656 = vpack.c.b16 %v636, %v632
    %v657 = vpack.c.b16 %v637, %v633
    %v658 = vpack.c.b16 %v638, %v634
    %v659 = vpack.c.b16 %v639, %v635
    %v660 = vpack.c.b16 %v644, %v640
    %v661 = vpack.c.b16 %v645, %v641
    %v662 = vpack.c.b16 %v646, %v642
    %v663 = vpack.c.b16 %v647, %v643
    %v681 = vsel %vm143, %v581, 0
    %v684 = vsel %vm143, %v582, 0
    %686 = vmatprep.subr.bf16.mxu0 %v649
    %687 = vmatpush1.bf16.msra.mxu0 %v648
    %688 = vmatprep.subr.bf16.mxu0 %v653
    %689 = vmatpush1.bf16.msra.mxu0 %v652
    %690 = vmatprep.subr.bf16.mxu0 %v657
    %691 = vmatpush1.bf16.msra.mxu0 %v656
    %692 = vmatprep.subr.bf16.mxu0 %v661
    %693 = vmatpush1.bf16.msra.mxu0 %v660
    %694 = vmatprep.subr.bf16.mxu0 0
    %695 = vmatpush1.bf16.msra.mxu0 0
    %696 = vmatprep.subr.bf16.mxu0 0
    %697 = vmatpush1.bf16.msra.mxu0 0
    %698 = vmatprep.subr.bf16.mxu0 0
    %699 = vmatpush1.bf16.msra.mxu0 0
    %700 = vmatprep.subr.bf16.mxu0 0
    %701 = vmatpush1.bf16.msra.mxu0 0
    %702 = vmatprep.subr.bf16.mxu0 0
    %703 = vmatpush1.bf16.msra.mxu0 0
    %704 = vmatprep.subr.bf16.mxu0 0
    %705 = vmatpush1.bf16.msra.mxu0 0
    %706 = vmatprep.subr.bf16.mxu0 0
    %707 = vmatpush1.bf16.msra.mxu0 0
    %708 = vmatprep.subr.bf16.mxu0 0
    %709 = vmatpush1.bf16.msra.mxu0 0
    %710 = vmatprep.subr.bf16.mxu0 0
    %711 = vmatpush1.bf16.msra.mxu0 0
    %712 = vmatprep.subr.bf16.mxu0 0
    %713 = vmatpush1.bf16.msra.mxu0 0
    %714 = vmatprep.subr.bf16.mxu0 0
    %715 = vmatpush1.bf16.msra.mxu0 0
    %716 = vmatprep.subr.bf16.mxu0 0
    %717 = vmatpush1.bf16.msra.mxu0 0
    %718 = vmatprep.mubr.bf16.mxu0 0
    %719 = vmatmul.mubr.bf16.gmra.mrb[0].mxu0 %v681
    %v720 = vpop.f32.mrb[0].mxu0
    %v721 = vadd.f32 0.0, %v720
    %v722 = vpop.f32.mrb[0].mxu0
    %v723 = vadd.f32 0.0, %v722
    %v724 = vpop.f32.mrb[0].mxu0
    %v725 = vadd.f32 0.0, %v724
    %v726 = vpop.f32.mrb[0].mxu0
    %v727 = vadd.f32 0.0, %v726
    %728 = vmatprep.mubr.bf16.mxu0 0
    %729 = vmatmul.mubr.bf16.gmra.mrb[0].mxu0 %v684
    %v730 = vpop.f32.mrb[0].mxu0
    %v731 = vadd.f32 0.0, %v730
    %v732 = vpop.f32.mrb[0].mxu0
    %v733 = vadd.f32 0.0, %v732
    %v734 = vpop.f32.mrb[0].mxu0
    %v735 = vadd.f32 0.0, %v734
    %v736 = vpop.f32.mrb[0].mxu0
    %v737 = vadd.f32 0.0, %v736
    %738 = vdwg.mxu0
    %739 = vmatprep.subr.bf16.mxu0 %v651
    %740 = vmatpush1.bf16.msra.mxu0 %v650
    %741 = vmatprep.subr.bf16.mxu0 %v655
    %742 = vmatpush1.bf16.msra.mxu0 %v654
    %743 = vmatprep.subr.bf16.mxu0 %v659
    %744 = vmatpush1.bf16.msra.mxu0 %v658
    %745 = vmatprep.subr.bf16.mxu0 %v663
    %746 = vmatpush1.bf16.msra.mxu0 %v662
    %747 = vmatprep.subr.bf16.mxu0 0
    %748 = vmatpush1.bf16.msra.mxu0 0
    %749 = vmatprep.subr.bf16.mxu0 0
    %750 = vmatpush1.bf16.msra.mxu0 0
    %751 = vmatprep.subr.bf16.mxu0 0
    %752 = vmatpush1.bf16.msra.mxu0 0
    %753 = vmatprep.subr.bf16.mxu0 0
    %754 = vmatpush1.bf16.msra.mxu0 0
    %755 = vmatprep.subr.bf16.mxu0 0
    %756 = vmatpush1.bf16.msra.mxu0 0
    %757 = vmatprep.subr.bf16.mxu0 0
    %758 = vmatpush1.bf16.msra.mxu0 0
    %759 = vmatprep.subr.bf16.mxu0 0
    %760 = vmatpush1.bf16.msra.mxu0 0
    %761 = vmatprep.subr.bf16.mxu0 0
    %762 = vmatpush1.bf16.msra.mxu0 0
    %763 = vmatprep.subr.bf16.mxu0 0
    %764 = vmatpush1.bf16.msra.mxu0 0
    %765 = vmatprep.subr.bf16.mxu0 0
    %766 = vmatpush1.bf16.msra.mxu0 0
    %767 = vmatprep.subr.bf16.mxu0 0
    %768 = vmatpush1.bf16.msra.mxu0 0
    %769 = vmatprep.subr.bf16.mxu0 0
    %770 = vmatpush1.bf16.msra.mxu0 0
    %771 = vmatprep.mubr.bf16.mxu0 0
    %772 = vmatmul.mubr.bf16.gmra.mrb[0].mxu0 %v681
    %v773 = vpop.f32.mrb[0].mxu0
    %v774 = vadd.f32 0.0, %v773
    %v775 = vpop.f32.mrb[0].mxu0
    %v776 = vadd.f32 0.0, %v775
    %v777 = vpop.f32.mrb[0].mxu0
    %v778 = vadd.f32 0.0, %v777
    %v779 = vpop.f32.mrb[0].mxu0
    %v780 = vadd.f32 0.0, %v779
    %781 = vmatprep.mubr.bf16.mxu0 0
    %782 = vmatmul.mubr.bf16.gmra.mrb[0].mxu0 %v684
    %v783 = vpop.f32.mrb[0].mxu0
    %v784 = vadd.f32 0.0, %v783
    %v785 = vpop.f32.mrb[0].mxu0
    %v786 = vadd.f32 0.0, %v785
    %v787 = vpop.f32.mrb[0].mxu0
    %v788 = vadd.f32 0.0, %v787
    %v789 = vpop.f32.mrb[0].mxu0
    %v790 = vadd.f32 0.0, %v789
    %791 = vdwg.mxu0
    %v792 = vadd.f32 %v506, %v721
    %v793 = vadd.f32 %v508, %v723
    %v794 = vadd.f32 %v559, %v774
    %v795 = vadd.f32 %v561, %v776
    %v796 = vadd.f32 %v510, %v725
    %v797 = vadd.f32 %v512, %v727
    %v798 = vadd.f32 %v563, %v778
    %v799 = vadd.f32 %v565, %v780
    %v800 = vadd.f32 %v516, %v731
    %v801 = vadd.f32 %v518, %v733
    %v802 = vadd.f32 %v569, %v784
    %v803 = vadd.f32 %v571, %v786
    %v804 = vadd.f32 %v520, %v735
    %v805 = vadd.f32 %v522, %v737
    %v806 = vadd.f32 %v573, %v788
    %v807 = vadd.f32 %v575, %v790
    %v808 = vld [vmem:[%s2] sm:$0xf]
    %v810 = vlaneseq
    %v811 = vshrl.u32 %v810, 7
    %v812 = vsub.s32 0, %v811
    %v813 = vrot.slane %v808, %v812
    %v814 = vlaneseq
    %v815 = vshrl.u32 %v814, 7
    %v816 = vsub.s32 1, %v815
    %v817 = vrot.slane %v808, %v816
    %v818 = vlaneseq
    %v819 = vshrl.u32 %v818, 7
    %v820 = vsub.s32 2, %v819
    %v821 = vrot.slane %v808, %v820
    %v822 = vlaneseq
    %v823 = vshrl.u32 %v822, 7
    %v824 = vsub.s32 3, %v823
    %v825 = vrot.slane %v808, %v824
    %v830 = vmul.f32 %v792, %v813
    %v831 = vmul.f32 %v793, %v817
    %v832 = vmul.f32 %v794, %v821
    %v833 = vmul.f32 %v795, %v825
    %v834 = vmul.f32 %v796, %v813
    %v835 = vmul.f32 %v797, %v817
    %v836 = vmul.f32 %v798, %v821
    %v837 = vmul.f32 %v799, %v825
    %v838 = vmul.f32 %v800, %v813
    %v839 = vmul.f32 %v801, %v817
    %v840 = vmul.f32 %v802, %v821
    %v841 = vmul.f32 %v803, %v825
    %v842 = vmul.f32 %v804, %v813
    %v843 = vmul.f32 %v805, %v817
    %v844 = vmul.f32 %v806, %v821
    %v845 = vmul.f32 %v807, %v825
    %v846 = vld [vmem:[%s3] sm:$0xf]
    %v848 = vlaneseq
    %v849 = vshrl.u32 %v848, 7
    %v850 = vsub.s32 0, %v849
    %v851 = vrot.slane %v846, %v850
    %v852 = vlaneseq
    %v853 = vshrl.u32 %v852, 7
    %v854 = vsub.s32 1, %v853
    %v855 = vrot.slane %v846, %v854
    %v856 = vlaneseq
    %v857 = vshrl.u32 %v856, 7
    %v858 = vsub.s32 2, %v857
    %v859 = vrot.slane %v846, %v858
    %v860 = vlaneseq
    %v861 = vshrl.u32 %v860, 7
    %v862 = vsub.s32 3, %v861
    %v863 = vrot.slane %v846, %v862
    %v868 = vadd.f32 %v830, %v851
    %v869 = vadd.f32 %v831, %v855
    %v870 = vadd.f32 %v832, %v859
    %v871 = vadd.f32 %v833, %v863
    %v872 = vadd.f32 %v834, %v851
    %v873 = vadd.f32 %v835, %v855
    %v874 = vadd.f32 %v836, %v859
    %v875 = vadd.f32 %v837, %v863
    %v876 = vadd.f32 %v838, %v851
    %v877 = vadd.f32 %v839, %v855
    %v878 = vadd.f32 %v840, %v859
    %v879 = vadd.f32 %v841, %v863
    %v880 = vadd.f32 %v842, %v851
    %v881 = vadd.f32 %v843, %v855
    %v882 = vadd.f32 %v844, %v859
    %v883 = vadd.f32 %v845, %v863
    %v884 = vmax.f32 %v868, 0.0
    %v885 = vmax.f32 %v869, 0.0
    %v886 = vmax.f32 %v870, 0.0
    %v887 = vmax.f32 %v871, 0.0
    %v888 = vmax.f32 %v872, 0.0
    %v889 = vmax.f32 %v873, 0.0
    %v890 = vmax.f32 %v874, 0.0
    %v891 = vmax.f32 %v875, 0.0
    %v892 = vmax.f32 %v876, 0.0
    %v893 = vmax.f32 %v877, 0.0
    %v894 = vmax.f32 %v878, 0.0
    %v895 = vmax.f32 %v879, 0.0
    %v896 = vmax.f32 %v880, 0.0
    %v897 = vmax.f32 %v881, 0.0
    %v898 = vmax.f32 %v882, 0.0
    %v899 = vmax.f32 %v883, 0.0
    %v916 = vcombine.low %v884, %v885
    %v917 = vcombine.high %v884, %v885
    %v918 = vcombine.low %v886, %v887
    %v919 = vcombine.high %v886, %v887
    %v921 = vunpack.c.l.s4 1983009808
    %v922 = vunpack.c.0.s8 %v921
    %v923 = vlaneseq
    %v924 = vshrl.u32 %v923, 7
    %v925 = vsub.s32 %v922, %v924
    %v926 = vrot.slane %v916, %v925
    %v928 = vunpack.c.l.s4 1983009808
    %v929 = vunpack.c.0.s8 %v928
    %v930 = vlaneseq
    %v931 = vshrl.u32 %v930, 7
    %v932 = vsub.s32 %v929, %v931
    %v933 = vrot.slane %v917, %v932
    %v935 = vunpack.c.l.s4 1983009808
    %v936 = vunpack.c.0.s8 %v935
    %v937 = vlaneseq
    %v938 = vshrl.u32 %v937, 7
    %v939 = vsub.s32 %v936, %v938
    %v940 = vrot.slane %v918, %v939
    %v942 = vunpack.c.l.s4 1983009808
    %v943 = vunpack.c.0.s8 %v942
    %v944 = vlaneseq
    %v945 = vshrl.u32 %v944, 7
    %v946 = vsub.s32 %v943, %v945
    %v947 = vrot.slane %v919, %v946
    %v948 = vcombine.low %v926, %v940
    %v949 = vcombine.high %v926, %v940
    %v950 = vcombine.low %v933, %v947
    %v951 = vcombine.high %v933, %v947
    %v952 = vcombine.low %v888, %v889
    %v953 = vcombine.high %v888, %v889
    %v954 = vcombine.low %v890, %v891
    %v955 = vcombine.high %v890, %v891
    %v957 = vunpack.c.l.s4 1983009808
    %v958 = vunpack.c.0.s8 %v957
    %v959 = vlaneseq
    %v960 = vshrl.u32 %v959, 7
    %v961 = vsub.s32 %v958, %v960
    %v962 = vrot.slane %v952, %v961
    %v964 = vunpack.c.l.s4 1983009808
    %v965 = vunpack.c.0.s8 %v964
    %v966 = vlaneseq
    %v967 = vshrl.u32 %v966, 7
    %v968 = vsub.s32 %v965, %v967
    %v969 = vrot.slane %v953, %v968
    %v971 = vunpack.c.l.s4 1983009808
    %v972 = vunpack.c.0.s8 %v971
    %v973 = vlaneseq
    %v974 = vshrl.u32 %v973, 7
    %v975 = vsub.s32 %v972, %v974
    %v976 = vrot.slane %v954, %v975
    %v978 = vunpack.c.l.s4 1983009808
    %v979 = vunpack.c.0.s8 %v978
    %v980 = vlaneseq
    %v981 = vshrl.u32 %v980, 7
    %v982 = vsub.s32 %v979, %v981
    %v983 = vrot.slane %v955, %v982
    %v984 = vcombine.low %v962, %v976
    %v985 = vcombine.high %v962, %v976
    %v986 = vcombine.low %v969, %v983
    %v987 = vcombine.high %v969, %v983
    %v988 = vcombine.low %v892, %v893
    %v989 = vcombine.high %v892, %v893
    %v990 = vcombine.low %v894, %v895
    %v991 = vcombine.high %v894, %v895
    %v993 = vunpack.c.l.s4 1983009808
    %v994 = vunpack.c.0.s8 %v993
    %v995 = vlaneseq
    %v996 = vshrl.u32 %v995, 7
    %v997 = vsub.s32 %v994, %v996
    %v998 = vrot.slane %v988, %v997
    %v1000 = vunpack.c.l.s4 1983009808
    %v1001 = vunpack.c.0.s8 %v1000
    %v1002 = vlaneseq
    %v1003 = vshrl.u32 %v1002, 7
    %v1004 = vsub.s32 %v1001, %v1003
    %v1005 = vrot.slane %v989, %v1004
    %v1007 = vunpack.c.l.s4 1983009808
    %v1008 = vunpack.c.0.s8 %v1007
    %v1009 = vlaneseq
    %v1010 = vshrl.u32 %v1009, 7
    %v1011 = vsub.s32 %v1008, %v1010
    %v1012 = vrot.slane %v990, %v1011
    %v1014 = vunpack.c.l.s4 1983009808
    %v1015 = vunpack.c.0.s8 %v1014
    %v1016 = vlaneseq
    %v1017 = vshrl.u32 %v1016, 7
    %v1018 = vsub.s32 %v1015, %v1017
    %v1019 = vrot.slane %v991, %v1018
    %v1020 = vcombine.low %v998, %v1012
    %v1021 = vcombine.high %v998, %v1012
    %v1022 = vcombine.low %v1005, %v1019
    %v1023 = vcombine.high %v1005, %v1019
    %v1024 = vcombine.low %v896, %v897
    %v1025 = vcombine.high %v896, %v897
    %v1026 = vcombine.low %v898, %v899
    %v1027 = vcombine.high %v898, %v899
    %v1029 = vunpack.c.l.s4 1983009808
    %v1030 = vunpack.c.0.s8 %v1029
    %v1031 = vlaneseq
    %v1032 = vshrl.u32 %v1031, 7
    %v1033 = vsub.s32 %v1030, %v1032
    %v1034 = vrot.slane %v1024, %v1033
    %v1036 = vunpack.c.l.s4 1983009808
    %v1037 = vunpack.c.0.s8 %v1036
    %v1038 = vlaneseq
    %v1039 = vshrl.u32 %v1038, 7
    %v1040 = vsub.s32 %v1037, %v1039
    %v1041 = vrot.slane %v1025, %v1040
    %v1043 = vunpack.c.l.s4 1983009808
    %v1044 = vunpack.c.0.s8 %v1043
    %v1045 = vlaneseq
    %v1046 = vshrl.u32 %v1045, 7
    %v1047 = vsub.s32 %v1044, %v1046
    %v1048 = vrot.slane %v1026, %v1047
    %v1050 = vunpack.c.l.s4 1983009808
    %v1051 = vunpack.c.0.s8 %v1050
    %v1052 = vlaneseq
    %v1053 = vshrl.u32 %v1052, 7
    %v1054 = vsub.s32 %v1051, %v1053
    %v1055 = vrot.slane %v1027, %v1054
    %v1056 = vcombine.low %v1034, %v1048
    %v1057 = vcombine.high %v1034, %v1048
    %v1058 = vcombine.low %v1041, %v1055
    %v1059 = vcombine.high %v1041, %v1055
    %v1076 = vrot.slane %v948, 7
    %v1077 = vrot.slane %v1076, 2
    %v1078 = vrot.slane %v949, 7
    %v1079 = vrot.slane %v1078, 2
    %v1080 = vrot.slane %v950, 7
    %v1081 = vrot.slane %v1080, 2
    %v1082 = vrot.slane %v951, 7
    %v1083 = vrot.slane %v1082, 2
    %v1084 = vrot.slane %v984, 7
    %v1085 = vrot.slane %v1084, 2
    %v1086 = vrot.slane %v985, 7
    %v1087 = vrot.slane %v1086, 2
    %v1088 = vrot.slane %v986, 7
    %v1089 = vrot.slane %v1088, 2
    %v1090 = vrot.slane %v987, 7
    %v1091 = vrot.slane %v1090, 2
    %v1092 = vrot.slane %v1020, 7
    %v1093 = vrot.slane %v1092, 2
    %v1094 = vrot.slane %v1021, 7
    %v1095 = vrot.slane %v1094, 2
    %v1096 = vrot.slane %v1022, 7
    %v1097 = vrot.slane %v1096, 2
    %v1098 = vrot.slane %v1023, 7
    %v1099 = vrot.slane %v1098, 2
    %v1100 = vrot.slane %v1056, 7
    %v1101 = vrot.slane %v1100, 2
    %v1102 = vrot.slane %v1057, 7
    %v1103 = vrot.slane %v1102, 2
    %v1104 = vrot.slane %v1058, 7
    %v1105 = vrot.slane %v1104, 2
    %v1106 = vrot.slane %v1059, 7
    %v1107 = vrot.slane %v1106, 2
    %v1124 = vmax.f32 %v948, %v1077
    %v1125 = vmax.f32 %v949, %v1079
    %v1126 = vmax.f32 %v950, %v1081
    %v1127 = vmax.f32 %v951, %v1083
    %v1128 = vmax.f32 %v984, %v1085
    %v1129 = vmax.f32 %v985, %v1087
    %v1130 = vmax.f32 %v986, %v1089
    %v1131 = vmax.f32 %v987, %v1091
    %v1132 = vmax.f32 %v1020, %v1093
    %v1133 = vmax.f32 %v1021, %v1095
    %v1134 = vmax.f32 %v1022, %v1097
    %v1135 = vmax.f32 %v1023, %v1099
    %v1136 = vmax.f32 %v1056, %v1101
    %v1137 = vmax.f32 %v1057, %v1103
    %v1138 = vmax.f32 %v1058, %v1105
    %v1139 = vmax.f32 %v1059, %v1107
    %v1156 = vlaneseq
    %v1157 = vshrl.u32 %v1156, 7
    %v1158 = vsub.s32 0, %v1157
    %v1159 = vrot.slane %v1124, %v1158
    %v1160 = vlaneseq
    %v1161 = vshrl.u32 %v1160, 7
    %v1162 = vsub.s32 2, %v1161
    %v1163 = vrot.slane %v1124, %v1162
    %v1164 = vlaneseq
    %v1165 = vshrl.u32 %v1164, 7
    %v1166 = vsub.s32 4, %v1165
    %v1167 = vrot.slane %v1124, %v1166
    %v1168 = vlaneseq
    %v1169 = vshrl.u32 %v1168, 7
    %v1170 = vsub.s32 6, %v1169
    %v1171 = vrot.slane %v1124, %v1170
    %v1172 = vlaneseq
    %v1173 = vshrl.u32 %v1172, 7
    %v1174 = vsub.s32 0, %v1173
    %v1175 = vrot.slane %v1125, %v1174
    %v1176 = vlaneseq
    %v1177 = vshrl.u32 %v1176, 7
    %v1178 = vsub.s32 2, %v1177
    %v1179 = vrot.slane %v1125, %v1178
    %v1180 = vlaneseq
    %v1181 = vshrl.u32 %v1180, 7
    %v1182 = vsub.s32 4, %v1181
    %v1183 = vrot.slane %v1125, %v1182
    %v1184 = vlaneseq
    %v1185 = vshrl.u32 %v1184, 7
    %v1186 = vsub.s32 6, %v1185
    %v1187 = vrot.slane %v1125, %v1186
    %v1188 = vlaneseq
    %v1189 = vshrl.u32 %v1188, 7
    %v1190 = vsub.s32 0, %v1189
    %v1191 = vrot.slane %v1126, %v1190
    %v1192 = vlaneseq
    %v1193 = vshrl.u32 %v1192, 7
    %v1194 = vsub.s32 2, %v1193
    %v1195 = vrot.slane %v1126, %v1194
    %v1196 = vlaneseq
    %v1197 = vshrl.u32 %v1196, 7
    %v1198 = vsub.s32 4, %v1197
    %v1199 = vrot.slane %v1126, %v1198
    %v1200 = vlaneseq
    %v1201 = vshrl.u32 %v1200, 7
    %v1202 = vsub.s32 6, %v1201
    %v1203 = vrot.slane %v1126, %v1202
    %v1204 = vlaneseq
    %v1205 = vshrl.u32 %v1204, 7
    %v1206 = vsub.s32 0, %v1205
    %v1207 = vrot.slane %v1127, %v1206
    %v1208 = vlaneseq
    %v1209 = vshrl.u32 %v1208, 7
    %v1210 = vsub.s32 2, %v1209
    %v1211 = vrot.slane %v1127, %v1210
    %v1212 = vlaneseq
    %v1213 = vshrl.u32 %v1212, 7
    %v1214 = vsub.s32 4, %v1213
    %v1215 = vrot.slane %v1127, %v1214
    %v1216 = vlaneseq
    %v1217 = vshrl.u32 %v1216, 7
    %v1218 = vsub.s32 6, %v1217
    %v1219 = vrot.slane %v1127, %v1218
    %v1220 = vlaneseq
    %v1221 = vshrl.u32 %v1220, 7
    %v1222 = vsub.s32 0, %v1221
    %v1223 = vrot.slane %v1128, %v1222
    %v1224 = vlaneseq
    %v1225 = vshrl.u32 %v1224, 7
    %v1226 = vsub.s32 2, %v1225
    %v1227 = vrot.slane %v1128, %v1226
    %v1228 = vlaneseq
    %v1229 = vshrl.u32 %v1228, 7
    %v1230 = vsub.s32 4, %v1229
    %v1231 = vrot.slane %v1128, %v1230
    %v1232 = vlaneseq
    %v1233 = vshrl.u32 %v1232, 7
    %v1234 = vsub.s32 6, %v1233
    %v1235 = vrot.slane %v1128, %v1234
    %v1236 = vlaneseq
    %v1237 = vshrl.u32 %v1236, 7
    %v1238 = vsub.s32 0, %v1237
    %v1239 = vrot.slane %v1129, %v1238
    %v1240 = vlaneseq
    %v1241 = vshrl.u32 %v1240, 7
    %v1242 = vsub.s32 2, %v1241
    %v1243 = vrot.slane %v1129, %v1242
    %v1244 = vlaneseq
    %v1245 = vshrl.u32 %v1244, 7
    %v1246 = vsub.s32 4, %v1245
    %v1247 = vrot.slane %v1129, %v1246
    %v1248 = vlaneseq
    %v1249 = vshrl.u32 %v1248, 7
    %v1250 = vsub.s32 6, %v1249
    %v1251 = vrot.slane %v1129, %v1250
    %v1252 = vlaneseq
    %v1253 = vshrl.u32 %v1252, 7
    %v1254 = vsub.s32 0, %v1253
    %v1255 = vrot.slane %v1130, %v1254
    %v1256 = vlaneseq
    %v1257 = vshrl.u32 %v1256, 7
    %v1258 = vsub.s32 2, %v1257
    %v1259 = vrot.slane %v1130, %v1258
    %v1260 = vlaneseq
    %v1261 = vshrl.u32 %v1260, 7
    %v1262 = vsub.s32 4, %v1261
    %v1263 = vrot.slane %v1130, %v1262
    %v1264 = vlaneseq
    %v1265 = vshrl.u32 %v1264, 7
    %v1266 = vsub.s32 6, %v1265
    %v1267 = vrot.slane %v1130, %v1266
    %v1268 = vlaneseq
    %v1269 = vshrl.u32 %v1268, 7
    %v1270 = vsub.s32 0, %v1269
    %v1271 = vrot.slane %v1131, %v1270
    %v1272 = vlaneseq
    %v1273 = vshrl.u32 %v1272, 7
    %v1274 = vsub.s32 2, %v1273
    %v1275 = vrot.slane %v1131, %v1274
    %v1276 = vlaneseq
    %v1277 = vshrl.u32 %v1276, 7
    %v1278 = vsub.s32 4, %v1277
    %v1279 = vrot.slane %v1131, %v1278
    %v1280 = vlaneseq
    %v1281 = vshrl.u32 %v1280, 7
    %v1282 = vsub.s32 6, %v1281
    %v1283 = vrot.slane %v1131, %v1282
    %v1284 = vlaneseq
    %v1285 = vshrl.u32 %v1284, 7
    %v1286 = vsub.s32 0, %v1285
    %v1287 = vrot.slane %v1132, %v1286
    %v1288 = vlaneseq
    %v1289 = vshrl.u32 %v1288, 7
    %v1290 = vsub.s32 2, %v1289
    %v1291 = vrot.slane %v1132, %v1290
    %v1292 = vlaneseq
    %v1293 = vshrl.u32 %v1292, 7
    %v1294 = vsub.s32 4, %v1293
    %v1295 = vrot.slane %v1132, %v1294
    %v1296 = vlaneseq
    %v1297 = vshrl.u32 %v1296, 7
    %v1298 = vsub.s32 6, %v1297
    %v1299 = vrot.slane %v1132, %v1298
    %v1300 = vlaneseq
    %v1301 = vshrl.u32 %v1300, 7
    %v1302 = vsub.s32 0, %v1301
    %v1303 = vrot.slane %v1133, %v1302
    %v1304 = vlaneseq
    %v1305 = vshrl.u32 %v1304, 7
    %v1306 = vsub.s32 2, %v1305
    %v1307 = vrot.slane %v1133, %v1306
    %v1308 = vlaneseq
    %v1309 = vshrl.u32 %v1308, 7
    %v1310 = vsub.s32 4, %v1309
    %v1311 = vrot.slane %v1133, %v1310
    %v1312 = vlaneseq
    %v1313 = vshrl.u32 %v1312, 7
    %v1314 = vsub.s32 6, %v1313
    %v1315 = vrot.slane %v1133, %v1314
    %v1316 = vlaneseq
    %v1317 = vshrl.u32 %v1316, 7
    %v1318 = vsub.s32 0, %v1317
    %v1319 = vrot.slane %v1134, %v1318
    %v1320 = vlaneseq
    %v1321 = vshrl.u32 %v1320, 7
    %v1322 = vsub.s32 2, %v1321
    %v1323 = vrot.slane %v1134, %v1322
    %v1324 = vlaneseq
    %v1325 = vshrl.u32 %v1324, 7
    %v1326 = vsub.s32 4, %v1325
    %v1327 = vrot.slane %v1134, %v1326
    %v1328 = vlaneseq
    %v1329 = vshrl.u32 %v1328, 7
    %v1330 = vsub.s32 6, %v1329
    %v1331 = vrot.slane %v1134, %v1330
    %v1332 = vlaneseq
    %v1333 = vshrl.u32 %v1332, 7
    %v1334 = vsub.s32 0, %v1333
    %v1335 = vrot.slane %v1135, %v1334
    %v1336 = vlaneseq
    %v1337 = vshrl.u32 %v1336, 7
    %v1338 = vsub.s32 2, %v1337
    %v1339 = vrot.slane %v1135, %v1338
    %v1340 = vlaneseq
    %v1341 = vshrl.u32 %v1340, 7
    %v1342 = vsub.s32 4, %v1341
    %v1343 = vrot.slane %v1135, %v1342
    %v1344 = vlaneseq
    %v1345 = vshrl.u32 %v1344, 7
    %v1346 = vsub.s32 6, %v1345
    %v1347 = vrot.slane %v1135, %v1346
    %v1348 = vlaneseq
    %v1349 = vshrl.u32 %v1348, 7
    %v1350 = vsub.s32 0, %v1349
    %v1351 = vrot.slane %v1136, %v1350
    %v1352 = vlaneseq
    %v1353 = vshrl.u32 %v1352, 7
    %v1354 = vsub.s32 2, %v1353
    %v1355 = vrot.slane %v1136, %v1354
    %v1356 = vlaneseq
    %v1357 = vshrl.u32 %v1356, 7
    %v1358 = vsub.s32 4, %v1357
    %v1359 = vrot.slane %v1136, %v1358
    %v1360 = vlaneseq
    %v1361 = vshrl.u32 %v1360, 7
    %v1362 = vsub.s32 6, %v1361
    %v1363 = vrot.slane %v1136, %v1362
    %v1364 = vlaneseq
    %v1365 = vshrl.u32 %v1364, 7
    %v1366 = vsub.s32 0, %v1365
    %v1367 = vrot.slane %v1137, %v1366
    %v1368 = vlaneseq
    %v1369 = vshrl.u32 %v1368, 7
    %v1370 = vsub.s32 2, %v1369
    %v1371 = vrot.slane %v1137, %v1370
    %v1372 = vlaneseq
    %v1373 = vshrl.u32 %v1372, 7
    %v1374 = vsub.s32 4, %v1373
    %v1375 = vrot.slane %v1137, %v1374
    %v1376 = vlaneseq
    %v1377 = vshrl.u32 %v1376, 7
    %v1378 = vsub.s32 6, %v1377
    %v1379 = vrot.slane %v1137, %v1378
    %v1380 = vlaneseq
    %v1381 = vshrl.u32 %v1380, 7
    %v1382 = vsub.s32 0, %v1381
    %v1383 = vrot.slane %v1138, %v1382
    %v1384 = vlaneseq
    %v1385 = vshrl.u32 %v1384, 7
    %v1386 = vsub.s32 2, %v1385
    %v1387 = vrot.slane %v1138, %v1386
    %v1388 = vlaneseq
    %v1389 = vshrl.u32 %v1388, 7
    %v1390 = vsub.s32 4, %v1389
    %v1391 = vrot.slane %v1138, %v1390
    %v1392 = vlaneseq
    %v1393 = vshrl.u32 %v1392, 7
    %v1394 = vsub.s32 6, %v1393
    %v1395 = vrot.slane %v1138, %v1394
    %v1396 = vlaneseq
    %v1397 = vshrl.u32 %v1396, 7
    %v1398 = vsub.s32 0, %v1397
    %v1399 = vrot.slane %v1139, %v1398
    %v1400 = vlaneseq
    %v1401 = vshrl.u32 %v1400, 7
    %v1402 = vsub.s32 2, %v1401
    %v1403 = vrot.slane %v1139, %v1402
    %v1404 = vlaneseq
    %v1405 = vshrl.u32 %v1404, 7
    %v1406 = vsub.s32 4, %v1405
    %v1407 = vrot.slane %v1139, %v1406
    %v1408 = vlaneseq
    %v1409 = vshrl.u32 %v1408, 7
    %v1410 = vsub.s32 6, %v1409
    %v1411 = vrot.slane %v1139, %v1410
    %vm1412 = vcmask 1041409
    %v1413 = vsel %vm1412, %v1175, %v1159
    %vm1414 = vcmask 1042434
    %v1415 = vsel %vm1414, %v1191, %v1413
    %vm1416 = vcmask 1043459
    %v1417 = vsel %vm1416, %v1207, %v1415
    %vm1418 = vcmask 1044484
    %v1419 = vsel %vm1418, %v1223, %v1417
    %vm1420 = vcmask 1045509
    %v1421 = vsel %vm1420, %v1239, %v1419
    %vm1422 = vcmask 1046534
    %v1423 = vsel %vm1422, %v1255, %v1421
    %vm1424 = vcmask 1047559
    %v1425 = vsel %vm1424, %v1271, %v1423
    %v1426 = vsel %vm1412, %v1179, %v1163
    %v1427 = vsel %vm1414, %v1195, %v1426
    %v1428 = vsel %vm1416, %v1211, %v1427
    %v1429 = vsel %vm1418, %v1227, %v1428
    %v1430 = vsel %vm1420, %v1243, %v1429
    %v1431 = vsel %vm1422, %v1259, %v1430
    %v1432 = vsel %vm1424, %v1275, %v1431
    %v1433 = vsel %vm1412, %v1183, %v1167
    %v1434 = vsel %vm1414, %v1199, %v1433
    %v1435 = vsel %vm1416, %v1215, %v1434
    %v1436 = vsel %vm1418, %v1231, %v1435
    %v1437 = vsel %vm1420, %v1247, %v1436
    %v1438 = vsel %vm1422, %v1263, %v1437
    %v1439 = vsel %vm1424, %v1279, %v1438
    %v1440 = vsel %vm1412, %v1187, %v1171
    %v1441 = vsel %vm1414, %v1203, %v1440
    %v1442 = vsel %vm1416, %v1219, %v1441
    %v1443 = vsel %vm1418, %v1235, %v1442
    %v1444 = vsel %vm1420, %v1251, %v1443
    %v1445 = vsel %vm1422, %v1267, %v1444
    %v1446 = vsel %vm1424, %v1283, %v1445
    %v1447 = vsel %vm1412, %v1303, %v1287
    %v1448 = vsel %vm1414, %v1319, %v1447
    %v1449 = vsel %vm1416, %v1335, %v1448
    %v1450 = vsel %vm1418, %v1351, %v1449
    %v1451 = vsel %vm1420, %v1367, %v1450
    %v1452 = vsel %vm1422, %v1383, %v1451
    %v1453 = vsel %vm1424, %v1399, %v1452
    %v1454 = vsel %vm1412, %v1307, %v1291
    %v1455 = vsel %vm1414, %v1323, %v1454
    %v1456 = vsel %vm1416, %v1339, %v1455
    %v1457 = vsel %vm1418, %v1355, %v1456
    %v1458 = vsel %vm1420, %v1371, %v1457
    %v1459 = vsel %vm1422, %v1387, %v1458
    %v1460 = vsel %vm1424, %v1403, %v1459
    %v1461 = vsel %vm1412, %v1311, %v1295
    %v1462 = vsel %vm1414, %v1327, %v1461
    %v1463 = vsel %vm1416, %v1343, %v1462
    %v1464 = vsel %vm1418, %v1359, %v1463
    %v1465 = vsel %vm1420, %v1375, %v1464
    %v1466 = vsel %vm1422, %v1391, %v1465
    %v1467 = vsel %vm1424, %v1407, %v1466
    %v1468 = vsel %vm1412, %v1315, %v1299
    %v1469 = vsel %vm1414, %v1331, %v1468
    %v1470 = vsel %vm1416, %v1347, %v1469
    %v1471 = vsel %vm1418, %v1363, %v1470
    %v1472 = vsel %vm1420, %v1379, %v1471
    %v1473 = vsel %vm1422, %v1395, %v1472
    %v1474 = vsel %vm1424, %v1411, %v1473
    %1483 = vrot.lane.b32.xlu0 %v1425, 96
    %v1484 = vpop.permute.xlu0 %1483
    %1485 = vrot.lane.b32.xlu0 %v1453, 96
    %v1486 = vpop.permute.xlu0 %1485
    %1487 = vrot.lane.b32.xlu0 %v1432, 96
    %v1488 = vpop.permute.xlu0 %1487
    %1489 = vrot.lane.b32.xlu0 %v1460, 96
    %v1490 = vpop.permute.xlu0 %1489
    %1491 = vrot.lane.b32.xlu0 %v1439, 96
    %v1492 = vpop.permute.xlu0 %1491
    %1493 = vrot.lane.b32.xlu0 %v1467, 96
    %v1494 = vpop.permute.xlu0 %1493
    %1495 = vrot.lane.b32.xlu0 %v1446, 96
    %v1496 = vpop.permute.xlu0 %1495
    %1497 = vrot.lane.b32.xlu0 %v1474, 96
    %v1498 = vpop.permute.xlu0 %1497
    %v1499 = vlaneseq
    %v1500 = vand.u32 %v1499, 127
    %vm1501 = vcmp.lt.s32.totalorder %v1500, 96
    %v1502 = vsel %vm1501, %v1492, %v1496
    %v1503 = vsel %vm1501, %v1494, %v1498
    %v1504 = vsel %vm1501, %v1488, %v1492
    %v1505 = vsel %vm1501, %v1490, %v1494
    %v1506 = vsel %vm1501, %v1484, %v1488
    %v1507 = vsel %vm1501, %v1486, %v1490
    %v1508 = vsel %vm1501, %v1496, %v1484
    %v1509 = vsel %vm1501, %v1498, %v1486
    %v1518 = vcombine.low %v1506, %v1504
    %v1519 = vcombine.high %v1506, %v1504
    %v1520 = vcombine.low %v1502, %v1508
    %v1521 = vcombine.high %v1502, %v1508
    %v1523 = vunpack.c.l.s4 1983009808
    %v1524 = vunpack.c.0.s8 %v1523
    %v1525 = vlaneseq
    %v1526 = vshrl.u32 %v1525, 7
    %v1527 = vsub.s32 %v1524, %v1526
    %v1528 = vrot.slane %v1518, %v1527
    %v1530 = vunpack.c.l.s4 1983009808
    %v1531 = vunpack.c.0.s8 %v1530
    %v1532 = vlaneseq
    %v1533 = vshrl.u32 %v1532, 7
    %v1534 = vsub.s32 %v1531, %v1533
    %v1535 = vrot.slane %v1519, %v1534
    %v1537 = vunpack.c.l.s4 1983009808
    %v1538 = vunpack.c.0.s8 %v1537
    %v1539 = vlaneseq
    %v1540 = vshrl.u32 %v1539, 7
    %v1541 = vsub.s32 %v1538, %v1540
    %v1542 = vrot.slane %v1520, %v1541
    %v1544 = vunpack.c.l.s4 1983009808
    %v1545 = vunpack.c.0.s8 %v1544
    %v1546 = vlaneseq
    %v1547 = vshrl.u32 %v1546, 7
    %v1548 = vsub.s32 %v1545, %v1547
    %v1549 = vrot.slane %v1521, %v1548
    %v1550 = vcombine.low %v1528, %v1542
    %v1551 = vcombine.high %v1528, %v1542
    %v1552 = vcombine.low %v1535, %v1549
    %v1553 = vcombine.high %v1535, %v1549
    %v1554 = vcombine.low %v1507, %v1505
    %v1555 = vcombine.high %v1507, %v1505
    %v1556 = vcombine.low %v1503, %v1509
    %v1557 = vcombine.high %v1503, %v1509
    %v1559 = vunpack.c.l.s4 1983009808
    %v1560 = vunpack.c.0.s8 %v1559
    %v1561 = vlaneseq
    %v1562 = vshrl.u32 %v1561, 7
    %v1563 = vsub.s32 %v1560, %v1562
    %v1564 = vrot.slane %v1554, %v1563
    %v1566 = vunpack.c.l.s4 1983009808
    %v1567 = vunpack.c.0.s8 %v1566
    %v1568 = vlaneseq
    %v1569 = vshrl.u32 %v1568, 7
    %v1570 = vsub.s32 %v1567, %v1569
    %v1571 = vrot.slane %v1555, %v1570
    %v1573 = vunpack.c.l.s4 1983009808
    %v1574 = vunpack.c.0.s8 %v1573
    %v1575 = vlaneseq
    %v1576 = vshrl.u32 %v1575, 7
    %v1577 = vsub.s32 %v1574, %v1576
    %v1578 = vrot.slane %v1556, %v1577
    %v1580 = vunpack.c.l.s4 1983009808
    %v1581 = vunpack.c.0.s8 %v1580
    %v1582 = vlaneseq
    %v1583 = vshrl.u32 %v1582, 7
    %v1584 = vsub.s32 %v1581, %v1583
    %v1585 = vrot.slane %v1557, %v1584
    %v1586 = vcombine.low %v1564, %v1578
    %v1587 = vcombine.high %v1564, %v1578
    %v1588 = vcombine.low %v1571, %v1585
    %v1589 = vcombine.high %v1571, %v1585
    %v1590 = vrot.slane %v1550, 1
    %v1591 = vrot.slane %v1551, 1
    %v1592 = vrot.slane %v1552, 1
    %v1593 = vrot.slane %v1553, 1
    %v1594 = vrot.slane %v1586, 1
    %v1595 = vrot.slane %v1587, 1
    %v1596 = vrot.slane %v1588, 1
    %v1597 = vrot.slane %v1589, 1
    %v1614 = vmax.f32 %v1124, %v1550
    %v1615 = vmax.f32 %v1125, %v1590
    %v1616 = vmax.f32 %v1126, %v1551
    %v1617 = vmax.f32 %v1127, %v1591
    %v1618 = vmax.f32 %v1128, %v1552
    %v1619 = vmax.f32 %v1129, %v1592
    %v1620 = vmax.f32 %v1130, %v1553
    %v1621 = vmax.f32 %v1131, %v1593
    %v1622 = vmax.f32 %v1132, %v1586
    %v1623 = vmax.f32 %v1133, %v1594
    %v1624 = vmax.f32 %v1134, %v1587
    %v1625 = vmax.f32 %v1135, %v1595
    %v1626 = vmax.f32 %v1136, %v1588
    %v1627 = vmax.f32 %v1137, %v1596
    %v1628 = vmax.f32 %v1138, %v1589
    %v1629 = vmax.f32 %v1139, %v1597
    %v1646 = vlaneseq
    %v1647 = vshrl.u32 %v1646, 7
    %v1648 = vsub.s32 0, %v1647
    %v1649 = vrot.slane %v1614, %v1648
    %v1650 = vlaneseq
    %v1651 = vshrl.u32 %v1650, 7
    %v1652 = vsub.s32 2, %v1651
    %v1653 = vrot.slane %v1614, %v1652
    %v1654 = vlaneseq
    %v1655 = vshrl.u32 %v1654, 7
    %v1656 = vsub.s32 4, %v1655
    %v1657 = vrot.slane %v1614, %v1656
    %v1658 = vlaneseq
    %v1659 = vshrl.u32 %v1658, 7
    %v1660 = vsub.s32 6, %v1659
    %v1661 = vrot.slane %v1614, %v1660
    %v1662 = vlaneseq
    %v1663 = vshrl.u32 %v1662, 7
    %v1664 = vsub.s32 0, %v1663
    %v1665 = vrot.slane %v1615, %v1664
    %v1666 = vlaneseq
    %v1667 = vshrl.u32 %v1666, 7
    %v1668 = vsub.s32 2, %v1667
    %v1669 = vrot.slane %v1615, %v1668
    %v1670 = vlaneseq
    %v1671 = vshrl.u32 %v1670, 7
    %v1672 = vsub.s32 4, %v1671
    %v1673 = vrot.slane %v1615, %v1672
    %v1674 = vlaneseq
    %v1675 = vshrl.u32 %v1674, 7
    %v1676 = vsub.s32 6, %v1675
    %v1677 = vrot.slane %v1615, %v1676
    %v1678 = vlaneseq
    %v1679 = vshrl.u32 %v1678, 7
    %v1680 = vsub.s32 0, %v1679
    %v1681 = vrot.slane %v1616, %v1680
    %v1682 = vlaneseq
    %v1683 = vshrl.u32 %v1682, 7
    %v1684 = vsub.s32 2, %v1683
    %v1685 = vrot.slane %v1616, %v1684
    %v1686 = vlaneseq
    %v1687 = vshrl.u32 %v1686, 7
    %v1688 = vsub.s32 4, %v1687
    %v1689 = vrot.slane %v1616, %v1688
    %v1690 = vlaneseq
    %v1691 = vshrl.u32 %v1690, 7
    %v1692 = vsub.s32 6, %v1691
    %v1693 = vrot.slane %v1616, %v1692
    %v1694 = vlaneseq
    %v1695 = vshrl.u32 %v1694, 7
    %v1696 = vsub.s32 0, %v1695
    %v1697 = vrot.slane %v1617, %v1696
    %v1698 = vlaneseq
    %v1699 = vshrl.u32 %v1698, 7
    %v1700 = vsub.s32 2, %v1699
    %v1701 = vrot.slane %v1617, %v1700
    %v1702 = vlaneseq
    %v1703 = vshrl.u32 %v1702, 7
    %v1704 = vsub.s32 4, %v1703
    %v1705 = vrot.slane %v1617, %v1704
    %v1706 = vlaneseq
    %v1707 = vshrl.u32 %v1706, 7
    %v1708 = vsub.s32 6, %v1707
    %v1709 = vrot.slane %v1617, %v1708
    %v1710 = vlaneseq
    %v1711 = vshrl.u32 %v1710, 7
    %v1712 = vsub.s32 0, %v1711
    %v1713 = vrot.slane %v1618, %v1712
    %v1714 = vlaneseq
    %v1715 = vshrl.u32 %v1714, 7
    %v1716 = vsub.s32 2, %v1715
    %v1717 = vrot.slane %v1618, %v1716
    %v1718 = vlaneseq
    %v1719 = vshrl.u32 %v1718, 7
    %v1720 = vsub.s32 4, %v1719
    %v1721 = vrot.slane %v1618, %v1720
    %v1722 = vlaneseq
    %v1723 = vshrl.u32 %v1722, 7
    %v1724 = vsub.s32 6, %v1723
    %v1725 = vrot.slane %v1618, %v1724
    %v1726 = vlaneseq
    %v1727 = vshrl.u32 %v1726, 7
    %v1728 = vsub.s32 0, %v1727
    %v1729 = vrot.slane %v1619, %v1728
    %v1730 = vlaneseq
    %v1731 = vshrl.u32 %v1730, 7
    %v1732 = vsub.s32 2, %v1731
    %v1733 = vrot.slane %v1619, %v1732
    %v1734 = vlaneseq
    %v1735 = vshrl.u32 %v1734, 7
    %v1736 = vsub.s32 4, %v1735
    %v1737 = vrot.slane %v1619, %v1736
    %v1738 = vlaneseq
    %v1739 = vshrl.u32 %v1738, 7
    %v1740 = vsub.s32 6, %v1739
    %v1741 = vrot.slane %v1619, %v1740
    %v1742 = vlaneseq
    %v1743 = vshrl.u32 %v1742, 7
    %v1744 = vsub.s32 0, %v1743
    %v1745 = vrot.slane %v1620, %v1744
    %v1746 = vlaneseq
    %v1747 = vshrl.u32 %v1746, 7
    %v1748 = vsub.s32 2, %v1747
    %v1749 = vrot.slane %v1620, %v1748
    %v1750 = vlaneseq
    %v1751 = vshrl.u32 %v1750, 7
    %v1752 = vsub.s32 4, %v1751
    %v1753 = vrot.slane %v1620, %v1752
    %v1754 = vlaneseq
    %v1755 = vshrl.u32 %v1754, 7
    %v1756 = vsub.s32 6, %v1755
    %v1757 = vrot.slane %v1620, %v1756
    %v1758 = vlaneseq
    %v1759 = vshrl.u32 %v1758, 7
    %v1760 = vsub.s32 0, %v1759
    %v1761 = vrot.slane %v1621, %v1760
    %v1762 = vlaneseq
    %v1763 = vshrl.u32 %v1762, 7
    %v1764 = vsub.s32 2, %v1763
    %v1765 = vrot.slane %v1621, %v1764
    %v1766 = vlaneseq
    %v1767 = vshrl.u32 %v1766, 7
    %v1768 = vsub.s32 4, %v1767
    %v1769 = vrot.slane %v1621, %v1768
    %v1770 = vlaneseq
    %v1771 = vshrl.u32 %v1770, 7
    %v1772 = vsub.s32 6, %v1771
    %v1773 = vrot.slane %v1621, %v1772
    %v1774 = vlaneseq
    %v1775 = vshrl.u32 %v1774, 7
    %v1776 = vsub.s32 0, %v1775
    %v1777 = vrot.slane %v1622, %v1776
    %v1778 = vlaneseq
    %v1779 = vshrl.u32 %v1778, 7
    %v1780 = vsub.s32 2, %v1779
    %v1781 = vrot.slane %v1622, %v1780
    %v1782 = vlaneseq
    %v1783 = vshrl.u32 %v1782, 7
    %v1784 = vsub.s32 4, %v1783
    %v1785 = vrot.slane %v1622, %v1784
    %v1786 = vlaneseq
    %v1787 = vshrl.u32 %v1786, 7
    %v1788 = vsub.s32 6, %v1787
    %v1789 = vrot.slane %v1622, %v1788
    %v1790 = vlaneseq
    %v1791 = vshrl.u32 %v1790, 7
    %v1792 = vsub.s32 0, %v1791
    %v1793 = vrot.slane %v1623, %v1792
    %v1794 = vlaneseq
    %v1795 = vshrl.u32 %v1794, 7
    %v1796 = vsub.s32 2, %v1795
    %v1797 = vrot.slane %v1623, %v1796
    %v1798 = vlaneseq
    %v1799 = vshrl.u32 %v1798, 7
    %v1800 = vsub.s32 4, %v1799
    %v1801 = vrot.slane %v1623, %v1800
    %v1802 = vlaneseq
    %v1803 = vshrl.u32 %v1802, 7
    %v1804 = vsub.s32 6, %v1803
    %v1805 = vrot.slane %v1623, %v1804
    %v1806 = vlaneseq
    %v1807 = vshrl.u32 %v1806, 7
    %v1808 = vsub.s32 0, %v1807
    %v1809 = vrot.slane %v1624, %v1808
    %v1810 = vlaneseq
    %v1811 = vshrl.u32 %v1810, 7
    %v1812 = vsub.s32 2, %v1811
    %v1813 = vrot.slane %v1624, %v1812
    %v1814 = vlaneseq
    %v1815 = vshrl.u32 %v1814, 7
    %v1816 = vsub.s32 4, %v1815
    %v1817 = vrot.slane %v1624, %v1816
    %v1818 = vlaneseq
    %v1819 = vshrl.u32 %v1818, 7
    %v1820 = vsub.s32 6, %v1819
    %v1821 = vrot.slane %v1624, %v1820
    %v1822 = vlaneseq
    %v1823 = vshrl.u32 %v1822, 7
    %v1824 = vsub.s32 0, %v1823
    %v1825 = vrot.slane %v1625, %v1824
    %v1826 = vlaneseq
    %v1827 = vshrl.u32 %v1826, 7
    %v1828 = vsub.s32 2, %v1827
    %v1829 = vrot.slane %v1625, %v1828
    %v1830 = vlaneseq
    %v1831 = vshrl.u32 %v1830, 7
    %v1832 = vsub.s32 4, %v1831
    %v1833 = vrot.slane %v1625, %v1832
    %v1834 = vlaneseq
    %v1835 = vshrl.u32 %v1834, 7
    %v1836 = vsub.s32 6, %v1835
    %v1837 = vrot.slane %v1625, %v1836
    %v1838 = vlaneseq
    %v1839 = vshrl.u32 %v1838, 7
    %v1840 = vsub.s32 0, %v1839
    %v1841 = vrot.slane %v1626, %v1840
    %v1842 = vlaneseq
    %v1843 = vshrl.u32 %v1842, 7
    %v1844 = vsub.s32 2, %v1843
    %v1845 = vrot.slane %v1626, %v1844
    %v1846 = vlaneseq
    %v1847 = vshrl.u32 %v1846, 7
    %v1848 = vsub.s32 4, %v1847
    %v1849 = vrot.slane %v1626, %v1848
    %v1850 = vlaneseq
    %v1851 = vshrl.u32 %v1850, 7
    %v1852 = vsub.s32 6, %v1851
    %v1853 = vrot.slane %v1626, %v1852
    %v1854 = vlaneseq
    %v1855 = vshrl.u32 %v1854, 7
    %v1856 = vsub.s32 0, %v1855
    %v1857 = vrot.slane %v1627, %v1856
    %v1858 = vlaneseq
    %v1859 = vshrl.u32 %v1858, 7
    %v1860 = vsub.s32 2, %v1859
    %v1861 = vrot.slane %v1627, %v1860
    %v1862 = vlaneseq
    %v1863 = vshrl.u32 %v1862, 7
    %v1864 = vsub.s32 4, %v1863
    %v1865 = vrot.slane %v1627, %v1864
    %v1866 = vlaneseq
    %v1867 = vshrl.u32 %v1866, 7
    %v1868 = vsub.s32 6, %v1867
    %v1869 = vrot.slane %v1627, %v1868
    %v1870 = vlaneseq
    %v1871 = vshrl.u32 %v1870, 7
    %v1872 = vsub.s32 0, %v1871
    %v1873 = vrot.slane %v1628, %v1872
    %v1874 = vlaneseq
    %v1875 = vshrl.u32 %v1874, 7
    %v1876 = vsub.s32 2, %v1875
    %v1877 = vrot.slane %v1628, %v1876
    %v1878 = vlaneseq
    %v1879 = vshrl.u32 %v1878, 7
    %v1880 = vsub.s32 4, %v1879
    %v1881 = vrot.slane %v1628, %v1880
    %v1882 = vlaneseq
    %v1883 = vshrl.u32 %v1882, 7
    %v1884 = vsub.s32 6, %v1883
    %v1885 = vrot.slane %v1628, %v1884
    %v1886 = vlaneseq
    %v1887 = vshrl.u32 %v1886, 7
    %v1888 = vsub.s32 0, %v1887
    %v1889 = vrot.slane %v1629, %v1888
    %v1890 = vlaneseq
    %v1891 = vshrl.u32 %v1890, 7
    %v1892 = vsub.s32 2, %v1891
    %v1893 = vrot.slane %v1629, %v1892
    %v1894 = vlaneseq
    %v1895 = vshrl.u32 %v1894, 7
    %v1896 = vsub.s32 4, %v1895
    %v1897 = vrot.slane %v1629, %v1896
    %v1898 = vlaneseq
    %v1899 = vshrl.u32 %v1898, 7
    %v1900 = vsub.s32 6, %v1899
    %v1901 = vrot.slane %v1629, %v1900
    %v1902 = vsel %vm1414, %v1665, %v1649
    %v1903 = vsel %vm1416, %v1681, %v1902
    %v1904 = vsel %vm1418, %v1697, %v1903
    %v1905 = vsel %vm1420, %v1713, %v1904
    %v1906 = vsel %vm1422, %v1729, %v1905
    %v1907 = vsel %vm1424, %v1745, %v1906
    %v1908 = vsel %vm1414, %v1669, %v1653
    %v1909 = vsel %vm1416, %v1685, %v1908
    %v1910 = vsel %vm1418, %v1701, %v1909
    %v1911 = vsel %vm1420, %v1717, %v1910
    %v1912 = vsel %vm1422, %v1733, %v1911
    %v1913 = vsel %vm1424, %v1749, %v1912
    %v1914 = vsel %vm1414, %v1673, %v1657
    %v1915 = vsel %vm1416, %v1689, %v1914
    %v1916 = vsel %vm1418, %v1705, %v1915
    %v1917 = vsel %vm1420, %v1721, %v1916
    %v1918 = vsel %vm1422, %v1737, %v1917
    %v1919 = vsel %vm1424, %v1753, %v1918
    %v1920 = vsel %vm1414, %v1677, %v1661
    %v1921 = vsel %vm1416, %v1693, %v1920
    %v1922 = vsel %vm1418, %v1709, %v1921
    %v1923 = vsel %vm1420, %v1725, %v1922
    %v1924 = vsel %vm1422, %v1741, %v1923
    %v1925 = vsel %vm1424, %v1757, %v1924
    %v1926 = vsel %vm1414, %v1793, %v1777
    %v1927 = vsel %vm1416, %v1809, %v1926
    %v1928 = vsel %vm1418, %v1825, %v1927
    %v1929 = vsel %vm1420, %v1841, %v1928
    %v1930 = vsel %vm1422, %v1857, %v1929
    %v1931 = vsel %vm1424, %v1873, %v1930
    %v1932 = vsel %vm1414, %v1797, %v1781
    %v1933 = vsel %vm1416, %v1813, %v1932
    %v1934 = vsel %vm1418, %v1829, %v1933
    %v1935 = vsel %vm1420, %v1845, %v1934
    %v1936 = vsel %vm1422, %v1861, %v1935
    %v1937 = vsel %vm1424, %v1877, %v1936
    %v1938 = vsel %vm1414, %v1801, %v1785
    %v1939 = vsel %vm1416, %v1817, %v1938
    %v1940 = vsel %vm1418, %v1833, %v1939
    %v1941 = vsel %vm1420, %v1849, %v1940
    %v1942 = vsel %vm1422, %v1865, %v1941
    %v1943 = vsel %vm1424, %v1881, %v1942
    %v1944 = vsel %vm1414, %v1805, %v1789
    %v1945 = vsel %vm1416, %v1821, %v1944
    %v1946 = vsel %vm1418, %v1837, %v1945
    %v1947 = vsel %vm1420, %v1853, %v1946
    %v1948 = vsel %vm1422, %v1869, %v1947
    %v1949 = vsel %vm1424, %v1885, %v1948
    %1966 = vst [vmem:[#allocation3] sm:$0xfe] %v1907
    %1967 = vst [vmem:[#allocation3 + $0x8] sm:$0xfe] %v1913
    %1968 = vst [vmem:[#allocation3 + $0x10] sm:$0xfe] %v1919
    %1969 = vst [vmem:[#allocation3 + $0x18] sm:$0xfe] %v1925
    %1970 = vst [vmem:[#allocation3 + $0x20] sm:$0x1] %v1761
    %1971 = vst [vmem:[#allocation3 + $0x28] sm:$0x1] %v1765
    %1972 = vst [vmem:[#allocation3 + $0x30] sm:$0x1] %v1769
    %1973 = vst [vmem:[#allocation3 + $0x38] sm:$0x1] %v1773
    %1974 = vst [vmem:[#allocation3 + $0x40] sm:$0xfe] %v1931
    %1975 = vst [vmem:[#allocation3 + $0x48] sm:$0xfe] %v1937
    %1976 = vst [vmem:[#allocation3 + $0x50] sm:$0xfe] %v1943
    %1977 = vst [vmem:[#allocation3 + $0x58] sm:$0xfe] %v1949
    %1978 = vst [vmem:[#allocation3 + $0x60] sm:$0x1] %v1889
    %1979 = vst [vmem:[#allocation3 + $0x68] sm:$0x1] %v1893
    %1980 = vst [vmem:[#allocation3 + $0x70] sm:$0x1] %v1897
    %1981 = vst [vmem:[#allocation3 + $0x78] sm:$0x1] %v1901
    %v1982 = vld [vmem:[#allocation3] sm:$0xff]
    %v1983 = vld [vmem:[#allocation3 + $0x8] sm:$0xff]
    %v1984 = vld [vmem:[#allocation3 + $0x10] sm:$0xff]
    %v1985 = vld [vmem:[#allocation3 + $0x18] sm:$0xff]
    %v1986 = vld [vmem:[#allocation3 + $0x40] sm:$0xff]
    %v1987 = vld [vmem:[#allocation3 + $0x48] sm:$0xff]
    %v1988 = vld [vmem:[#allocation3 + $0x50] sm:$0xff]
    %v1989 = vld [vmem:[#allocation3 + $0x58] sm:$0xff]
    %v1990 = vpack.c.bf16 %v1986, %v1982
    %v1991 = vpack.c.bf16 %v1987, %v1983
    %v1992 = vpack.c.bf16 %v1988, %v1984
    %v1993 = vpack.c.bf16 %v1989, %v1985
    %v1994 = vld [vmem:[#allocation9] sm:$0xff]
    %v1995 = vld [vmem:[#allocation9 + $0x8] sm:$0xff]
    %v1996 = vld [vmem:[#allocation9 + $0x10] sm:$0xff]
    %v1997 = vld [vmem:[#allocation9 + $0x18] sm:$0xff]
    %v1998 = vld [vmem:[#allocation9 + $0x20] sm:$0xff]
    %v1999 = vld [vmem:[#allocation9 + $0x28] sm:$0xff]
    %v2000 = vld [vmem:[#allocation9 + $0x30] sm:$0xff]
    %v2001 = vld [vmem:[#allocation9 + $0x38] sm:$0xff]
    %v2002 = vld [vmem:[#allocation9 + $0x40] sm:$0xff]
    %v2003 = vld [vmem:[#allocation9 + $0x48] sm:$0xff]
    %v2004 = vld [vmem:[#allocation9 + $0x50] sm:$0xff]
    %v2005 = vld [vmem:[#allocation9 + $0x58] sm:$0xff]
    %v2006 = vld [vmem:[#allocation9 + $0x60] sm:$0xff]
    %v2007 = vld [vmem:[#allocation9 + $0x68] sm:$0xff]
    %v2008 = vld [vmem:[#allocation9 + $0x70] sm:$0xff]
    %v2009 = vld [vmem:[#allocation9 + $0x78] sm:$0xff]
    %v2010 = vld [vmem:[#allocation9 + $0x80] sm:$0xff]
    %v2011 = vld [vmem:[#allocation9 + $0x88] sm:$0xff]
    %v2012 = vld [vmem:[#allocation9 + $0x90] sm:$0xff]
    %v2013 = vld [vmem:[#allocation9 + $0x98] sm:$0xff]
    %v2014 = vld [vmem:[#allocation9 + $0xa0] sm:$0xff]
    %v2015 = vld [vmem:[#allocation9 + $0xa8] sm:$0xff]
    %v2016 = vld [vmem:[#allocation9 + $0xb0] sm:$0xff]
    %v2017 = vld [vmem:[#allocation9 + $0xb8] sm:$0xff]
    %v2018 = vld [vmem:[#allocation9 + $0xc0] sm:$0xff]
    %v2019 = vld [vmem:[#allocation9 + $0xc8] sm:$0xff]
    %v2020 = vld [vmem:[#allocation9 + $0xd0] sm:$0xff]
    %v2021 = vld [vmem:[#allocation9 + $0xd8] sm:$0xff]
    %v2022 = vld [vmem:[#allocation9 + $0xe0] sm:$0xff]
    %v2023 = vld [vmem:[#allocation9 + $0xe8] sm:$0xff]
    %v2024 = vld [vmem:[#allocation9 + $0xf0] sm:$0xff]
    %v2025 = vld [vmem:[#allocation9 + $0xf8] sm:$0xff]
    %v2026 = vld [vmem:[#allocation9 + $0x100] sm:$0xff]
    %v2027 = vld [vmem:[#allocation9 + $0x108] sm:$0xff]
    %v2028 = vld [vmem:[#allocation9 + $0x110] sm:$0xff]
    %v2029 = vld [vmem:[#allocation9 + $0x118] sm:$0xff]
    %v2030 = vld [vmem:[#allocation9 + $0x120] sm:$0xff]
    %v2031 = vld [vmem:[#allocation9 + $0x128] sm:$0xff]
    %v2032 = vld [vmem:[#allocation9 + $0x130] sm:$0xff]
    %v2033 = vld [vmem:[#allocation9 + $0x138] sm:$0xff]
    %v2034 = vld [vmem:[#allocation9 + $0x140] sm:$0xff]
    %v2035 = vld [vmem:[#allocation9 + $0x148] sm:$0xff]
    %v2036 = vld [vmem:[#allocation9 + $0x150] sm:$0xff]
    %v2037 = vld [vmem:[#allocation9 + $0x158] sm:$0xff]
    %v2038 = vld [vmem:[#allocation9 + $0x160] sm:$0xff]
    %v2039 = vld [vmem:[#allocation9 + $0x168] sm:$0xff]
    %v2040 = vld [vmem:[#allocation9 + $0x170] sm:$0xff]
    %v2041 = vld [vmem:[#allocation9 + $0x178] sm:$0xff]
    %v2042 = vld [vmem:[#allocation9 + $0x180] sm:$0xff]
    %v2043 = vld [vmem:[#allocation9 + $0x188] sm:$0xff]
    %v2044 = vld [vmem:[#allocation9 + $0x190] sm:$0xff]
    %v2045 = vld [vmem:[#allocation9 + $0x198] sm:$0xff]
    %v2046 = vld [vmem:[#allocation9 + $0x1a0] sm:$0xff]
    %v2047 = vld [vmem:[#allocation9 + $0x1a8] sm:$0xff]
    %v2048 = vld [vmem:[#allocation9 + $0x1b0] sm:$0xff]
    %v2049 = vld [vmem:[#allocation9 + $0x1b8] sm:$0xff]
    %v2050 = vld [vmem:[#allocation9 + $0x1c0] sm:$0xff]
    %v2051 = vld [vmem:[#allocation9 + $0x1c8] sm:$0xff]
    %v2052 = vld [vmem:[#allocation9 + $0x1d0] sm:$0xff]
    %v2053 = vld [vmem:[#allocation9 + $0x1d8] sm:$0xff]
    %v2054 = vld [vmem:[#allocation9 + $0x1e0] sm:$0xff]
    %v2055 = vld [vmem:[#allocation9 + $0x1e8] sm:$0xff]
    %v2056 = vld [vmem:[#allocation9 + $0x1f0] sm:$0xff]
    %v2057 = vld [vmem:[#allocation9 + $0x1f8] sm:$0xff]
    %v2058 = vld [vmem:[#allocation3] sm:$0xfe]
    %v2059 = vld [vmem:[#allocation3 + $0x8] sm:$0xfe]
    %v2060 = vld [vmem:[#allocation3 + $0x10] sm:$0xfe]
    %v2061 = vld [vmem:[#allocation3 + $0x18] sm:$0xfe]
    %v2062 = vld [vmem:[#allocation3 + $0x20] sm:$0x1]
    %v2063 = vld [vmem:[#allocation3 + $0x28] sm:$0x1]
    %v2064 = vld [vmem:[#allocation3 + $0x30] sm:$0x1]
    %v2065 = vld [vmem:[#allocation3 + $0x38] sm:$0x1]
    %v2066 = vld [vmem:[#allocation3 + $0x40] sm:$0xfe]
    %v2067 = vld [vmem:[#allocation3 + $0x48] sm:$0xfe]
    %v2068 = vld [vmem:[#allocation3 + $0x50] sm:$0xfe]
    %v2069 = vld [vmem:[#allocation3 + $0x58] sm:$0xfe]
    %v2070 = vld [vmem:[#allocation3 + $0x60] sm:$0x1]
    %v2071 = vld [vmem:[#allocation3 + $0x68] sm:$0x1]
    %v2072 = vld [vmem:[#allocation3 + $0x70] sm:$0x1]
    %v2073 = vld [vmem:[#allocation3 + $0x78] sm:$0x1]
    %vm2090 = vcmask 1046528
    %v2091 = vrot.slane %v2058, 1
    %v2092 = vrot.slane %v2062, 1
    %v2093 = vsel %vm2090, %v2091, %v2092
    %v2094 = vrot.slane %v2059, 1
    %v2095 = vrot.slane %v2063, 1
    %v2096 = vsel %vm2090, %v2094, %v2095
    %v2097 = vrot.slane %v2060, 1
    %v2098 = vrot.slane %v2064, 1
    %v2099 = vsel %vm2090, %v2097, %v2098
    %v2100 = vrot.slane %v2061, 1
    %v2101 = vrot.slane %v2065, 1
    %v2102 = vsel %vm2090, %v2100, %v2101
    %v2103 = vrot.slane %v2066, 1
    %v2104 = vrot.slane %v2070, 1
    %v2105 = vsel %vm2090, %v2103, %v2104
    %v2106 = vrot.slane %v2067, 1
    %v2107 = vrot.slane %v2071, 1
    %v2108 = vsel %vm2090, %v2106, %v2107
    %v2109 = vrot.slane %v2068, 1
    %v2110 = vrot.slane %v2072, 1
    %v2111 = vsel %vm2090, %v2109, %v2110
    %v2112 = vrot.slane %v2069, 1
    %v2113 = vrot.slane %v2073, 1
    %v2114 = vsel %vm2090, %v2112, %v2113
    %v2123 = vpack.c.bf16 %v2105, %v2093
    %v2124 = vpack.c.bf16 %v2108, %v2096
    %v2125 = vpack.c.bf16 %v2111, %v2099
    %v2126 = vpack.c.bf16 %v2114, %v2102
    %s2127 = scalar_lea.vmem [#allocation9], 512
    %v2128 = vld [vmem:[%s2127] sm:$0xff]
    %v2129 = vld [vmem:[%s2127 + $0x8] sm:$0xff]
    %v2130 = vld [vmem:[%s2127 + $0x10] sm:$0xff]
    %v2131 = vld [vmem:[%s2127 + $0x18] sm:$0xff]
    %v2132 = vld [vmem:[%s2127 + $0x20] sm:$0xff]
    %v2133 = vld [vmem:[%s2127 + $0x28] sm:$0xff]
    %v2134 = vld [vmem:[%s2127 + $0x30] sm:$0xff]
    %v2135 = vld [vmem:[%s2127 + $0x38] sm:$0xff]
    %v2136 = vld [vmem:[%s2127 + $0x40] sm:$0xff]
    %v2137 = vld [vmem:[%s2127 + $0x48] sm:$0xff]
    %v2138 = vld [vmem:[%s2127 + $0x50] sm:$0xff]
    %v2139 = vld [vmem:[%s2127 + $0x58] sm:$0xff]
    %v2140 = vld [vmem:[%s2127 + $0x60] sm:$0xff]
    %v2141 = vld [vmem:[%s2127 + $0x68] sm:$0xff]
    %v2142 = vld [vmem:[%s2127 + $0x70] sm:$0xff]
    %v2143 = vld [vmem:[%s2127 + $0x78] sm:$0xff]
    %v2144 = vld [vmem:[%s2127 + $0x80] sm:$0xff]
    %v2145 = vld [vmem:[%s2127 + $0x88] sm:$0xff]
    %v2146 = vld [vmem:[%s2127 + $0x90] sm:$0xff]
    %v2147 = vld [vmem:[%s2127 + $0x98] sm:$0xff]
    %v2148 = vld [vmem:[%s2127 + $0xa0] sm:$0xff]
    %v2149 = vld [vmem:[%s2127 + $0xa8] sm:$0xff]
    %v2150 = vld [vmem:[%s2127 + $0xb0] sm:$0xff]
    %v2151 = vld [vmem:[%s2127 + $0xb8] sm:$0xff]
    %v2152 = vld [vmem:[%s2127 + $0xc0] sm:$0xff]
    %v2153 = vld [vmem:[%s2127 + $0xc8] sm:$0xff]
    %v2154 = vld [vmem:[%s2127 + $0xd0] sm:$0xff]
    %v2155 = vld [vmem:[%s2127 + $0xd8] sm:$0xff]
    %v2156 = vld [vmem:[%s2127 + $0xe0] sm:$0xff]
    %v2157 = vld [vmem:[%s2127 + $0xe8] sm:$0xff]
    %v2158 = vld [vmem:[%s2127 + $0xf0] sm:$0xff]
    %v2159 = vld [vmem:[%s2127 + $0xf8] sm:$0xff]
    %v2160 = vld [vmem:[%s2127 + $0x100] sm:$0xff]
    %v2161 = vld [vmem:[%s2127 + $0x108] sm:$0xff]
    %v2162 = vld [vmem:[%s2127 + $0x110] sm:$0xff]
    %v2163 = vld [vmem:[%s2127 + $0x118] sm:$0xff]
    %v2164 = vld [vmem:[%s2127 + $0x120] sm:$0xff]
    %v2165 = vld [vmem:[%s2127 + $0x128] sm:$0xff]
    %v2166 = vld [vmem:[%s2127 + $0x130] sm:$0xff]
    %v2167 = vld [vmem:[%s2127 + $0x138] sm:$0xff]
    %v2168 = vld [vmem:[%s2127 + $0x140] sm:$0xff]
    %v2169 = vld [vmem:[%s2127 + $0x148] sm:$0xff]
    %v2170 = vld [vmem:[%s2127 + $0x150] sm:$0xff]
    %v2171 = vld [vmem:[%s2127 + $0x158] sm:$0xff]
    %v2172 = vld [vmem:[%s2127 + $0x160] sm:$0xff]
    %v2173 = vld [vmem:[%s2127 + $0x168] sm:$0xff]
    %v2174 = vld [vmem:[%s2127 + $0x170] sm:$0xff]
    %v2175 = vld [vmem:[%s2127 + $0x178] sm:$0xff]
    %v2176 = vld [vmem:[%s2127 + $0x180] sm:$0xff]
    %v2177 = vld [vmem:[%s2127 + $0x188] sm:$0xff]
    %v2178 = vld [vmem:[%s2127 + $0x190] sm:$0xff]
    %v2179 = vld [vmem:[%s2127 + $0x198] sm:$0xff]
    %v2180 = vld [vmem:[%s2127 + $0x1a0] sm:$0xff]
    %v2181 = vld [vmem:[%s2127 + $0x1a8] sm:$0xff]
    %v2182 = vld [vmem:[%s2127 + $0x1b0] sm:$0xff]
    %v2183 = vld [vmem:[%s2127 + $0x1b8] sm:$0xff]
    %v2184 = vld [vmem:[%s2127 + $0x1c0] sm:$0xff]
    %v2185 = vld [vmem:[%s2127 + $0x1c8] sm:$0xff]
    %v2186 = vld [vmem:[%s2127 + $0x1d0] sm:$0xff]
    %v2187 = vld [vmem:[%s2127 + $0x1d8] sm:$0xff]
    %v2188 = vld [vmem:[%s2127 + $0x1e0] sm:$0xff]
    %v2189 = vld [vmem:[%s2127 + $0x1e8] sm:$0xff]
    %v2190 = vld [vmem:[%s2127 + $0x1f0] sm:$0xff]
    %v2191 = vld [vmem:[%s2127 + $0x1f8] sm:$0xff]
    %v2256 = vunpack.c.l.b16 %v2128
    %v2257 = vunpack.c.h.b16 %v2128
    %v2258 = vunpack.c.l.b16 %v2129
    %v2259 = vunpack.c.h.b16 %v2129
    %v2260 = vunpack.c.l.b16 %v2130
    %v2261 = vunpack.c.h.b16 %v2130
    %v2262 = vunpack.c.l.b16 %v2131
    %v2263 = vunpack.c.h.b16 %v2131
    %v2264 = vunpack.c.l.b16 %v2132
    %v2265 = vunpack.c.h.b16 %v2132
    %v2266 = vunpack.c.l.b16 %v2133
    %v2267 = vunpack.c.h.b16 %v2133
    %v2268 = vunpack.c.l.b16 %v2134
    %v2269 = vunpack.c.h.b16 %v2134
    %v2270 = vunpack.c.l.b16 %v2135
    %v2271 = vunpack.c.h.b16 %v2135
    %v2272 = vunpack.c.l.b16 %v2136
    %v2273 = vunpack.c.h.b16 %v2136
    %v2274 = vunpack.c.l.b16 %v2137
    %v2275 = vunpack.c.h.b16 %v2137
    %v2276 = vunpack.c.l.b16 %v2138
    %v2277 = vunpack.c.h.b16 %v2138
    %v2278 = vunpack.c.l.b16 %v2139
    %v2279 = vunpack.c.h.b16 %v2139
    %v2280 = vunpack.c.l.b16 %v2140
    %v2281 = vunpack.c.h.b16 %v2140
    %v2282 = vunpack.c.l.b16 %v2141
    %v2283 = vunpack.c.h.b16 %v2141
    %v2284 = vunpack.c.l.b16 %v2142
    %v2285 = vunpack.c.h.b16 %v2142
    %v2286 = vunpack.c.l.b16 %v2143
    %v2287 = vunpack.c.h.b16 %v2143
    %v2288 = vunpack.c.l.b16 %v2144
    %v2289 = vunpack.c.h.b16 %v2144
    %v2290 = vunpack.c.l.b16 %v2145
    %v2291 = vunpack.c.h.b16 %v2145
    %v2292 = vunpack.c.l.b16 %v2146
    %v2293 = vunpack.c.h.b16 %v2146
    %v2294 = vunpack.c.l.b16 %v2147
    %v2295 = vunpack.c.h.b16 %v2147
    %v2296 = vunpack.c.l.b16 %v2148
    %v2297 = vunpack.c.h.b16 %v2148
    %v2298 = vunpack.c.l.b16 %v2149
    %v2299 = vunpack.c.h.b16 %v2149
    %v2300 = vunpack.c.l.b16 %v2150
    %v2301 = vunpack.c.h.b16 %v2150
    %v2302 = vunpack.c.l.b16 %v2151
    %v2303 = vunpack.c.h.b16 %v2151
    %v2304 = vunpack.c.l.b16 %v2152
    %v2305 = vunpack.c.h.b16 %v2152
    %v2306 = vunpack.c.l.b16 %v2153
    %v2307 = vunpack.c.h.b16 %v2153
    %v2308 = vunpack.c.l.b16 %v2154
    %v2309 = vunpack.c.h.b16 %v2154
    %v2310 = vunpack.c.l.b16 %v2155
    %v2311 = vunpack.c.h.b16 %v2155
    %v2312 = vunpack.c.l.b16 %v2156
    %v2313 = vunpack.c.h.b16 %v2156
    %v2314 = vunpack.c.l.b16 %v2157
    %v2315 = vunpack.c.h.b16 %v2157
    %v2316 = vunpack.c.l.b16 %v2158
    %v2317 = vunpack.c.h.b16 %v2158
    %v2318 = vunpack.c.l.b16 %v2159
    %v2319 = vunpack.c.h.b16 %v2159
    %v2320 = vunpack.c.l.b16 %v2160
    %v2321 = vunpack.c.h.b16 %v2160
    %v2322 = vunpack.c.l.b16 %v2161
    %v2323 = vunpack.c.h.b16 %v2161
    %v2324 = vunpack.c.l.b16 %v2162
    %v2325 = vunpack.c.h.b16 %v2162
    %v2326 = vunpack.c.l.b16 %v2163
    %v2327 = vunpack.c.h.b16 %v2163
    %v2328 = vunpack.c.l.b16 %v2164
    %v2329 = vunpack.c.h.b16 %v2164
    %v2330 = vunpack.c.l.b16 %v2165
    %v2331 = vunpack.c.h.b16 %v2165
    %v2332 = vunpack.c.l.b16 %v2166
    %v2333 = vunpack.c.h.b16 %v2166
    %v2334 = vunpack.c.l.b16 %v2167
    %v2335 = vunpack.c.h.b16 %v2167
    %v2336 = vunpack.c.l.b16 %v2168
    %v2337 = vunpack.c.h.b16 %v2168
    %v2338 = vunpack.c.l.b16 %v2169
    %v2339 = vunpack.c.h.b16 %v2169
    %v2340 = vunpack.c.l.b16 %v2170
    %v2341 = vunpack.c.h.b16 %v2170
    %v2342 = vunpack.c.l.b16 %v2171
    %v2343 = vunpack.c.h.b16 %v2171
    %v2344 = vunpack.c.l.b16 %v2172
    %v2345 = vunpack.c.h.b16 %v2172
    %v2346 = vunpack.c.l.b16 %v2173
    %v2347 = vunpack.c.h.b16 %v2173
    %v2348 = vunpack.c.l.b16 %v2174
    %v2349 = vunpack.c.h.b16 %v2174
    %v2350 = vunpack.c.l.b16 %v2175
    %v2351 = vunpack.c.h.b16 %v2175
    %v2352 = vunpack.c.l.b16 %v2176
    %v2353 = vunpack.c.h.b16 %v2176
    %v2354 = vunpack.c.l.b16 %v2177
    %v2355 = vunpack.c.h.b16 %v2177
    %v2356 = vunpack.c.l.b16 %v2178
    %v2357 = vunpack.c.h.b16 %v2178
    %v2358 = vunpack.c.l.b16 %v2179
    %v2359 = vunpack.c.h.b16 %v2179
    %v2360 = vunpack.c.l.b16 %v2180
    %v2361 = vunpack.c.h.b16 %v2180
    %v2362 = vunpack.c.l.b16 %v2181
    %v2363 = vunpack.c.h.b16 %v2181
    %v2364 = vunpack.c.l.b16 %v2182
    %v2365 = vunpack.c.h.b16 %v2182
    %v2366 = vunpack.c.l.b16 %v2183
    %v2367 = vunpack.c.h.b16 %v2183
    %v2368 = vunpack.c.l.b16 %v2184
    %v2369 = vunpack.c.h.b16 %v2184
    %v2370 = vunpack.c.l.b16 %v2185
    %v2371 = vunpack.c.h.b16 %v2185
    %v2372 = vunpack.c.l.b16 %v2186
    %v2373 = vunpack.c.h.b16 %v2186
    %v2374 = vunpack.c.l.b16 %v2187
    %v2375 = vunpack.c.h.b16 %v2187
    %v2376 = vunpack.c.l.b16 %v2188
    %v2377 = vunpack.c.h.b16 %v2188
    %v2378 = vunpack.c.l.b16 %v2189
    %v2379 = vunpack.c.h.b16 %v2189
    %v2380 = vunpack.c.l.b16 %v2190
    %v2381 = vunpack.c.h.b16 %v2190
    %v2382 = vunpack.c.l.b16 %v2191
    %v2383 = vunpack.c.h.b16 %v2191
    %v2384 = vpack.c.b16 %v2258, %v2256
    %v2385 = vpack.c.b16 %v2259, %v2257
    %v2386 = vpack.c.b16 %v2262, %v2260
    %v2387 = vpack.c.b16 %v2263, %v2261
    %v2388 = vpack.c.b16 %v2266, %v2264
    %v2389 = vpack.c.b16 %v2267, %v2265
    %v2390 = vpack.c.b16 %v2270, %v2268
    %v2391 = vpack.c.b16 %v2271, %v2269
    %v2392 = vpack.c.b16 %v2274, %v2272
    %v2393 = vpack.c.b16 %v2275, %v2273
    %v2394 = vpack.c.b16 %v2278, %v2276
    %v2395 = vpack.c.b16 %v2279, %v2277
    %v2396 = vpack.c.b16 %v2282, %v2280
    %v2397 = vpack.c.b16 %v2283, %v2281
    %v2398 = vpack.c.b16 %v2286, %v2284
    %v2399 = vpack.c.b16 %v2287, %v2285
    %v2400 = vpack.c.b16 %v2290, %v2288
    %v2401 = vpack.c.b16 %v2291, %v2289
    %v2402 = vpack.c.b16 %v2294, %v2292
    %v2403 = vpack.c.b16 %v2295, %v2293
    %v2404 = vpack.c.b16 %v2298, %v2296
    %v2405 = vpack.c.b16 %v2299, %v2297
    %v2406 = vpack.c.b16 %v2302, %v2300
    %v2407 = vpack.c.b16 %v2303, %v2301
    %v2408 = vpack.c.b16 %v2306, %v2304
    %v2409 = vpack.c.b16 %v2307, %v2305
    %v2410 = vpack.c.b16 %v2310, %v2308
    %v2411 = vpack.c.b16 %v2311, %v2309
    %v2412 = vpack.c.b16 %v2314, %v2312
    %v2413 = vpack.c.b16 %v2315, %v2313
    %v2414 = vpack.c.b16 %v2318, %v2316
    %v2415 = vpack.c.b16 %v2319, %v2317
    %v2416 = vpack.c.b16 %v2322, %v2320
    %v2417 = vpack.c.b16 %v2323, %v2321
    %v2418 = vpack.c.b16 %v2326, %v2324
    %v2419 = vpack.c.b16 %v2327, %v2325
    %v2420 = vpack.c.b16 %v2330, %v2328
    %v2421 = vpack.c.b16 %v2331, %v2329
    %v2422 = vpack.c.b16 %v2334, %v2332
    %v2423 = vpack.c.b16 %v2335, %v2333
    %v2424 = vpack.c.b16 %v2338, %v2336
    %v2425 = vpack.c.b16 %v2339, %v2337
    %v2426 = vpack.c.b16 %v2342, %v2340
    %v2427 = vpack.c.b16 %v2343, %v2341
    %v2428 = vpack.c.b16 %v2346, %v2344
    %v2429 = vpack.c.b16 %v2347, %v2345
    %v2430 = vpack.c.b16 %v2350, %v2348
    %v2431 = vpack.c.b16 %v2351, %v2349
    %v2432 = vpack.c.b16 %v2354, %v2352
    %v2433 = vpack.c.b16 %v2355, %v2353
    %v2434 = vpack.c.b16 %v2358, %v2356
    %v2435 = vpack.c.b16 %v2359, %v2357
    %v2436 = vpack.c.b16 %v2362, %v2360
    %v2437 = vpack.c.b16 %v2363, %v2361
    %v2438 = vpack.c.b16 %v2366, %v2364
    %v2439 = vpack.c.b16 %v2367, %v2365
    %v2440 = vpack.c.b16 %v2370, %v2368
    %v2441 = vpack.c.b16 %v2371, %v2369
    %v2442 = vpack.c.b16 %v2374, %v2372
    %v2443 = vpack.c.b16 %v2375, %v2373
    %v2444 = vpack.c.b16 %v2378, %v2376
    %v2445 = vpack.c.b16 %v2379, %v2377
    %v2446 = vpack.c.b16 %v2382, %v2380
    %v2447 = vpack.c.b16 %v2383, %v2381
    %2512 = vmatprep.subr.bf16.mxu0 %v2385
    %2513 = vmatpush1.bf16.msra.mxu0 %v2384
    %2514 = vmatprep.subr.bf16.mxu0 %v2387
    %2515 = vmatpush1.bf16.msra.mxu0 %v2386
    %2516 = vmatprep.subr.bf16.mxu0 %v2389
    %2517 = vmatpush1.bf16.msra.mxu0 %v2388
    %2518 = vmatprep.subr.bf16.mxu0 %v2391
    %2519 = vmatpush1.bf16.msra.mxu0 %v2390
    %2520 = vmatprep.subr.bf16.mxu0 %v2393
    %2521 = vmatpush1.bf16.msra.mxu0 %v2392
    %2522 = vmatprep.subr.bf16.mxu0 %v2395
    %2523 = vmatpush1.bf16.msra.mxu0 %v2394
    %2524 = vmatprep.subr.bf16.mxu0 %v2397
    %2525 = vmatpush1.bf16.msra.mxu0 %v2396
    %2526 = vmatprep.subr.bf16.mxu0 %v2399
    %2527 = vmatpush1.bf16.msra.mxu0 %v2398
    %2528 = vmatprep.subr.bf16.mxu0 %v2401
    %2529 = vmatpush1.bf16.msra.mxu0 %v2400
    %2530 = vmatprep.subr.bf16.mxu0 %v2403
    %2531 = vmatpush1.bf16.msra.mxu0 %v2402
    %2532 = vmatprep.subr.bf16.mxu0 %v2405
    %2533 = vmatpush1.bf16.msra.mxu0 %v2404
    %2534 = vmatprep.subr.bf16.mxu0 %v2407
    %2535 = vmatpush1.bf16.msra.mxu0 %v2406
    %2536 = vmatprep.subr.bf16.mxu0 %v2409
    %2537 = vmatpush1.bf16.msra.mxu0 %v2408
    %2538 = vmatprep.subr.bf16.mxu0 %v2411
    %2539 = vmatpush1.bf16.msra.mxu0 %v2410
    %2540 = vmatprep.subr.bf16.mxu0 %v2413
    %2541 = vmatpush1.bf16.msra.mxu0 %v2412
    %2542 = vmatprep.subr.bf16.mxu0 %v2415
    %2543 = vmatpush1.bf16.msra.mxu0 %v2414
    %2544 = vmatprep.mubr.bf16.mxu0 %v2124
    %2545 = vmatmul.mubr.bf16.gmra.mrb[0].mxu0 %v2123
    %v2546 = vpop.f32.mrb[0].mxu0
    %v2547 = vadd.f32 0.0, %v2546
    %v2548 = vpop.f32.mrb[0].mxu0
    %v2549 = vadd.f32 0.0, %v2548
    %v2550 = vpop.f32.mrb[0].mxu0
    %v2551 = vadd.f32 0.0, %v2550
    %v2552 = vpop.f32.mrb[0].mxu0
    %v2553 = vadd.f32 0.0, %v2552
    %2554 = vdwg.mxu0
    %2555 = vmatprep.subr.bf16.mxu0 %v2417
    %2556 = vmatpush1.bf16.msra.mxu0 %v2416
    %2557 = vmatprep.subr.bf16.mxu0 %v2419
    %2558 = vmatpush1.bf16.msra.mxu0 %v2418
    %2559 = vmatprep.subr.bf16.mxu0 %v2421
    %2560 = vmatpush1.bf16.msra.mxu0 %v2420
    %2561 = vmatprep.subr.bf16.mxu0 %v2423
    %2562 = vmatpush1.bf16.msra.mxu0 %v2422
    %2563 = vmatprep.subr.bf16.mxu0 %v2425
    %2564 = vmatpush1.bf16.msra.mxu0 %v2424
    %2565 = vmatprep.subr.bf16.mxu0 %v2427
    %2566 = vmatpush1.bf16.msra.mxu0 %v2426
    %2567 = vmatprep.subr.bf16.mxu0 %v2429
    %2568 = vmatpush1.bf16.msra.mxu0 %v2428
    %2569 = vmatprep.subr.bf16.mxu0 %v2431
    %2570 = vmatpush1.bf16.msra.mxu0 %v2430
    %2571 = vmatprep.subr.bf16.mxu0 %v2433
    %2572 = vmatpush1.bf16.msra.mxu0 %v2432
    %2573 = vmatprep.subr.bf16.mxu0 %v2435
    %2574 = vmatpush1.bf16.msra.mxu0 %v2434
    %2575 = vmatprep.subr.bf16.mxu0 %v2437
    %2576 = vmatpush1.bf16.msra.mxu0 %v2436
    %2577 = vmatprep.subr.bf16.mxu0 %v2439
    %2578 = vmatpush1.bf16.msra.mxu0 %v2438
    %2579 = vmatprep.subr.bf16.mxu0 %v2441
    %2580 = vmatpush1.bf16.msra.mxu0 %v2440
    %2581 = vmatprep.subr.bf16.mxu0 %v2443
    %2582 = vmatpush1.bf16.msra.mxu0 %v2442
    %2583 = vmatprep.subr.bf16.mxu0 %v2445
    %2584 = vmatpush1.bf16.msra.mxu0 %v2444
    %2585 = vmatprep.subr.bf16.mxu0 %v2447
    %2586 = vmatpush1.bf16.msra.mxu0 %v2446
    %2587 = vmatprep.mubr.bf16.mxu0 %v2126
    %2588 = vmatmul.mubr.bf16.gmra.mrb[0].mxu0 %v2125
    %v2589 = vpop.f32.mrb[0].mxu0
    %v2590 = vadd.f32 %v2547, %v2589
    %v2591 = vpop.f32.mrb[0].mxu0
    %v2592 = vadd.f32 %v2549, %v2591
    %v2593 = vpop.f32.mrb[0].mxu0
    %v2594 = vadd.f32 %v2551, %v2593
    %v2595 = vpop.f32.mrb[0].mxu0
    %v2596 = vadd.f32 %v2553, %v2595
    %2597 = vdwg.mxu0
    %v2662 = vunpack.c.l.b16 %v1994
    %v2663 = vunpack.c.h.b16 %v1994
    %v2664 = vunpack.c.l.b16 %v1995
    %v2665 = vunpack.c.h.b16 %v1995
    %v2666 = vunpack.c.l.b16 %v1996
    %v2667 = vunpack.c.h.b16 %v1996
    %v2668 = vunpack.c.l.b16 %v1997
    %v2669 = vunpack.c.h.b16 %v1997
    %v2670 = vunpack.c.l.b16 %v1998
    %v2671 = vunpack.c.h.b16 %v1998
    %v2672 = vunpack.c.l.b16 %v1999
    %v2673 = vunpack.c.h.b16 %v1999
    %v2674 = vunpack.c.l.b16 %v2000
    %v2675 = vunpack.c.h.b16 %v2000
    %v2676 = vunpack.c.l.b16 %v2001
    %v2677 = vunpack.c.h.b16 %v2001
    %v2678 = vunpack.c.l.b16 %v2002
    %v2679 = vunpack.c.h.b16 %v2002
    %v2680 = vunpack.c.l.b16 %v2003
    %v2681 = vunpack.c.h.b16 %v2003
    %v2682 = vunpack.c.l.b16 %v2004
    %v2683 = vunpack.c.h.b16 %v2004
    %v2684 = vunpack.c.l.b16 %v2005
    %v2685 = vunpack.c.h.b16 %v2005
    %v2686 = vunpack.c.l.b16 %v2006
    %v2687 = vunpack.c.h.b16 %v2006
    %v2688 = vunpack.c.l.b16 %v2007
    %v2689 = vunpack.c.h.b16 %v2007
    %v2690 = vunpack.c.l.b16 %v2008
    %v2691 = vunpack.c.h.b16 %v2008
    %v2692 = vunpack.c.l.b16 %v2009
    %v2693 = vunpack.c.h.b16 %v2009
    %v2694 = vunpack.c.l.b16 %v2010
    %v2695 = vunpack.c.h.b16 %v2010
    %v2696 = vunpack.c.l.b16 %v2011
    %v2697 = vunpack.c.h.b16 %v2011
    %v2698 = vunpack.c.l.b16 %v2012
    %v2699 = vunpack.c.h.b16 %v2012
    %v2700 = vunpack.c.l.b16 %v2013
    %v2701 = vunpack.c.h.b16 %v2013
    %v2702 = vunpack.c.l.b16 %v2014
    %v2703 = vunpack.c.h.b16 %v2014
    %v2704 = vunpack.c.l.b16 %v2015
    %v2705 = vunpack.c.h.b16 %v2015
    %v2706 = vunpack.c.l.b16 %v2016
    %v2707 = vunpack.c.h.b16 %v2016
    %v2708 = vunpack.c.l.b16 %v2017
    %v2709 = vunpack.c.h.b16 %v2017
    %v2710 = vunpack.c.l.b16 %v2018
    %v2711 = vunpack.c.h.b16 %v2018
    %v2712 = vunpack.c.l.b16 %v2019
    %v2713 = vunpack.c.h.b16 %v2019
    %v2714 = vunpack.c.l.b16 %v2020
    %v2715 = vunpack.c.h.b16 %v2020
    %v2716 = vunpack.c.l.b16 %v2021
    %v2717 = vunpack.c.h.b16 %v2021
    %v2718 = vunpack.c.l.b16 %v2022
    %v2719 = vunpack.c.h.b16 %v2022
    %v2720 = vunpack.c.l.b16 %v2023
    %v2721 = vunpack.c.h.b16 %v2023
    %v2722 = vunpack.c.l.b16 %v2024
    %v2723 = vunpack.c.h.b16 %v2024
    %v2724 = vunpack.c.l.b16 %v2025
    %v2725 = vunpack.c.h.b16 %v2025
    %v2726 = vunpack.c.l.b16 %v2026
    %v2727 = vunpack.c.h.b16 %v2026
    %v2728 = vunpack.c.l.b16 %v2027
    %v2729 = vunpack.c.h.b16 %v2027
    %v2730 = vunpack.c.l.b16 %v2028
    %v2731 = vunpack.c.h.b16 %v2028
    %v2732 = vunpack.c.l.b16 %v2029
    %v2733 = vunpack.c.h.b16 %v2029
    %v2734 = vunpack.c.l.b16 %v2030
    %v2735 = vunpack.c.h.b16 %v2030
    %v2736 = vunpack.c.l.b16 %v2031
    %v2737 = vunpack.c.h.b16 %v2031
    %v2738 = vunpack.c.l.b16 %v2032
    %v2739 = vunpack.c.h.b16 %v2032
    %v2740 = vunpack.c.l.b16 %v2033
    %v2741 = vunpack.c.h.b16 %v2033
    %v2742 = vunpack.c.l.b16 %v2034
    %v2743 = vunpack.c.h.b16 %v2034
    %v2744 = vunpack.c.l.b16 %v2035
    %v2745 = vunpack.c.h.b16 %v2035
    %v2746 = vunpack.c.l.b16 %v2036
    %v2747 = vunpack.c.h.b16 %v2036
    %v2748 = vunpack.c.l.b16 %v2037
    %v2749 = vunpack.c.h.b16 %v2037
    %v2750 = vunpack.c.l.b16 %v2038
    %v2751 = vunpack.c.h.b16 %v2038
    %v2752 = vunpack.c.l.b16 %v2039
    %v2753 = vunpack.c.h.b16 %v2039
    %v2754 = vunpack.c.l.b16 %v2040
    %v2755 = vunpack.c.h.b16 %v2040
    %v2756 = vunpack.c.l.b16 %v2041
    %v2757 = vunpack.c.h.b16 %v2041
    %v2758 = vunpack.c.l.b16 %v2042
    %v2759 = vunpack.c.h.b16 %v2042
    %v2760 = vunpack.c.l.b16 %v2043
    %v2761 = vunpack.c.h.b16 %v2043
    %v2762 = vunpack.c.l.b16 %v2044
    %v2763 = vunpack.c.h.b16 %v2044
    %v2764 = vunpack.c.l.b16 %v2045
    %v2765 = vunpack.c.h.b16 %v2045
    %v2766 = vunpack.c.l.b16 %v2046
    %v2767 = vunpack.c.h.b16 %v2046
    %v2768 = vunpack.c.l.b16 %v2047
    %v2769 = vunpack.c.h.b16 %v2047
    %v2770 = vunpack.c.l.b16 %v2048
    %v2771 = vunpack.c.h.b16 %v2048
    %v2772 = vunpack.c.l.b16 %v2049
    %v2773 = vunpack.c.h.b16 %v2049
    %v2774 = vunpack.c.l.b16 %v2050
    %v2775 = vunpack.c.h.b16 %v2050
    %v2776 = vunpack.c.l.b16 %v2051
    %v2777 = vunpack.c.h.b16 %v2051
    %v2778 = vunpack.c.l.b16 %v2052
    %v2779 = vunpack.c.h.b16 %v2052
    %v2780 = vunpack.c.l.b16 %v2053
    %v2781 = vunpack.c.h.b16 %v2053
    %v2782 = vunpack.c.l.b16 %v2054
    %v2783 = vunpack.c.h.b16 %v2054
    %v2784 = vunpack.c.l.b16 %v2055
    %v2785 = vunpack.c.h.b16 %v2055
    %v2786 = vunpack.c.l.b16 %v2056
    %v2787 = vunpack.c.h.b16 %v2056
    %v2788 = vunpack.c.l.b16 %v2057
    %v2789 = vunpack.c.h.b16 %v2057
    %v2790 = vpack.c.b16 %v2664, %v2662
    %v2791 = vpack.c.b16 %v2665, %v2663
    %v2792 = vpack.c.b16 %v2668, %v2666
    %v2793 = vpack.c.b16 %v2669, %v2667
    %v2794 = vpack.c.b16 %v2672, %v2670
    %v2795 = vpack.c.b16 %v2673, %v2671
    %v2796 = vpack.c.b16 %v2676, %v2674
    %v2797 = vpack.c.b16 %v2677, %v2675
    %v2798 = vpack.c.b16 %v2680, %v2678
    %v2799 = vpack.c.b16 %v2681, %v2679
    %v2800 = vpack.c.b16 %v2684, %v2682
    %v2801 = vpack.c.b16 %v2685, %v2683
    %v2802 = vpack.c.b16 %v2688, %v2686
    %v2803 = vpack.c.b16 %v2689, %v2687
    %v2804 = vpack.c.b16 %v2692, %v2690
    %v2805 = vpack.c.b16 %v2693, %v2691
    %v2806 = vpack.c.b16 %v2696, %v2694
    %v2807 = vpack.c.b16 %v2697, %v2695
    %v2808 = vpack.c.b16 %v2700, %v2698
    %v2809 = vpack.c.b16 %v2701, %v2699
    %v2810 = vpack.c.b16 %v2704, %v2702
    %v2811 = vpack.c.b16 %v2705, %v2703
    %v2812 = vpack.c.b16 %v2708, %v2706
    %v2813 = vpack.c.b16 %v2709, %v2707
    %v2814 = vpack.c.b16 %v2712, %v2710
    %v2815 = vpack.c.b16 %v2713, %v2711
    %v2816 = vpack.c.b16 %v2716, %v2714
    %v2817 = vpack.c.b16 %v2717, %v2715
    %v2818 = vpack.c.b16 %v2720, %v2718
    %v2819 = vpack.c.b16 %v2721, %v2719
    %v2820 = vpack.c.b16 %v2724, %v2722
    %v2821 = vpack.c.b16 %v2725, %v2723
    %v2822 = vpack.c.b16 %v2728, %v2726
    %v2823 = vpack.c.b16 %v2729, %v2727
    %v2824 = vpack.c.b16 %v2732, %v2730
    %v2825 = vpack.c.b16 %v2733, %v2731
    %v2826 = vpack.c.b16 %v2736, %v2734
    %v2827 = vpack.c.b16 %v2737, %v2735
    %v2828 = vpack.c.b16 %v2740, %v2738
    %v2829 = vpack.c.b16 %v2741, %v2739
    %v2830 = vpack.c.b16 %v2744, %v2742
    %v2831 = vpack.c.b16 %v2745, %v2743
    %v2832 = vpack.c.b16 %v2748, %v2746
    %v2833 = vpack.c.b16 %v2749, %v2747
    %v2834 = vpack.c.b16 %v2752, %v2750
    %v2835 = vpack.c.b16 %v2753, %v2751
    %v2836 = vpack.c.b16 %v2756, %v2754
    %v2837 = vpack.c.b16 %v2757, %v2755
    %v2838 = vpack.c.b16 %v2760, %v2758
    %v2839 = vpack.c.b16 %v2761, %v2759
    %v2840 = vpack.c.b16 %v2764, %v2762
    %v2841 = vpack.c.b16 %v2765, %v2763
    %v2842 = vpack.c.b16 %v2768, %v2766
    %v2843 = vpack.c.b16 %v2769, %v2767
    %v2844 = vpack.c.b16 %v2772, %v2770
    %v2845 = vpack.c.b16 %v2773, %v2771
    %v2846 = vpack.c.b16 %v2776, %v2774
    %v2847 = vpack.c.b16 %v2777, %v2775
    %v2848 = vpack.c.b16 %v2780, %v2778
    %v2849 = vpack.c.b16 %v2781, %v2779
    %v2850 = vpack.c.b16 %v2784, %v2782
    %v2851 = vpack.c.b16 %v2785, %v2783
    %v2852 = vpack.c.b16 %v2788, %v2786
    %v2853 = vpack.c.b16 %v2789, %v2787
    %2918 = vmatprep.subr.bf16.mxu0 %v2791
    %2919 = vmatpush1.bf16.msra.mxu0 %v2790
    %2920 = vmatprep.subr.bf16.mxu0 %v2793
    %2921 = vmatpush1.bf16.msra.mxu0 %v2792
    %2922 = vmatprep.subr.bf16.mxu0 %v2795
    %2923 = vmatpush1.bf16.msra.mxu0 %v2794
    %2924 = vmatprep.subr.bf16.mxu0 %v2797
    %2925 = vmatpush1.bf16.msra.mxu0 %v2796
    %2926 = vmatprep.subr.bf16.mxu0 %v2799
    %2927 = vmatpush1.bf16.msra.mxu0 %v2798
    %2928 = vmatprep.subr.bf16.mxu0 %v2801
    %2929 = vmatpush1.bf16.msra.mxu0 %v2800
    %2930 = vmatprep.subr.bf16.mxu0 %v2803
    %2931 = vmatpush1.bf16.msra.mxu0 %v2802
    %2932 = vmatprep.subr.bf16.mxu0 %v2805
    %2933 = vmatpush1.bf16.msra.mxu0 %v2804
    %2934 = vmatprep.subr.bf16.mxu0 %v2807
    %2935 = vmatpush1.bf16.msra.mxu0 %v2806
    %2936 = vmatprep.subr.bf16.mxu0 %v2809
    %2937 = vmatpush1.bf16.msra.mxu0 %v2808
    %2938 = vmatprep.subr.bf16.mxu0 %v2811
    %2939 = vmatpush1.bf16.msra.mxu0 %v2810
    %2940 = vmatprep.subr.bf16.mxu0 %v2813
    %2941 = vmatpush1.bf16.msra.mxu0 %v2812
    %2942 = vmatprep.subr.bf16.mxu0 %v2815
    %2943 = vmatpush1.bf16.msra.mxu0 %v2814
    %2944 = vmatprep.subr.bf16.mxu0 %v2817
    %2945 = vmatpush1.bf16.msra.mxu0 %v2816
    %2946 = vmatprep.subr.bf16.mxu0 %v2819
    %2947 = vmatpush1.bf16.msra.mxu0 %v2818
    %2948 = vmatprep.subr.bf16.mxu0 %v2821
    %2949 = vmatpush1.bf16.msra.mxu0 %v2820
    %2950 = vmatprep.mubr.bf16.mxu0 %v1991
    %2951 = vmatmul.mubr.bf16.gmra.mrb[0].mxu0 %v1990
    %v2952 = vpop.f32.mrb[0].mxu0
    %v2953 = vadd.f32 %v2590, %v2952
    %v2954 = vpop.f32.mrb[0].mxu0
    %v2955 = vadd.f32 %v2592, %v2954
    %v2956 = vpop.f32.mrb[0].mxu0
    %v2957 = vadd.f32 %v2594, %v2956
    %v2958 = vpop.f32.mrb[0].mxu0
    %v2959 = vadd.f32 %v2596, %v2958
    %2960 = vdwg.mxu0
    %2961 = vmatprep.subr.bf16.mxu0 %v2823
    %2962 = vmatpush1.bf16.msra.mxu0 %v2822
    %2963 = vmatprep.subr.bf16.mxu0 %v2825
    %2964 = vmatpush1.bf16.msra.mxu0 %v2824
    %2965 = vmatprep.subr.bf16.mxu0 %v2827
    %2966 = vmatpush1.bf16.msra.mxu0 %v2826
    %2967 = vmatprep.subr.bf16.mxu0 %v2829
    %2968 = vmatpush1.bf16.msra.mxu0 %v2828
    %2969 = vmatprep.subr.bf16.mxu0 %v2831
    %2970 = vmatpush1.bf16.msra.mxu0 %v2830
    %2971 = vmatprep.subr.bf16.mxu0 %v2833
    %2972 = vmatpush1.bf16.msra.mxu0 %v2832
    %2973 = vmatprep.subr.bf16.mxu0 %v2835
    %2974 = vmatpush1.bf16.msra.mxu0 %v2834
    %2975 = vmatprep.subr.bf16.mxu0 %v2837
    %2976 = vmatpush1.bf16.msra.mxu0 %v2836
    %2977 = vmatprep.subr.bf16.mxu0 %v2839
    %2978 = vmatpush1.bf16.msra.mxu0 %v2838
    %2979 = vmatprep.subr.bf16.mxu0 %v2841
    %2980 = vmatpush1.bf16.msra.mxu0 %v2840
    %2981 = vmatprep.subr.bf16.mxu0 %v2843
    %2982 = vmatpush1.bf16.msra.mxu0 %v2842
    %2983 = vmatprep.subr.bf16.mxu0 %v2845
    %2984 = vmatpush1.bf16.msra.mxu0 %v2844
    %2985 = vmatprep.subr.bf16.mxu0 %v2847
    %2986 = vmatpush1.bf16.msra.mxu0 %v2846
    %2987 = vmatprep.subr.bf16.mxu0 %v2849
    %2988 = vmatpush1.bf16.msra.mxu0 %v2848
    %2989 = vmatprep.subr.bf16.mxu0 %v2851
    %2990 = vmatpush1.bf16.msra.mxu0 %v2850
    %2991 = vmatprep.subr.bf16.mxu0 %v2853
    %2992 = vmatpush1.bf16.msra.mxu0 %v2852
    %2993 = vmatprep.mubr.bf16.mxu0 %v1993
    %2994 = vmatmul.mubr.bf16.gmra.mrb[0].mxu0 %v1992
    %v2995 = vpop.f32.mrb[0].mxu0
    %v2996 = vadd.f32 %v2953, %v2995
    %v2997 = vpop.f32.mrb[0].mxu0
    %v2998 = vadd.f32 %v2955, %v2997
    %v2999 = vpop.f32.mrb[0].mxu0
    %v3000 = vadd.f32 %v2957, %v2999
    %v3001 = vpop.f32.mrb[0].mxu0
    %v3002 = vadd.f32 %v2959, %v3001
    %3003 = vdwg.mxu0
    %v3004 = vld [vmem:[#allocation3] sm:$0xfc]
    %v3005 = vld [vmem:[#allocation3 + $0x8] sm:$0xfc]
    %v3006 = vld [vmem:[#allocation3 + $0x10] sm:$0xfc]
    %v3007 = vld [vmem:[#allocation3 + $0x18] sm:$0xfc]
    %v3008 = vld [vmem:[#allocation3 + $0x20] sm:$0x3]
    %v3009 = vld [vmem:[#allocation3 + $0x28] sm:$0x3]
    %v3010 = vld [vmem:[#allocation3 + $0x30] sm:$0x3]
    %v3011 = vld [vmem:[#allocation3 + $0x38] sm:$0x3]
    %v3012 = vld [vmem:[#allocation3 + $0x40] sm:$0xfc]
    %v3013 = vld [vmem:[#allocation3 + $0x48] sm:$0xfc]
    %v3014 = vld [vmem:[#allocation3 + $0x50] sm:$0xfc]
    %v3015 = vld [vmem:[#allocation3 + $0x58] sm:$0xfc]
    %v3016 = vld [vmem:[#allocation3 + $0x60] sm:$0x3]
    %v3017 = vld [vmem:[#allocation3 + $0x68] sm:$0x3]
    %v3018 = vld [vmem:[#allocation3 + $0x70] sm:$0x3]
    %v3019 = vld [vmem:[#allocation3 + $0x78] sm:$0x3]
    %vm3036 = vcmask 1045504
    %v3037 = vrot.slane %v3004, 2
    %v3038 = vrot.slane %v3008, 2
    %v3039 = vsel %vm3036, %v3037, %v3038
    %v3040 = vrot.slane %v3005, 2
    %v3041 = vrot.slane %v3009, 2
    %v3042 = vsel %vm3036, %v3040, %v3041
    %v3043 = vrot.slane %v3006, 2
    %v3044 = vrot.slane %v3010, 2
    %v3045 = vsel %vm3036, %v3043, %v3044
    %v3046 = vrot.slane %v3007, 2
    %v3047 = vrot.slane %v3011, 2
    %v3048 = vsel %vm3036, %v3046, %v3047
    %v3049 = vrot.slane %v3012, 2
    %v3050 = vrot.slane %v3016, 2
    %v3051 = vsel %vm3036, %v3049, %v3050
    %v3052 = vrot.slane %v3013, 2
    %v3053 = vrot.slane %v3017, 2
    %v3054 = vsel %vm3036, %v3052, %v3053
    %v3055 = vrot.slane %v3014, 2
    %v3056 = vrot.slane %v3018, 2
    %v3057 = vsel %vm3036, %v3055, %v3056
    %v3058 = vrot.slane %v3015, 2
    %v3059 = vrot.slane %v3019, 2
    %v3060 = vsel %vm3036, %v3058, %v3059
    %v3069 = vpack.c.bf16 %v3051, %v3039
    %v3070 = vpack.c.bf16 %v3054, %v3042
    %v3071 = vpack.c.bf16 %v3057, %v3045
    %v3072 = vpack.c.bf16 %v3060, %v3048
    %s3073 = scalar_lea.vmem [#allocation9], 1024
    %v3074 = vld [vmem:[%s3073] sm:$0xff]
    %v3075 = vld [vmem:[%s3073 + $0x8] sm:$0xff]
    %v3076 = vld [vmem:[%s3073 + $0x10] sm:$0xff]
    %v3077 = vld [vmem:[%s3073 + $0x18] sm:$0xff]
    %v3078 = vld [vmem:[%s3073 + $0x20] sm:$0xff]
    %v3079 = vld [vmem:[%s3073 + $0x28] sm:$0xff]
    %v3080 = vld [vmem:[%s3073 + $0x30] sm:$0xff]
    %v3081 = vld [vmem:[%s3073 + $0x38] sm:$0xff]
    %v3082 = vld [vmem:[%s3073 + $0x40] sm:$0xff]
    %v3083 = vld [vmem:[%s3073 + $0x48] sm:$0xff]
    %v3084 = vld [vmem:[%s3073 + $0x50] sm:$0xff]
    %v3085 = vld [vmem:[%s3073 + $0x58] sm:$0xff]
    %v3086 = vld [vmem:[%s3073 + $0x60] sm:$0xff]
    %v3087 = vld [vmem:[%s3073 + $0x68] sm:$0xff]
    %v3088 = vld [vmem:[%s3073 + $0x70] sm:$0xff]
    %v3089 = vld [vmem:[%s3073 + $0x78] sm:$0xff]
    %v3090 = vld [vmem:[%s3073 + $0x80] sm:$0xff]
    %v3091 = vld [vmem:[%s3073 + $0x88] sm:$0xff]
    %v3092 = vld [vmem:[%s3073 + $0x90] sm:$0xff]
    %v3093 = vld [vmem:[%s3073 + $0x98] sm:$0xff]
    %v3094 = vld [vmem:[%s3073 + $0xa0] sm:$0xff]
    %v3095 = vld [vmem:[%s3073 + $0xa8] sm:$0xff]
    %v3096 = vld [vmem:[%s3073 + $0xb0] sm:$0xff]
    %v3097 = vld [vmem:[%s3073 + $0xb8] sm:$0xff]
    %v3098 = vld [vmem:[%s3073 + $0xc0] sm:$0xff]
    %v3099 = vld [vmem:[%s3073 + $0xc8] sm:$0xff]
    %v3100 = vld [vmem:[%s3073 + $0xd0] sm:$0xff]
    %v3101 = vld [vmem:[%s3073 + $0xd8] sm:$0xff]
    %v3102 = vld [vmem:[%s3073 + $0xe0] sm:$0xff]
    %v3103 = vld [vmem:[%s3073 + $0xe8] sm:$0xff]
    %v3104 = vld [vmem:[%s3073 + $0xf0] sm:$0xff]
    %v3105 = vld [vmem:[%s3073 + $0xf8] sm:$0xff]
    %v3106 = vld [vmem:[%s3073 + $0x100] sm:$0xff]
    %v3107 = vld [vmem:[%s3073 + $0x108] sm:$0xff]
    %v3108 = vld [vmem:[%s3073 + $0x110] sm:$0xff]
    %v3109 = vld [vmem:[%s3073 + $0x118] sm:$0xff]
    %v3110 = vld [vmem:[%s3073 + $0x120] sm:$0xff]
    %v3111 = vld [vmem:[%s3073 + $0x128] sm:$0xff]
    %v3112 = vld [vmem:[%s3073 + $0x130] sm:$0xff]
    %v3113 = vld [vmem:[%s3073 + $0x138] sm:$0xff]
    %v3114 = vld [vmem:[%s3073 + $0x140] sm:$0xff]
    %v3115 = vld [vmem:[%s3073 + $0x148] sm:$0xff]
    %v3116 = vld [vmem:[%s3073 + $0x150] sm:$0xff]
    %v3117 = vld [vmem:[%s3073 + $0x158] sm:$0xff]
    %v3118 = vld [vmem:[%s3073 + $0x160] sm:$0xff]
    %v3119 = vld [vmem:[%s3073 + $0x168] sm:$0xff]
    %v3120 = vld [vmem:[%s3073 + $0x170] sm:$0xff]
    %v3121 = vld [vmem:[%s3073 + $0x178] sm:$0xff]
    %v3122 = vld [vmem:[%s3073 + $0x180] sm:$0xff]
    %v3123 = vld [vmem:[%s3073 + $0x188] sm:$0xff]
    %v3124 = vld [vmem:[%s3073 + $0x190] sm:$0xff]
    %v3125 = vld [vmem:[%s3073 + $0x198] sm:$0xff]
    %v3126 = vld [vmem:[%s3073 + $0x1a0] sm:$0xff]
    %v3127 = vld [vmem:[%s3073 + $0x1a8] sm:$0xff]
    %v3128 = vld [vmem:[%s3073 + $0x1b0] sm:$0xff]
    %v3129 = vld [vmem:[%s3073 + $0x1b8] sm:$0xff]
    %v3130 = vld [vmem:[%s3073 + $0x1c0] sm:$0xff]
    %v3131 = vld [vmem:[%s3073 + $0x1c8] sm:$0xff]
    %v3132 = vld [vmem:[%s3073 + $0x1d0] sm:$0xff]
    %v3133 = vld [vmem:[%s3073 + $0x1d8] sm:$0xff]
    %v3134 = vld [vmem:[%s3073 + $0x1e0] sm:$0xff]
    %v3135 = vld [vmem:[%s3073 + $0x1e8] sm:$0xff]
    %v3136 = vld [vmem:[%s3073 + $0x1f0] sm:$0xff]
    %v3137 = vld [vmem:[%s3073 + $0x1f8] sm:$0xff]
    %v3202 = vunpack.c.l.b16 %v3074
    %v3203 = vunpack.c.h.b16 %v3074
    %v3204 = vunpack.c.l.b16 %v3075
    %v3205 = vunpack.c.h.b16 %v3075
    %v3206 = vunpack.c.l.b16 %v3076
    %v3207 = vunpack.c.h.b16 %v3076
    %v3208 = vunpack.c.l.b16 %v3077
    %v3209 = vunpack.c.h.b16 %v3077
    %v3210 = vunpack.c.l.b16 %v3078
    %v3211 = vunpack.c.h.b16 %v3078
    %v3212 = vunpack.c.l.b16 %v3079
    %v3213 = vunpack.c.h.b16 %v3079
    %v3214 = vunpack.c.l.b16 %v3080
    %v3215 = vunpack.c.h.b16 %v3080
    %v3216 = vunpack.c.l.b16 %v3081
    %v3217 = vunpack.c.h.b16 %v3081
    %v3218 = vunpack.c.l.b16 %v3082
    %v3219 = vunpack.c.h.b16 %v3082
    %v3220 = vunpack.c.l.b16 %v3083
    %v3221 = vunpack.c.h.b16 %v3083
    %v3222 = vunpack.c.l.b16 %v3084
    %v3223 = vunpack.c.h.b16 %v3084
    %v3224 = vunpack.c.l.b16 %v3085
    %v3225 = vunpack.c.h.b16 %v3085
    %v3226 = vunpack.c.l.b16 %v3086
    %v3227 = vunpack.c.h.b16 %v3086
    %v3228 = vunpack.c.l.b16 %v3087
    %v3229 = vunpack.c.h.b16 %v3087
    %v3230 = vunpack.c.l.b16 %v3088
    %v3231 = vunpack.c.h.b16 %v3088
    %v3232 = vunpack.c.l.b16 %v3089
    %v3233 = vunpack.c.h.b16 %v3089
    %v3234 = vunpack.c.l.b16 %v3090
    %v3235 = vunpack.c.h.b16 %v3090
    %v3236 = vunpack.c.l.b16 %v3091
    %v3237 = vunpack.c.h.b16 %v3091
    %v3238 = vunpack.c.l.b16 %v3092
    %v3239 = vunpack.c.h.b16 %v3092
    %v3240 = vunpack.c.l.b16 %v3093
    %v3241 = vunpack.c.h.b16 %v3093
    %v3242 = vunpack.c.l.b16 %v3094
    %v3243 = vunpack.c.h.b16 %v3094
    %v3244 = vunpack.c.l.b16 %v3095
    %v3245 = vunpack.c.h.b16 %v3095
    %v3246 = vunpack.c.l.b16 %v3096
    %v3247 = vunpack.c.h.b16 %v3096
    %v3248 = vunpack.c.l.b16 %v3097
    %v3249 = vunpack.c.h.b16 %v3097
    %v3250 = vunpack.c.l.b16 %v3098
    %v3251 = vunpack.c.h.b16 %v3098
    %v3252 = vunpack.c.l.b16 %v3099
    %v3253 = vunpack.c.h.b16 %v3099
    %v3254 = vunpack.c.l.b16 %v3100
    %v3255 = vunpack.c.h.b16 %v3100
    %v3256 = vunpack.c.l.b16 %v3101
    %v3257 = vunpack.c.h.b16 %v3101
    %v3258 = vunpack.c.l.b16 %v3102
    %v3259 = vunpack.c.h.b16 %v3102
    %v3260 = vunpack.c.l.b16 %v3103
    %v3261 = vunpack.c.h.b16 %v3103
    %v3262 = vunpack.c.l.b16 %v3104
    %v3263 = vunpack.c.h.b16 %v3104
    %v3264 = vunpack.c.l.b16 %v3105
    %v3265 = vunpack.c.h.b16 %v3105
    %v3266 = vunpack.c.l.b16 %v3106
    %v3267 = vunpack.c.h.b16 %v3106
    %v3268 = vunpack.c.l.b16 %v3107
    %v3269 = vunpack.c.h.b16 %v3107
    %v3270 = vunpack.c.l.b16 %v3108
    %v3271 = vunpack.c.h.b16 %v3108
    %v3272 = vunpack.c.l.b16 %v3109
    %v3273 = vunpack.c.h.b16 %v3109
    %v3274 = vunpack.c.l.b16 %v3110
    %v3275 = vunpack.c.h.b16 %v3110
    %v3276 = vunpack.c.l.b16 %v3111
    %v3277 = vunpack.c.h.b16 %v3111
    %v3278 = vunpack.c.l.b16 %v3112
    %v3279 = vunpack.c.h.b16 %v3112
    %v3280 = vunpack.c.l.b16 %v3113
    %v3281 = vunpack.c.h.b16 %v3113
    %v3282 = vunpack.c.l.b16 %v3114
    %v3283 = vunpack.c.h.b16 %v3114
    %v3284 = vunpack.c.l.b16 %v3115
    %v3285 = vunpack.c.h.b16 %v3115
    %v3286 = vunpack.c.l.b16 %v3116
    %v3287 = vunpack.c.h.b16 %v3116
    %v3288 = vunpack.c.l.b16 %v3117
    %v3289 = vunpack.c.h.b16 %v3117
    %v3290 = vunpack.c.l.b16 %v3118
    %v3291 = vunpack.c.h.b16 %v3118
    %v3292 = vunpack.c.l.b16 %v3119
    %v3293 = vunpack.c.h.b16 %v3119
    %v3294 = vunpack.c.l.b16 %v3120
    %v3295 = vunpack.c.h.b16 %v3120
    %v3296 = vunpack.c.l.b16 %v3121
    %v3297 = vunpack.c.h.b16 %v3121
    %v3298 = vunpack.c.l.b16 %v3122
    %v3299 = vunpack.c.h.b16 %v3122
    %v3300 = vunpack.c.l.b16 %v3123
    %v3301 = vunpack.c.h.b16 %v3123
    %v3302 = vunpack.c.l.b16 %v3124
    %v3303 = vunpack.c.h.b16 %v3124
    %v3304 = vunpack.c.l.b16 %v3125
    %v3305 = vunpack.c.h.b16 %v3125
    %v3306 = vunpack.c.l.b16 %v3126
    %v3307 = vunpack.c.h.b16 %v3126
    %v3308 = vunpack.c.l.b16 %v3127
    %v3309 = vunpack.c.h.b16 %v3127
    %v3310 = vunpack.c.l.b16 %v3128
    %v3311 = vunpack.c.h.b16 %v3128
    %v3312 = vunpack.c.l.b16 %v3129
    %v3313 = vunpack.c.h.b16 %v3129
    %v3314 = vunpack.c.l.b16 %v3130
    %v3315 = vunpack.c.h.b16 %v3130
    %v3316 = vunpack.c.l.b16 %v3131
    %v3317 = vunpack.c.h.b16 %v3131
    %v3318 = vunpack.c.l.b16 %v3132
    %v3319 = vunpack.c.h.b16 %v3132
    %v3320 = vunpack.c.l.b16 %v3133
    %v3321 = vunpack.c.h.b16 %v3133
    %v3322 = vunpack.c.l.b16 %v3134
    %v3323 = vunpack.c.h.b16 %v3134
    %v3324 = vunpack.c.l.b16 %v3135
    %v3325 = vunpack.c.h.b16 %v3135
    %v3326 = vunpack.c.l.b16 %v3136
    %v3327 = vunpack.c.h.b16 %v3136
    %v3328 = vunpack.c.l.b16 %v3137
    %v3329 = vunpack.c.h.b16 %v3137
    %v3330 = vpack.c.b16 %v3204, %v3202
    %v3331 = vpack.c.b16 %v3205, %v3203
    %v3332 = vpack.c.b16 %v3208, %v3206
    %v3333 = vpack.c.b16 %v3209, %v3207
    %v3334 = vpack.c.b16 %v3212, %v3210
    %v3335 = vpack.c.b16 %v3213, %v3211
    %v3336 = vpack.c.b16 %v3216, %v3214
    %v3337 = vpack.c.b16 %v3217, %v3215
    %v3338 = vpack.c.b16 %v3220, %v3218
    %v3339 = vpack.c.b16 %v3221, %v3219
    %v3340 = vpack.c.b16 %v3224, %v3222
    %v3341 = vpack.c.b16 %v3225, %v3223
    %v3342 = vpack.c.b16 %v3228, %v3226
    %v3343 = vpack.c.b16 %v3229, %v3227
    %v3344 = vpack.c.b16 %v3232, %v3230
    %v3345 = vpack.c.b16 %v3233, %v3231
    %v3346 = vpack.c.b16 %v3236, %v3234
    %v3347 = vpack.c.b16 %v3237, %v3235
    %v3348 = vpack.c.b16 %v3240, %v3238
    %v3349 = vpack.c.b16 %v3241, %v3239
    %v3350 = vpack.c.b16 %v3244, %v3242
    %v3351 = vpack.c.b16 %v3245, %v3243
    %v3352 = vpack.c.b16 %v3248, %v3246
    %v3353 = vpack.c.b16 %v3249, %v3247
    %v3354 = vpack.c.b16 %v3252, %v3250
    %v3355 = vpack.c.b16 %v3253, %v3251
    %v3356 = vpack.c.b16 %v3256, %v3254
    %v3357 = vpack.c.b16 %v3257, %v3255
    %v3358 = vpack.c.b16 %v3260, %v3258
    %v3359 = vpack.c.b16 %v3261, %v3259
    %v3360 = vpack.c.b16 %v3264, %v3262
    %v3361 = vpack.c.b16 %v3265, %v3263
    %v3362 = vpack.c.b16 %v3268, %v3266
    %v3363 = vpack.c.b16 %v3269, %v3267
    %v3364 = vpack.c.b16 %v3272, %v3270
    %v3365 = vpack.c.b16 %v3273, %v3271
    %v3366 = vpack.c.b16 %v3276, %v3274
    %v3367 = vpack.c.b16 %v3277, %v3275
    %v3368 = vpack.c.b16 %v3280, %v3278
    %v3369 = vpack.c.b16 %v3281, %v3279
    %v3370 = vpack.c.b16 %v3284, %v3282
    %v3371 = vpack.c.b16 %v3285, %v3283
    %v3372 = vpack.c.b16 %v3288, %v3286
    %v3373 = vpack.c.b16 %v3289, %v3287
    %v3374 = vpack.c.b16 %v3292, %v3290
    %v3375 = vpack.c.b16 %v3293, %v3291
    %v3376 = vpack.c.b16 %v3296, %v3294
    %v3377 = vpack.c.b16 %v3297, %v3295
    %v3378 = vpack.c.b16 %v3300, %v3298
    %v3379 = vpack.c.b16 %v3301, %v3299
    %v3380 = vpack.c.b16 %v3304, %v3302
    %v3381 = vpack.c.b16 %v3305, %v3303
    %v3382 = vpack.c.b16 %v3308, %v3306
    %v3383 = vpack.c.b16 %v3309, %v3307
    %v3384 = vpack.c.b16 %v3312, %v3310
    %v3385 = vpack.c.b16 %v3313, %v3311
    %v3386 = vpack.c.b16 %v3316, %v3314
    %v3387 = vpack.c.b16 %v3317, %v3315
    %v3388 = vpack.c.b16 %v3320, %v3318
    %v3389 = vpack.c.b16 %v3321, %v3319
    %v3390 = vpack.c.b16 %v3324, %v3322
    %v3391 = vpack.c.b16 %v3325, %v3323
    %v3392 = vpack.c.b16 %v3328, %v3326
    %v3393 = vpack.c.b16 %v3329, %v3327
    %3458 = vmatprep.subr.bf16.mxu0 %v3331
    %3459 = vmatpush1.bf16.msra.mxu0 %v3330
    %3460 = vmatprep.subr.bf16.mxu0 %v3333
    %3461 = vmatpush1.bf16.msra.mxu0 %v3332
    %3462 = vmatprep.subr.bf16.mxu0 %v3335
    %3463 = vmatpush1.bf16.msra.mxu0 %v3334
    %3464 = vmatprep.subr.bf16.mxu0 %v3337
    %3465 = vmatpush1.bf16.msra.mxu0 %v3336
    %3466 = vmatprep.subr.bf16.mxu0 %v3339
    %3467 = vmatpush1.bf16.msra.mxu0 %v3338
    %3468 = vmatprep.subr.bf16.mxu0 %v3341
    %3469 = vmatpush1.bf16.msra.mxu0 %v3340
    %3470 = vmatprep.subr.bf16.mxu0 %v3343
    %3471 = vmatpush1.bf16.msra.mxu0 %v3342
    %3472 = vmatprep.subr.bf16.mxu0 %v3345
    %3473 = vmatpush1.bf16.msra.mxu0 %v3344
    %3474 = vmatprep.subr.bf16.mxu0 %v3347
    %3475 = vmatpush1.bf16.msra.mxu0 %v3346
    %3476 = vmatprep.subr.bf16.mxu0 %v3349
    %3477 = vmatpush1.bf16.msra.mxu0 %v3348
    %3478 = vmatprep.subr.bf16.mxu0 %v3351
    %3479 = vmatpush1.bf16.msra.mxu0 %v3350
    %3480 = vmatprep.subr.bf16.mxu0 %v3353
    %3481 = vmatpush1.bf16.msra.mxu0 %v3352
    %3482 = vmatprep.subr.bf16.mxu0 %v3355
    %3483 = vmatpush1.bf16.msra.mxu0 %v3354
    %3484 = vmatprep.subr.bf16.mxu0 %v3357
    %3485 = vmatpush1.bf16.msra.mxu0 %v3356
    %3486 = vmatprep.subr.bf16.mxu0 %v3359
    %3487 = vmatpush1.bf16.msra.mxu0 %v3358
    %3488 = vmatprep.subr.bf16.mxu0 %v3361
    %3489 = vmatpush1.bf16.msra.mxu0 %v3360
    %3490 = vmatprep.mubr.bf16.mxu0 %v3070
    %3491 = vmatmul.mubr.bf16.gmra.mrb[0].mxu0 %v3069
    %v3492 = vpop.f32.mrb[0].mxu0
    %v3493 = vadd.f32 0.0, %v3492
    %v3494 = vpop.f32.mrb[0].mxu0
    %v3495 = vadd.f32 0.0, %v3494
    %v3496 = vpop.f32.mrb[0].mxu0
    %v3497 = vadd.f32 0.0, %v3496
    %v3498 = vpop.f32.mrb[0].mxu0
    %v3499 = vadd.f32 0.0, %v3498
    %3500 = vdwg.mxu0
    %3501 = vmatprep.subr.bf16.mxu0 %v3363
    %3502 = vmatpush1.bf16.msra.mxu0 %v3362
    %3503 = vmatprep.subr.bf16.mxu0 %v3365
    %3504 = vmatpush1.bf16.msra.mxu0 %v3364
    %3505 = vmatprep.subr.bf16.mxu0 %v3367
    %3506 = vmatpush1.bf16.msra.mxu0 %v3366
    %3507 = vmatprep.subr.bf16.mxu0 %v3369
    %3508 = vmatpush1.bf16.msra.mxu0 %v3368
    %3509 = vmatprep.subr.bf16.mxu0 %v3371
    %3510 = vmatpush1.bf16.msra.mxu0 %v3370
    %3511 = vmatprep.subr.bf16.mxu0 %v3373
    %3512 = vmatpush1.bf16.msra.mxu0 %v3372
    %3513 = vmatprep.subr.bf16.mxu0 %v3375
    %3514 = vmatpush1.bf16.msra.mxu0 %v3374
    %3515 = vmatprep.subr.bf16.mxu0 %v3377
    %3516 = vmatpush1.bf16.msra.mxu0 %v3376
    %3517 = vmatprep.subr.bf16.mxu0 %v3379
    %3518 = vmatpush1.bf16.msra.mxu0 %v3378
    %3519 = vmatprep.subr.bf16.mxu0 %v3381
    %3520 = vmatpush1.bf16.msra.mxu0 %v3380
    %3521 = vmatprep.subr.bf16.mxu0 %v3383
    %3522 = vmatpush1.bf16.msra.mxu0 %v3382
    %3523 = vmatprep.subr.bf16.mxu0 %v3385
    %3524 = vmatpush1.bf16.msra.mxu0 %v3384
    %3525 = vmatprep.subr.bf16.mxu0 %v3387
    %3526 = vmatpush1.bf16.msra.mxu0 %v3386
    %3527 = vmatprep.subr.bf16.mxu0 %v3389
    %3528 = vmatpush1.bf16.msra.mxu0 %v3388
    %3529 = vmatprep.subr.bf16.mxu0 %v3391
    %3530 = vmatpush1.bf16.msra.mxu0 %v3390
    %3531 = vmatprep.subr.bf16.mxu0 %v3393
    %3532 = vmatpush1.bf16.msra.mxu0 %v3392
    %3533 = vmatprep.mubr.bf16.mxu0 %v3072
    %3534 = vmatmul.mubr.bf16.gmra.mrb[0].mxu0 %v3071
    %v3535 = vpop.f32.mrb[0].mxu0
    %v3536 = vadd.f32 %v3493, %v3535
    %v3537 = vpop.f32.mrb[0].mxu0
    %v3538 = vadd.f32 %v3495, %v3537
    %v3539 = vpop.f32.mrb[0].mxu0
    %v3540 = vadd.f32 %v3497, %v3539
    %v3541 = vpop.f32.mrb[0].mxu0
    %v3542 = vadd.f32 %v3499, %v3541
    %3543 = vdwg.mxu0
    %v3544 = vadd.f32 %v2996, %v3536
    %v3545 = vadd.f32 %v2998, %v3538
    %v3546 = vadd.f32 %v3000, %v3540
    %v3547 = vadd.f32 %v3002, %v3542
    %v3548 = vld [vmem:[%s5] sm:$0x3]
    %v3550 = vlaneseq
    %v3551 = vshrl.u32 %v3550, 7
    %v3552 = vsub.s32 0, %v3551
    %v3553 = vrot.slane %v3548, %v3552
    %v3554 = vlaneseq
    %v3555 = vshrl.u32 %v3554, 7
    %v3556 = vsub.s32 1, %v3555
    %v3557 = vrot.slane %v3548, %v3556
    %v3560 = vmul.f32 %v3544, %v3553
    %v3561 = vmul.f32 %v3545, %v3557
    %v3562 = vmul.f32 %v3546, %v3553
    %v3563 = vmul.f32 %v3547, %v3557
    %v3564 = vld [vmem:[%s6] sm:$0x3]
    %v3566 = vlaneseq
    %v3567 = vshrl.u32 %v3566, 7
    %v3568 = vsub.s32 0, %v3567
    %v3569 = vrot.slane %v3564, %v3568
    %v3570 = vlaneseq
    %v3571 = vshrl.u32 %v3570, 7
    %v3572 = vsub.s32 1, %v3571
    %v3573 = vrot.slane %v3564, %v3572
    %v3576 = vadd.f32 %v3560, %v3569
    %v3577 = vadd.f32 %v3561, %v3573
    %v3578 = vadd.f32 %v3562, %v3569
    %v3579 = vadd.f32 %v3563, %v3573
    %v3580 = vmax.f32 %v3576, 0.0
    %v3581 = vmax.f32 %v3577, 0.0
    %v3582 = vmax.f32 %v3578, 0.0
    %v3583 = vmax.f32 %v3579, 0.0
    %v3588 = vcombine.low %v3580, %v3581
    %v3589 = vcombine.high %v3580, %v3581
    %v3591 = vunpack.c.l.s4 1983009808
    %v3592 = vunpack.c.0.s8 %v3591
    %v3593 = vlaneseq
    %v3594 = vshrl.u32 %v3593, 7
    %v3595 = vsub.s32 %v3592, %v3594
    %v3596 = vrot.slane %v3588, %v3595
    %v3598 = vunpack.c.l.s4 1983009808
    %v3599 = vunpack.c.0.s8 %v3598
    %v3600 = vlaneseq
    %v3601 = vshrl.u32 %v3600, 7
    %v3602 = vsub.s32 %v3599, %v3601
    %v3603 = vrot.slane %v3589, %v3602
    %v3604 = vcombine.high %v3596, %v3596
    %v3605 = vcombine.high %v3603, %v3603
    %v3606 = vcombine.low %v3582, %v3583
    %v3607 = vcombine.high %v3582, %v3583
    %v3609 = vunpack.c.l.s4 1983009808
    %v3610 = vunpack.c.0.s8 %v3609
    %v3611 = vlaneseq
    %v3612 = vshrl.u32 %v3611, 7
    %v3613 = vsub.s32 %v3610, %v3612
    %v3614 = vrot.slane %v3606, %v3613
    %v3616 = vunpack.c.l.s4 1983009808
    %v3617 = vunpack.c.0.s8 %v3616
    %v3618 = vlaneseq
    %v3619 = vshrl.u32 %v3618, 7
    %v3620 = vsub.s32 %v3617, %v3619
    %v3621 = vrot.slane %v3607, %v3620
    %v3622 = vcombine.high %v3614, %v3614
    %v3623 = vcombine.high %v3621, %v3621
    %v3632 = vrot.slane %v3596, 7
    %v3633 = vrot.slane %v3632, 2
    %v3634 = vrot.slane %v3604, 7
    %v3635 = vrot.slane %v3634, 2
    %v3636 = vrot.slane %v3603, 7
    %v3637 = vrot.slane %v3636, 2
    %v3638 = vrot.slane %v3605, 7
    %v3639 = vrot.slane %v3638, 2
    %v3640 = vrot.slane %v3614, 7
    %v3641 = vrot.slane %v3640, 2
    %v3642 = vrot.slane %v3622, 7
    %v3643 = vrot.slane %v3642, 2
    %v3644 = vrot.slane %v3621, 7
    %v3645 = vrot.slane %v3644, 2
    %v3646 = vrot.slane %v3623, 7
    %v3647 = vrot.slane %v3646, 2
    %v3656 = vmax.f32 %v3596, %v3633
    %v3657 = vmax.f32 %v3604, %v3635
    %v3658 = vmax.f32 %v3603, %v3637
    %v3659 = vmax.f32 %v3605, %v3639
    %v3660 = vmax.f32 %v3614, %v3641
    %v3661 = vmax.f32 %v3622, %v3643
    %v3662 = vmax.f32 %v3621, %v3645
    %v3663 = vmax.f32 %v3623, %v3647
    %v3672 = vlaneseq
    %v3673 = vshrl.u32 %v3672, 7
    %v3674 = vsub.s32 0, %v3673
    %v3675 = vrot.slane %v3656, %v3674
    %v3676 = vlaneseq
    %v3677 = vshrl.u32 %v3676, 7
    %v3678 = vsub.s32 2, %v3677
    %v3679 = vrot.slane %v3656, %v3678
    %v3680 = vlaneseq
    %v3681 = vshrl.u32 %v3680, 7
    %v3682 = vsub.s32 0, %v3681
    %v3683 = vrot.slane %v3657, %v3682
    %v3684 = vlaneseq
    %v3685 = vshrl.u32 %v3684, 7
    %v3686 = vsub.s32 2, %v3685
    %v3687 = vrot.slane %v3657, %v3686
    %v3688 = vlaneseq
    %v3689 = vshrl.u32 %v3688, 7
    %v3690 = vsub.s32 0, %v3689
    %v3691 = vrot.slane %v3658, %v3690
    %v3692 = vlaneseq
    %v3693 = vshrl.u32 %v3692, 7
    %v3694 = vsub.s32 2, %v3693
    %v3695 = vrot.slane %v3658, %v3694
    %v3696 = vlaneseq
    %v3697 = vshrl.u32 %v3696, 7
    %v3698 = vsub.s32 0, %v3697
    %v3699 = vrot.slane %v3659, %v3698
    %v3700 = vlaneseq
    %v3701 = vshrl.u32 %v3700, 7
    %v3702 = vsub.s32 2, %v3701
    %v3703 = vrot.slane %v3659, %v3702
    %v3704 = vlaneseq
    %v3705 = vshrl.u32 %v3704, 7
    %v3706 = vsub.s32 0, %v3705
    %v3707 = vrot.slane %v3660, %v3706
    %v3708 = vlaneseq
    %v3709 = vshrl.u32 %v3708, 7
    %v3710 = vsub.s32 2, %v3709
    %v3711 = vrot.slane %v3660, %v3710
    %v3712 = vlaneseq
    %v3713 = vshrl.u32 %v3712, 7
    %v3714 = vsub.s32 0, %v3713
    %v3715 = vrot.slane %v3661, %v3714
    %v3716 = vlaneseq
    %v3717 = vshrl.u32 %v3716, 7
    %v3718 = vsub.s32 2, %v3717
    %v3719 = vrot.slane %v3661, %v3718
    %v3720 = vlaneseq
    %v3721 = vshrl.u32 %v3720, 7
    %v3722 = vsub.s32 0, %v3721
    %v3723 = vrot.slane %v3662, %v3722
    %v3724 = vlaneseq
    %v3725 = vshrl.u32 %v3724, 7
    %v3726 = vsub.s32 2, %v3725
    %v3727 = vrot.slane %v3662, %v3726
    %v3728 = vlaneseq
    %v3729 = vshrl.u32 %v3728, 7
    %v3730 = vsub.s32 0, %v3729
    %v3731 = vrot.slane %v3663, %v3730
    %v3732 = vlaneseq
    %v3733 = vshrl.u32 %v3732, 7
    %v3734 = vsub.s32 2, %v3733
    %v3735 = vrot.slane %v3663, %v3734
    %v3736 = vsel %vm1412, %v3683, %v3675
    %v3737 = vsel %vm1414, %v3691, %v3736
    %v3738 = vsel %vm1416, %v3699, %v3737
    %v3739 = vsel %vm1418, %v3707, %v3738
    %v3740 = vsel %vm1420, %v3715, %v3739
    %v3741 = vsel %vm1422, %v3723, %v3740
    %v3742 = vsel %vm1424, %v3731, %v3741
    %v3743 = vsel %vm1412, %v3687, %v3679
    %v3744 = vsel %vm1414, %v3695, %v3743
    %v3745 = vsel %vm1416, %v3703, %v3744
    %v3746 = vsel %vm1418, %v3711, %v3745
    %v3747 = vsel %vm1420, %v3719, %v3746
    %v3748 = vsel %vm1422, %v3727, %v3747
    %v3749 = vsel %vm1424, %v3735, %v3748
    %3752 = vrot.lane.b32.xlu0 %v3742, 96
    %v3753 = vpop.permute.xlu0 %3752
    %3754 = vrot.lane.b32.xlu0 %v3749, 96
    %v3755 = vpop.permute.xlu0 %3754
    %v3756 = vsel %vm1501, %v3753, %v3755
    %v3757 = vsel %vm1501, %v3755, %v3753
    %v3760 = vcombine.low %v3756, %v3757
    %v3761 = vcombine.high %v3756, %v3757
    %v3763 = vunpack.c.l.s4 1983009808
    %v3764 = vunpack.c.0.s8 %v3763
    %v3765 = vlaneseq
    %v3766 = vshrl.u32 %v3765, 7
    %v3767 = vsub.s32 %v3764, %v3766
    %v3768 = vrot.slane %v3760, %v3767
    %v3770 = vunpack.c.l.s4 1983009808
    %v3771 = vunpack.c.0.s8 %v3770
    %v3772 = vlaneseq
    %v3773 = vshrl.u32 %v3772, 7
    %v3774 = vsub.s32 %v3771, %v3773
    %v3775 = vrot.slane %v3761, %v3774
    %v3776 = vcombine.high %v3768, %v3768
    %v3777 = vcombine.high %v3775, %v3775
    %v3778 = vrot.slane %v3768, 1
    %v3779 = vrot.slane %v3776, 1
    %v3780 = vrot.slane %v3775, 1
    %v3781 = vrot.slane %v3777, 1
    %v3790 = vmax.f32 %v3656, %v3768
    %v3791 = vmax.f32 %v3657, %v3778
    %v3792 = vmax.f32 %v3658, %v3776
    %v3793 = vmax.f32 %v3659, %v3779
    %v3794 = vmax.f32 %v3660, %v3775
    %v3795 = vmax.f32 %v3661, %v3780
    %v3796 = vmax.f32 %v3662, %v3777
    %v3797 = vmax.f32 %v3663, %v3781
    %v3806 = vlaneseq
    %v3807 = vshrl.u32 %v3806, 7
    %v3808 = vsub.s32 0, %v3807
    %v3809 = vrot.slane %v3790, %v3808
    %v3810 = vlaneseq
    %v3811 = vshrl.u32 %v3810, 7
    %v3812 = vsub.s32 2, %v3811
    %v3813 = vrot.slane %v3790, %v3812
    %v3814 = vlaneseq
    %v3815 = vshrl.u32 %v3814, 7
    %v3816 = vsub.s32 0, %v3815
    %v3817 = vrot.slane %v3791, %v3816
    %v3818 = vlaneseq
    %v3819 = vshrl.u32 %v3818, 7
    %v3820 = vsub.s32 2, %v3819
    %v3821 = vrot.slane %v3791, %v3820
    %v3822 = vlaneseq
    %v3823 = vshrl.u32 %v3822, 7
    %v3824 = vsub.s32 0, %v3823
    %v3825 = vrot.slane %v3792, %v3824
    %v3826 = vlaneseq
    %v3827 = vshrl.u32 %v3826, 7
    %v3828 = vsub.s32 2, %v3827
    %v3829 = vrot.slane %v3792, %v3828
    %v3830 = vlaneseq
    %v3831 = vshrl.u32 %v3830, 7
    %v3832 = vsub.s32 0, %v3831
    %v3833 = vrot.slane %v3793, %v3832
    %v3834 = vlaneseq
    %v3835 = vshrl.u32 %v3834, 7
    %v3836 = vsub.s32 2, %v3835
    %v3837 = vrot.slane %v3793, %v3836
    %v3838 = vlaneseq
    %v3839 = vshrl.u32 %v3838, 7
    %v3840 = vsub.s32 0, %v3839
    %v3841 = vrot.slane %v3794, %v3840
    %v3842 = vlaneseq
    %v3843 = vshrl.u32 %v3842, 7
    %v3844 = vsub.s32 2, %v3843
    %v3845 = vrot.slane %v3794, %v3844
    %v3846 = vlaneseq
    %v3847 = vshrl.u32 %v3846, 7
    %v3848 = vsub.s32 0, %v3847
    %v3849 = vrot.slane %v3795, %v3848
    %v3850 = vlaneseq
    %v3851 = vshrl.u32 %v3850, 7
    %v3852 = vsub.s32 2, %v3851
    %v3853 = vrot.slane %v3795, %v3852
    %v3854 = vlaneseq
    %v3855 = vshrl.u32 %v3854, 7
    %v3856 = vsub.s32 0, %v3855
    %v3857 = vrot.slane %v3796, %v3856
    %v3858 = vlaneseq
    %v3859 = vshrl.u32 %v3858, 7
    %v3860 = vsub.s32 2, %v3859
    %v3861 = vrot.slane %v3796, %v3860
    %v3862 = vlaneseq
    %v3863 = vshrl.u32 %v3862, 7
    %v3864 = vsub.s32 0, %v3863
    %v3865 = vrot.slane %v3797, %v3864
    %v3866 = vlaneseq
    %v3867 = vshrl.u32 %v3866, 7
    %v3868 = vsub.s32 2, %v3867
    %v3869 = vrot.slane %v3797, %v3868
    %v3870 = vsel %vm1414, %v3817, %v3809
    %v3871 = vsel %vm1416, %v3825, %v3870
    %v3872 = vsel %vm1418, %v3833, %v3871
    %v3873 = vsel %vm1414, %v3821, %v3813
    %v3874 = vsel %vm1416, %v3829, %v3873
    %v3875 = vsel %vm1418, %v3837, %v3874
    %v3876 = vsel %vm1414, %v3849, %v3841
    %v3877 = vsel %vm1416, %v3857, %v3876
    %v3878 = vsel %vm1418, %v3865, %v3877
    %v3879 = vsel %vm1414, %v3853, %v3845
    %v3880 = vsel %vm1416, %v3861, %v3879
    %v3881 = vsel %vm1418, %v3869, %v3880
    %3886 = vst [vmem:[#allocation4] sm:$0x1e] %v3872
    %3887 = vst [vmem:[#allocation4 + $0x8] sm:$0x1e] %v3875
    %3888 = vst [vmem:[#allocation4 + $0x10] sm:$0x1e] %v3878
    %3889 = vst [vmem:[#allocation4 + $0x18] sm:$0x1e] %v3881
    %v3890 = vld [vmem:[#allocation4] sm:$0xf]
    %v3891 = vld [vmem:[#allocation4 + $0x8] sm:$0xf]
    %v3892 = vld [vmem:[#allocation4 + $0x10] sm:$0xf]
    %v3893 = vld [vmem:[#allocation4 + $0x18] sm:$0xf]
    %v3898 = vcombine.low %v3890, %v3891
    %v3899 = vcombine.low %v3892, %v3893
    %v3900 = vcombine.low %v3898, %v3899
    %v3901 = vcombine.high %v3898, %v3899
    %v3904 = vpack.c.bf16 %v3900, %v3900
    %v3905 = vpack.c.bf16 %v3901, %v3901
    %v3906 = vld [vmem:[#allocation11] sm:$0xf]
    %v3907 = vld [vmem:[#allocation11 + $0x4] sm:$0xf]
    %v3908 = vld [vmem:[#allocation11 + $0x8] sm:$0xf]
    %v3909 = vld [vmem:[#allocation11 + $0xc] sm:$0xf]
    %v3910 = vld [vmem:[#allocation11 + $0x10] sm:$0xf]
    %v3911 = vld [vmem:[#allocation11 + $0x14] sm:$0xf]
    %v3912 = vld [vmem:[#allocation11 + $0x18] sm:$0xf]
    %v3913 = vld [vmem:[#allocation11 + $0x1c] sm:$0xf]
    %v3914 = vld [vmem:[#allocation11 + $0x20] sm:$0xf]
    %v3915 = vld [vmem:[#allocation11 + $0x24] sm:$0xf]
    %v3916 = vld [vmem:[#allocation11 + $0x28] sm:$0xf]
    %v3917 = vld [vmem:[#allocation11 + $0x2c] sm:$0xf]
    %v3918 = vld [vmem:[#allocation11 + $0x30] sm:$0xf]
    %v3919 = vld [vmem:[#allocation11 + $0x34] sm:$0xf]
    %v3920 = vld [vmem:[#allocation11 + $0x38] sm:$0xf]
    %v3921 = vld [vmem:[#allocation11 + $0x3c] sm:$0xf]
    %v3922 = vld [vmem:[#allocation11 + $0x40] sm:$0xf]
    %v3923 = vld [vmem:[#allocation11 + $0x44] sm:$0xf]
    %v3924 = vld [vmem:[#allocation11 + $0x48] sm:$0xf]
    %v3925 = vld [vmem:[#allocation11 + $0x4c] sm:$0xf]
    %v3926 = vld [vmem:[#allocation11 + $0x50] sm:$0xf]
    %v3927 = vld [vmem:[#allocation11 + $0x54] sm:$0xf]
    %v3928 = vld [vmem:[#allocation11 + $0x58] sm:$0xf]
    %v3929 = vld [vmem:[#allocation11 + $0x5c] sm:$0xf]
    %v3930 = vld [vmem:[#allocation11 + $0x60] sm:$0xf]
    %v3931 = vld [vmem:[#allocation11 + $0x64] sm:$0xf]
    %v3932 = vld [vmem:[#allocation11 + $0x68] sm:$0xf]
    %v3933 = vld [vmem:[#allocation11 + $0x6c] sm:$0xf]
    %v3934 = vld [vmem:[#allocation11 + $0x70] sm:$0xf]
    %v3935 = vld [vmem:[#allocation11 + $0x74] sm:$0xf]
    %v3936 = vld [vmem:[#allocation11 + $0x78] sm:$0xf]
    %v3937 = vld [vmem:[#allocation11 + $0x7c] sm:$0xf]
    %v3938 = vld [vmem:[#allocation4] sm:$0x1e]
    %v3939 = vld [vmem:[#allocation4 + $0x8] sm:$0x1e]
    %v3940 = vld [vmem:[#allocation4 + $0x10] sm:$0x1e]
    %v3941 = vld [vmem:[#allocation4 + $0x18] sm:$0x1e]
    %v3946 = vcombine.low %v3938, %v3939
    %v3947 = vcombine.high %v3938, %v3939
    %v3948 = vcombine.low %v3940, %v3941
    %v3949 = vcombine.high %v3940, %v3941
    %vm3950 = vcmask 1042432
    %vm3951 = vcmask 1046532
    %vm3952 = vmor %vm3950, %vm3951
    %v3953 = vrot.slane %v3946, 5
    %v3954 = vrot.slane %v3953, 4
    %v3955 = vrot.slane %v3947, 5
    %v3956 = vsel %vm3952, %v3954, %v3955
    %v3957 = vrot.slane %v3948, 5
    %v3958 = vrot.slane %v3957, 4
    %v3959 = vrot.slane %v3949, 5
    %v3960 = vsel %vm3952, %v3958, %v3959
    %v3961 = vcombine.low %v3956, %v3960
    %v3962 = vcombine.high %v3956, %v3960
    %v3965 = vpack.c.bf16 %v3961, %v3961
    %v3966 = vpack.c.bf16 %v3962, %v3962
    %s3967 = scalar_lea.vmem [#allocation11], 128
    %v3968 = vld [vmem:[%s3967] sm:$0xf]
    %v3969 = vld [vmem:[%s3967 + $0x4] sm:$0xf]
    %v3970 = vld [vmem:[%s3967 + $0x8] sm:$0xf]
    %v3971 = vld [vmem:[%s3967 + $0xc] sm:$0xf]
    %v3972 = vld [vmem:[%s3967 + $0x10] sm:$0xf]
    %v3973 = vld [vmem:[%s3967 + $0x14] sm:$0xf]
    %v3974 = vld [vmem:[%s3967 + $0x18] sm:$0xf]
    %v3975 = vld [vmem:[%s3967 + $0x1c] sm:$0xf]
    %v3976 = vld [vmem:[%s3967 + $0x20] sm:$0xf]
    %v3977 = vld [vmem:[%s3967 + $0x24] sm:$0xf]
    %v3978 = vld [vmem:[%s3967 + $0x28] sm:$0xf]
    %v3979 = vld [vmem:[%s3967 + $0x2c] sm:$0xf]
    %v3980 = vld [vmem:[%s3967 + $0x30] sm:$0xf]
    %v3981 = vld [vmem:[%s3967 + $0x34] sm:$0xf]
    %v3982 = vld [vmem:[%s3967 + $0x38] sm:$0xf]
    %v3983 = vld [vmem:[%s3967 + $0x3c] sm:$0xf]
    %v3984 = vld [vmem:[%s3967 + $0x40] sm:$0xf]
    %v3985 = vld [vmem:[%s3967 + $0x44] sm:$0xf]
    %v3986 = vld [vmem:[%s3967 + $0x48] sm:$0xf]
    %v3987 = vld [vmem:[%s3967 + $0x4c] sm:$0xf]
    %v3988 = vld [vmem:[%s3967 + $0x50] sm:$0xf]
    %v3989 = vld [vmem:[%s3967 + $0x54] sm:$0xf]
    %v3990 = vld [vmem:[%s3967 + $0x58] sm:$0xf]
    %v3991 = vld [vmem:[%s3967 + $0x5c] sm:$0xf]
    %v3992 = vld [vmem:[%s3967 + $0x60] sm:$0xf]
    %v3993 = vld [vmem:[%s3967 + $0x64] sm:$0xf]
    %v3994 = vld [vmem:[%s3967 + $0x68] sm:$0xf]
    %v3995 = vld [vmem:[%s3967 + $0x6c] sm:$0xf]
    %v3996 = vld [vmem:[%s3967 + $0x70] sm:$0xf]
    %v3997 = vld [vmem:[%s3967 + $0x74] sm:$0xf]
    %v3998 = vld [vmem:[%s3967 + $0x78] sm:$0xf]
    %v3999 = vld [vmem:[%s3967 + $0x7c] sm:$0xf]
    %v4032 = vunpack.c.l.b16 %v3968
    %v4033 = vunpack.c.l.b16 %v3969
    %v4034 = vunpack.c.l.b16 %v3970
    %v4035 = vunpack.c.l.b16 %v3971
    %v4036 = vunpack.c.l.b16 %v3972
    %v4037 = vunpack.c.l.b16 %v3973
    %v4038 = vunpack.c.l.b16 %v3974
    %v4039 = vunpack.c.l.b16 %v3975
    %v4040 = vunpack.c.l.b16 %v3976
    %v4041 = vunpack.c.l.b16 %v3977
    %v4042 = vunpack.c.l.b16 %v3978
    %v4043 = vunpack.c.l.b16 %v3979
    %v4044 = vunpack.c.l.b16 %v3980
    %v4045 = vunpack.c.l.b16 %v3981
    %v4046 = vunpack.c.l.b16 %v3982
    %v4047 = vunpack.c.l.b16 %v3983
    %v4048 = vunpack.c.l.b16 %v3984
    %v4049 = vunpack.c.l.b16 %v3985
    %v4050 = vunpack.c.l.b16 %v3986
    %v4051 = vunpack.c.l.b16 %v3987
    %v4052 = vunpack.c.l.b16 %v3988
    %v4053 = vunpack.c.l.b16 %v3989
    %v4054 = vunpack.c.l.b16 %v3990
    %v4055 = vunpack.c.l.b16 %v3991
    %v4056 = vunpack.c.l.b16 %v3992
    %v4057 = vunpack.c.l.b16 %v3993
    %v4058 = vunpack.c.l.b16 %v3994
    %v4059 = vunpack.c.l.b16 %v3995
    %v4060 = vunpack.c.l.b16 %v3996
    %v4061 = vunpack.c.l.b16 %v3997
    %v4062 = vunpack.c.l.b16 %v3998
    %v4063 = vunpack.c.l.b16 %v3999
    %v4064 = vpack.c.b16 %v4033, %v4032
    %v4065 = vpack.c.b16 %v4035, %v4034
    %v4066 = vpack.c.b16 %v4037, %v4036
    %v4067 = vpack.c.b16 %v4039, %v4038
    %v4068 = vpack.c.b16 %v4041, %v4040
    %v4069 = vpack.c.b16 %v4043, %v4042
    %v4070 = vpack.c.b16 %v4045, %v4044
    %v4071 = vpack.c.b16 %v4047, %v4046
    %v4072 = vpack.c.b16 %v4049, %v4048
    %v4073 = vpack.c.b16 %v4051, %v4050
    %v4074 = vpack.c.b16 %v4053, %v4052
    %v4075 = vpack.c.b16 %v4055, %v4054
    %v4076 = vpack.c.b16 %v4057, %v4056
    %v4077 = vpack.c.b16 %v4059, %v4058
    %v4078 = vpack.c.b16 %v4061, %v4060
    %v4079 = vpack.c.b16 %v4063, %v4062
    %4096 = vmatprep.subr.bf16.mxu0 0
    %4097 = vmatpush1.bf16.msra.mxu0 %v4064
    %4098 = vmatprep.subr.bf16.mxu0 0
    %4099 = vmatpush1.bf16.msra.mxu0 %v4065
    %4100 = vmatprep.subr.bf16.mxu0 0
    %4101 = vmatpush1.bf16.msra.mxu0 %v4066
    %4102 = vmatprep.subr.bf16.mxu0 0
    %4103 = vmatpush1.bf16.msra.mxu0 %v4067
    %4104 = vmatprep.subr.bf16.mxu0 0
    %4105 = vmatpush1.bf16.msra.mxu0 %v4068
    %4106 = vmatprep.subr.bf16.mxu0 0
    %4107 = vmatpush1.bf16.msra.mxu0 %v4069
    %4108 = vmatprep.subr.bf16.mxu0 0
    %4109 = vmatpush1.bf16.msra.mxu0 %v4070
    %4110 = vmatprep.subr.bf16.mxu0 0
    %4111 = vmatpush1.bf16.msra.mxu0 %v4071
    %4112 = vmatprep.subr.bf16.mxu0 0
    %4113 = vmatpush1.bf16.msra.mxu0 %v4072
    %4114 = vmatprep.subr.bf16.mxu0 0
    %4115 = vmatpush1.bf16.msra.mxu0 %v4073
    %4116 = vmatprep.subr.bf16.mxu0 0
    %4117 = vmatpush1.bf16.msra.mxu0 %v4074
    %4118 = vmatprep.subr.bf16.mxu0 0
    %4119 = vmatpush1.bf16.msra.mxu0 %v4075
    %4120 = vmatprep.subr.bf16.mxu0 0
    %4121 = vmatpush1.bf16.msra.mxu0 %v4076
    %4122 = vmatprep.subr.bf16.mxu0 0
    %4123 = vmatpush1.bf16.msra.mxu0 %v4077
    %4124 = vmatprep.subr.bf16.mxu0 0
    %4125 = vmatpush1.bf16.msra.mxu0 %v4078
    %4126 = vmatprep.subr.bf16.mxu0 0
    %4127 = vmatpush1.bf16.msra.mxu0 %v4079
    %4128 = vmatprep.mubr.bf16.mxu0 %v3966
    %4129 = vmatmul.mubr.bf16.gmra.mrb[0].mxu0 %v3965
    %v4130 = vpop.f32.mrb[0].mxu0
    %v4131 = vadd.f32 0.0, %v4130
    %v4132 = vpop.f32.mrb[0].mxu0
    %v4133 = vpop.f32.mrb[0].mxu0
    %v4134 = vpop.f32.mrb[0].mxu0
    %4135 = vdwg.mxu0
    %v4168 = vunpack.c.l.b16 %v3906
    %v4169 = vunpack.c.l.b16 %v3907
    %v4170 = vunpack.c.l.b16 %v3908
    %v4171 = vunpack.c.l.b16 %v3909
    %v4172 = vunpack.c.l.b16 %v3910
    %v4173 = vunpack.c.l.b16 %v3911
    %v4174 = vunpack.c.l.b16 %v3912
    %v4175 = vunpack.c.l.b16 %v3913
    %v4176 = vunpack.c.l.b16 %v3914
    %v4177 = vunpack.c.l.b16 %v3915
    %v4178 = vunpack.c.l.b16 %v3916
    %v4179 = vunpack.c.l.b16 %v3917
    %v4180 = vunpack.c.l.b16 %v3918
    %v4181 = vunpack.c.l.b16 %v3919
    %v4182 = vunpack.c.l.b16 %v3920
    %v4183 = vunpack.c.l.b16 %v3921
    %v4184 = vunpack.c.l.b16 %v3922
    %v4185 = vunpack.c.l.b16 %v3923
    %v4186 = vunpack.c.l.b16 %v3924
    %v4187 = vunpack.c.l.b16 %v3925
    %v4188 = vunpack.c.l.b16 %v3926
    %v4189 = vunpack.c.l.b16 %v3927
    %v4190 = vunpack.c.l.b16 %v3928
    %v4191 = vunpack.c.l.b16 %v3929
    %v4192 = vunpack.c.l.b16 %v3930
    %v4193 = vunpack.c.l.b16 %v3931
    %v4194 = vunpack.c.l.b16 %v3932
    %v4195 = vunpack.c.l.b16 %v3933
    %v4196 = vunpack.c.l.b16 %v3934
    %v4197 = vunpack.c.l.b16 %v3935
    %v4198 = vunpack.c.l.b16 %v3936
    %v4199 = vunpack.c.l.b16 %v3937
    %v4200 = vpack.c.b16 %v4169, %v4168
    %v4201 = vpack.c.b16 %v4171, %v4170
    %v4202 = vpack.c.b16 %v4173, %v4172
    %v4203 = vpack.c.b16 %v4175, %v4174
    %v4204 = vpack.c.b16 %v4177, %v4176
    %v4205 = vpack.c.b16 %v4179, %v4178
    %v4206 = vpack.c.b16 %v4181, %v4180
    %v4207 = vpack.c.b16 %v4183, %v4182
    %v4208 = vpack.c.b16 %v4185, %v4184
    %v4209 = vpack.c.b16 %v4187, %v4186
    %v4210 = vpack.c.b16 %v4189, %v4188
    %v4211 = vpack.c.b16 %v4191, %v4190
    %v4212 = vpack.c.b16 %v4193, %v4192
    %v4213 = vpack.c.b16 %v4195, %v4194
    %v4214 = vpack.c.b16 %v4197, %v4196
    %v4215 = vpack.c.b16 %v4199, %v4198
    %4232 = vmatprep.subr.bf16.mxu0 0
    %4233 = vmatpush1.bf16.msra.mxu0 %v4200
    %4234 = vmatprep.subr.bf16.mxu0 0
    %4235 = vmatpush1.bf16.msra.mxu0 %v4201
    %4236 = vmatprep.subr.bf16.mxu0 0
    %4237 = vmatpush1.bf16.msra.mxu0 %v4202
    %4238 = vmatprep.subr.bf16.mxu0 0
    %4239 = vmatpush1.bf16.msra.mxu0 %v4203
    %4240 = vmatprep.subr.bf16.mxu0 0
    %4241 = vmatpush1.bf16.msra.mxu0 %v4204
    %4242 = vmatprep.subr.bf16.mxu0 0
    %4243 = vmatpush1.bf16.msra.mxu0 %v4205
    %4244 = vmatprep.subr.bf16.mxu0 0
    %4245 = vmatpush1.bf16.msra.mxu0 %v4206
    %4246 = vmatprep.subr.bf16.mxu0 0
    %4247 = vmatpush1.bf16.msra.mxu0 %v4207
    %4248 = vmatprep.subr.bf16.mxu0 0
    %4249 = vmatpush1.bf16.msra.mxu0 %v4208
    %4250 = vmatprep.subr.bf16.mxu0 0
    %4251 = vmatpush1.bf16.msra.mxu0 %v4209
    %4252 = vmatprep.subr.bf16.mxu0 0
    %4253 = vmatpush1.bf16.msra.mxu0 %v4210
    %4254 = vmatprep.subr.bf16.mxu0 0
    %4255 = vmatpush1.bf16.msra.mxu0 %v4211
    %4256 = vmatprep.subr.bf16.mxu0 0
    %4257 = vmatpush1.bf16.msra.mxu0 %v4212
    %4258 = vmatprep.subr.bf16.mxu0 0
    %4259 = vmatpush1.bf16.msra.mxu0 %v4213
    %4260 = vmatprep.subr.bf16.mxu0 0
    %4261 = vmatpush1.bf16.msra.mxu0 %v4214
    %4262 = vmatprep.subr.bf16.mxu0 0
    %4263 = vmatpush1.bf16.msra.mxu0 %v4215
    %4264 = vmatprep.mubr.bf16.mxu0 %v3905
    %4265 = vmatmul.mubr.bf16.gmra.mrb[0].mxu0 %v3904
    %v4266 = vpop.f32.mrb[0].mxu0
    %v4267 = vadd.f32 %v4131, %v4266
    %v4268 = vpop.f32.mrb[0].mxu0
    %v4269 = vpop.f32.mrb[0].mxu0
    %v4270 = vpop.f32.mrb[0].mxu0
    %4271 = vdwg.mxu0
    %v4272 = vld [vmem:[#allocation4] sm:$0x3c]
    %v4273 = vld [vmem:[#allocation4 + $0x8] sm:$0x3c]
    %v4274 = vld [vmem:[#allocation4 + $0x10] sm:$0x3c]
    %v4275 = vld [vmem:[#allocation4 + $0x18] sm:$0x3c]
    %v4280 = vcombine.low %v4272, %v4273
    %v4281 = vcombine.high %v4272, %v4273
    %v4282 = vcombine.low %v4274, %v4275
    %v4283 = vcombine.high %v4274, %v4275
    %vm4284 = vcmask 1041408
    %vm4285 = vcmask 1045508
    %vm4286 = vmor %vm4284, %vm4285
    %v4287 = vrot.slane %v4280, 6
    %v4288 = vrot.slane %v4287, 4
    %v4289 = vrot.slane %v4281, 6
    %v4290 = vsel %vm4286, %v4288, %v4289
    %v4291 = vrot.slane %v4282, 6
    %v4292 = vrot.slane %v4291, 4
    %v4293 = vrot.slane %v4283, 6
    %v4294 = vsel %vm4286, %v4292, %v4293
    %v4295 = vcombine.low %v4290, %v4294
    %v4296 = vcombine.high %v4290, %v4294
    %v4299 = vpack.c.bf16 %v4295, %v4295
    %v4300 = vpack.c.bf16 %v4296, %v4296
    %s4301 = scalar_lea.vmem [#allocation11], 256
    %v4302 = vld [vmem:[%s4301] sm:$0xf]
    %v4303 = vld [vmem:[%s4301 + $0x4] sm:$0xf]
    %v4304 = vld [vmem:[%s4301 + $0x8] sm:$0xf]
    %v4305 = vld [vmem:[%s4301 + $0xc] sm:$0xf]
    %v4306 = vld [vmem:[%s4301 + $0x10] sm:$0xf]
    %v4307 = vld [vmem:[%s4301 + $0x14] sm:$0xf]
    %v4308 = vld [vmem:[%s4301 + $0x18] sm:$0xf]
    %v4309 = vld [vmem:[%s4301 + $0x1c] sm:$0xf]
    %v4310 = vld [vmem:[%s4301 + $0x20] sm:$0xf]
    %v4311 = vld [vmem:[%s4301 + $0x24] sm:$0xf]
    %v4312 = vld [vmem:[%s4301 + $0x28] sm:$0xf]
    %v4313 = vld [vmem:[%s4301 + $0x2c] sm:$0xf]
    %v4314 = vld [vmem:[%s4301 + $0x30] sm:$0xf]
    %v4315 = vld [vmem:[%s4301 + $0x34] sm:$0xf]
    %v4316 = vld [vmem:[%s4301 + $0x38] sm:$0xf]
    %v4317 = vld [vmem:[%s4301 + $0x3c] sm:$0xf]
    %v4318 = vld [vmem:[%s4301 + $0x40] sm:$0xf]
    %v4319 = vld [vmem:[%s4301 + $0x44] sm:$0xf]
    %v4320 = vld [vmem:[%s4301 + $0x48] sm:$0xf]
    %v4321 = vld [vmem:[%s4301 + $0x4c] sm:$0xf]
    %v4322 = vld [vmem:[%s4301 + $0x50] sm:$0xf]
    %v4323 = vld [vmem:[%s4301 + $0x54] sm:$0xf]
    %v4324 = vld [vmem:[%s4301 + $0x58] sm:$0xf]
    %v4325 = vld [vmem:[%s4301 + $0x5c] sm:$0xf]
    %v4326 = vld [vmem:[%s4301 + $0x60] sm:$0xf]
    %v4327 = vld [vmem:[%s4301 + $0x64] sm:$0xf]
    %v4328 = vld [vmem:[%s4301 + $0x68] sm:$0xf]
    %v4329 = vld [vmem:[%s4301 + $0x6c] sm:$0xf]
    %v4330 = vld [vmem:[%s4301 + $0x70] sm:$0xf]
    %v4331 = vld [vmem:[%s4301 + $0x74] sm:$0xf]
    %v4332 = vld [vmem:[%s4301 + $0x78] sm:$0xf]
    %v4333 = vld [vmem:[%s4301 + $0x7c] sm:$0xf]
    %v4366 = vunpack.c.l.b16 %v4302
    %v4367 = vunpack.c.l.b16 %v4303
    %v4368 = vunpack.c.l.b16 %v4304
    %v4369 = vunpack.c.l.b16 %v4305
    %v4370 = vunpack.c.l.b16 %v4306
    %v4371 = vunpack.c.l.b16 %v4307
    %v4372 = vunpack.c.l.b16 %v4308
    %v4373 = vunpack.c.l.b16 %v4309
    %v4374 = vunpack.c.l.b16 %v4310
    %v4375 = vunpack.c.l.b16 %v4311
    %v4376 = vunpack.c.l.b16 %v4312
    %v4377 = vunpack.c.l.b16 %v4313
    %v4378 = vunpack.c.l.b16 %v4314
    %v4379 = vunpack.c.l.b16 %v4315
    %v4380 = vunpack.c.l.b16 %v4316
    %v4381 = vunpack.c.l.b16 %v4317
    %v4382 = vunpack.c.l.b16 %v4318
    %v4383 = vunpack.c.l.b16 %v4319
    %v4384 = vunpack.c.l.b16 %v4320
    %v4385 = vunpack.c.l.b16 %v4321
    %v4386 = vunpack.c.l.b16 %v4322
    %v4387 = vunpack.c.l.b16 %v4323
    %v4388 = vunpack.c.l.b16 %v4324
    %v4389 = vunpack.c.l.b16 %v4325
    %v4390 = vunpack.c.l.b16 %v4326
    %v4391 = vunpack.c.l.b16 %v4327
    %v4392 = vunpack.c.l.b16 %v4328
    %v4393 = vunpack.c.l.b16 %v4329
    %v4394 = vunpack.c.l.b16 %v4330
    %v4395 = vunpack.c.l.b16 %v4331
    %v4396 = vunpack.c.l.b16 %v4332
    %v4397 = vunpack.c.l.b16 %v4333
    %v4398 = vpack.c.b16 %v4367, %v4366
    %v4399 = vpack.c.b16 %v4369, %v4368
    %v4400 = vpack.c.b16 %v4371, %v4370
    %v4401 = vpack.c.b16 %v4373, %v4372
    %v4402 = vpack.c.b16 %v4375, %v4374
    %v4403 = vpack.c.b16 %v4377, %v4376
    %v4404 = vpack.c.b16 %v4379, %v4378
    %v4405 = vpack.c.b16 %v4381, %v4380
    %v4406 = vpack.c.b16 %v4383, %v4382
    %v4407 = vpack.c.b16 %v4385, %v4384
    %v4408 = vpack.c.b16 %v4387, %v4386
    %v4409 = vpack.c.b16 %v4389, %v4388
    %v4410 = vpack.c.b16 %v4391, %v4390
    %v4411 = vpack.c.b16 %v4393, %v4392
    %v4412 = vpack.c.b16 %v4395, %v4394
    %v4413 = vpack.c.b16 %v4397, %v4396
    %4430 = vmatprep.subr.bf16.mxu0 0
    %4431 = vmatpush1.bf16.msra.mxu0 %v4398
    %4432 = vmatprep.subr.bf16.mxu0 0
    %4433 = vmatpush1.bf16.msra.mxu0 %v4399
    %4434 = vmatprep.subr.bf16.mxu0 0
    %4435 = vmatpush1.bf16.msra.mxu0 %v4400
    %4436 = vmatprep.subr.bf16.mxu0 0
    %4437 = vmatpush1.bf16.msra.mxu0 %v4401
    %4438 = vmatprep.subr.bf16.mxu0 0
    %4439 = vmatpush1.bf16.msra.mxu0 %v4402
    %4440 = vmatprep.subr.bf16.mxu0 0
    %4441 = vmatpush1.bf16.msra.mxu0 %v4403
    %4442 = vmatprep.subr.bf16.mxu0 0
    %4443 = vmatpush1.bf16.msra.mxu0 %v4404
    %4444 = vmatprep.subr.bf16.mxu0 0
    %4445 = vmatpush1.bf16.msra.mxu0 %v4405
    %4446 = vmatprep.subr.bf16.mxu0 0
    %4447 = vmatpush1.bf16.msra.mxu0 %v4406
    %4448 = vmatprep.subr.bf16.mxu0 0
    %4449 = vmatpush1.bf16.msra.mxu0 %v4407
    %4450 = vmatprep.subr.bf16.mxu0 0
    %4451 = vmatpush1.bf16.msra.mxu0 %v4408
    %4452 = vmatprep.subr.bf16.mxu0 0
    %4453 = vmatpush1.bf16.msra.mxu0 %v4409
    %4454 = vmatprep.subr.bf16.mxu0 0
    %4455 = vmatpush1.bf16.msra.mxu0 %v4410
    %4456 = vmatprep.subr.bf16.mxu0 0
    %4457 = vmatpush1.bf16.msra.mxu0 %v4411
    %4458 = vmatprep.subr.bf16.mxu0 0
    %4459 = vmatpush1.bf16.msra.mxu0 %v4412
    %4460 = vmatprep.subr.bf16.mxu0 0
    %4461 = vmatpush1.bf16.msra.mxu0 %v4413
    %4462 = vmatprep.mubr.bf16.mxu0 %v4300
    %4463 = vmatmul.mubr.bf16.gmra.mrb[0].mxu0 %v4299
    %v4464 = vpop.f32.mrb[0].mxu0
    %v4465 = vadd.f32 0.0, %v4464
    %v4466 = vpop.f32.mrb[0].mxu0
    %v4467 = vpop.f32.mrb[0].mxu0
    %v4468 = vpop.f32.mrb[0].mxu0
    %4469 = vdwg.mxu0
    %v4470 = vadd.f32 %v4267, %v4465
    %v4471 = vld [vmem:[%s8] sm:$0x1]
    %v4473 = vlaneseq
    %v4474 = vshrl.u32 %v4473, 7
    %v4475 = vsub.s32 0, %v4474
    %v4476 = vrot.slane %v4471, %v4475
    %v4478 = vmul.f32 %v4470, %v4476
    %v4479 = vld [vmem:[%s9] sm:$0x1]
    %v4481 = vlaneseq
    %v4482 = vshrl.u32 %v4481, 7
    %v4483 = vsub.s32 0, %v4482
    %v4484 = vrot.slane %v4479, %v4483
    %v4486 = vadd.f32 %v4478, %v4484
    %v4487 = vmax.f32 %v4486, 0.0
    %v4489 = vcombine.high %v4487, %v4487
    %v4491 = vunpack.c.l.s4 1983009808
    %v4492 = vunpack.c.0.s8 %v4491
    %v4493 = vlaneseq
    %v4494 = vshrl.u32 %v4493, 7
    %v4495 = vsub.s32 %v4492, %v4494
    %v4496 = vrot.slane %v4487, %v4495
    %v4498 = vunpack.c.l.s4 1983009808
    %v4499 = vunpack.c.0.s8 %v4498
    %v4500 = vlaneseq
    %v4501 = vshrl.u32 %v4500, 7
    %v4502 = vsub.s32 %v4499, %v4501
    %v4503 = vrot.slane %v4489, %v4502
    %v4504 = vcombine.high %v4496, %v4496
    %v4505 = vcombine.high %v4503, %v4503
    %v4510 = vrot.slane %v4496, 7
    %v4511 = vrot.slane %v4510, 2
    %v4512 = vrot.slane %v4504, 7
    %v4513 = vrot.slane %v4512, 2
    %v4514 = vrot.slane %v4503, 7
    %v4515 = vrot.slane %v4514, 2
    %v4516 = vrot.slane %v4505, 7
    %v4517 = vrot.slane %v4516, 2
    %v4522 = vmax.f32 %v4496, %v4511
    %v4523 = vmax.f32 %v4504, %v4513
    %v4524 = vmax.f32 %v4503, %v4515
    %v4525 = vmax.f32 %v4505, %v4517
    %v4530 = vlaneseq
    %v4531 = vshrl.u32 %v4530, 7
    %v4532 = vsub.s32 0, %v4531
    %v4533 = vrot.slane %v4522, %v4532
    %v4534 = vlaneseq
    %v4535 = vshrl.u32 %v4534, 7
    %v4536 = vsub.s32 0, %v4535
    %v4537 = vrot.slane %v4523, %v4536
    %v4538 = vlaneseq
    %v4539 = vshrl.u32 %v4538, 7
    %v4540 = vsub.s32 0, %v4539
    %v4541 = vrot.slane %v4524, %v4540
    %v4542 = vlaneseq
    %v4543 = vshrl.u32 %v4542, 7
    %v4544 = vsub.s32 0, %v4543
    %v4545 = vrot.slane %v4525, %v4544
    %v4546 = vsel %vm1412, %v4537, %v4533
    %v4547 = vsel %vm1414, %v4541, %v4546
    %v4548 = vsel %vm1416, %v4545, %v4547
    %4550 = vrot.lane.b32.xlu0 %v4548, 96
    %v4551 = vpop.permute.xlu0 %4550
    %v4554 = vunpack.c.l.s4 1983009808
    %v4555 = vunpack.c.0.s8 %v4554
    %v4556 = vlaneseq
    %v4557 = vshrl.u32 %v4556, 7
    %v4558 = vsub.s32 %v4555, %v4557
    %v4559 = vrot.slane %v4551, %v4558
    %v4560 = vcombine.high %v4559, %v4559
    %v4561 = vrot.slane %v4559, 1
    %v4562 = vrot.slane %v4560, 1
    %v4567 = vmax.f32 %v4522, %v4559
    %v4568 = vmax.f32 %v4523, %v4561
    %v4569 = vmax.f32 %v4524, %v4560
    %v4570 = vmax.f32 %v4525, %v4562
    %v4575 = vlaneseq
    %v4576 = vshrl.u32 %v4575, 7
    %v4577 = vsub.s32 0, %v4576
    %v4578 = vrot.slane %v4567, %v4577
    %v4579 = vlaneseq
    %v4580 = vshrl.u32 %v4579, 7
    %v4581 = vsub.s32 0, %v4580
    %v4582 = vrot.slane %v4568, %v4581
    %v4583 = vlaneseq
    %v4584 = vshrl.u32 %v4583, 7
    %v4585 = vsub.s32 0, %v4584
    %v4586 = vrot.slane %v4569, %v4585
    %v4587 = vlaneseq
    %v4588 = vshrl.u32 %v4587, 7
    %v4589 = vsub.s32 0, %v4588
    %v4590 = vrot.slane %v4570, %v4589
    %v4591 = vsel %vm1412, %v4582, %v4578
    %v4592 = vsel %vm1412, %v4590, %v4586
    %4595 = vst [vmem:[#allocation5 + $0x1] sm:$0x3] %v4591
    %4596 = vst [vmem:[#allocation5 + $0x5] sm:$0x3] %v4592
    %v4597 = vld [vmem:[#allocation5] sm:$0x3]
    %v4598 = vld [vmem:[#allocation5 + $0x4] sm:$0x3]
    %v4601 = vcombine.low %v4597, %v4598
    %v4603 = vunpack.c.l.s4 1983009808
    %v4604 = vunpack.c.0.s8 %v4603
    %v4605 = vlaneseq
    %v4606 = vshrl.u32 %v4605, 7
    %v4607 = vsub.s32 %v4604, %v4606
    %v4608 = vrot.slane %v4601, %v4607
    %v4610 = vpack.c.bf16 %v4608, %v4608
    %v4611 = vld [vmem:[%s10] sm:$0xf]
    %v4612 = vld [vmem:[%s10 + $0x4] sm:$0xf]
    %v4613 = vld [vmem:[%s10 + $0x8] sm:$0xf]
    %v4614 = vld [vmem:[%s10 + $0xc] sm:$0xf]
    %v4615 = vld [vmem:[%s10 + $0x10] sm:$0xf]
    %v4616 = vld [vmem:[%s10 + $0x14] sm:$0xf]
    %v4617 = vld [vmem:[%s10 + $0x18] sm:$0xf]
    %v4618 = vld [vmem:[%s10 + $0x1c] sm:$0xf]
    %v4619 = vld [vmem:[%s10 + $0x20] sm:$0xf]
    %v4620 = vld [vmem:[%s10 + $0x24] sm:$0xf]
    %v4621 = vld [vmem:[%s10 + $0x28] sm:$0xf]
    %v4622 = vld [vmem:[%s10 + $0x2c] sm:$0xf]
    %v4623 = vld [vmem:[%s10 + $0x30] sm:$0xf]
    %v4624 = vld [vmem:[%s10 + $0x34] sm:$0xf]
    %v4625 = vld [vmem:[%s10 + $0x38] sm:$0xf]
    %v4626 = vld [vmem:[%s10 + $0x3c] sm:$0xf]
    %v4627 = vld [vmem:[#allocation5 + $0x1] sm:$0x3]
    %v4628 = vld [vmem:[#allocation5 + $0x5] sm:$0x3]
    %v4631 = vcombine.low %v4627, %v4628
    %v4633 = vunpack.c.l.s4 1983009808
    %v4634 = vunpack.c.0.s8 %v4633
    %v4635 = vlaneseq
    %v4636 = vshrl.u32 %v4635, 7
    %v4637 = vsub.s32 %v4634, %v4636
    %v4638 = vrot.slane %v4631, %v4637
    %v4640 = vpack.c.bf16 %v4638, %v4638
    %s4641 = scalar_lea.vmem %s10, 64
    %v4642 = vld [vmem:[%s4641] sm:$0xf]
    %v4643 = vld [vmem:[%s4641 + $0x4] sm:$0xf]
    %v4644 = vld [vmem:[%s4641 + $0x8] sm:$0xf]
    %v4645 = vld [vmem:[%s4641 + $0xc] sm:$0xf]
    %v4646 = vld [vmem:[%s4641 + $0x10] sm:$0xf]
    %v4647 = vld [vmem:[%s4641 + $0x14] sm:$0xf]
    %v4648 = vld [vmem:[%s4641 + $0x18] sm:$0xf]
    %v4649 = vld [vmem:[%s4641 + $0x1c] sm:$0xf]
    %v4650 = vld [vmem:[%s4641 + $0x20] sm:$0xf]
    %v4651 = vld [vmem:[%s4641 + $0x24] sm:$0xf]
    %v4652 = vld [vmem:[%s4641 + $0x28] sm:$0xf]
    %v4653 = vld [vmem:[%s4641 + $0x2c] sm:$0xf]
    %v4654 = vld [vmem:[%s4641 + $0x30] sm:$0xf]
    %v4655 = vld [vmem:[%s4641 + $0x34] sm:$0xf]
    %v4656 = vld [vmem:[%s4641 + $0x38] sm:$0xf]
    %v4657 = vld [vmem:[%s4641 + $0x3c] sm:$0xf]
    %v4674 = vunpack.c.l.b16 %v4642
    %v4675 = vunpack.c.l.b16 %v4643
    %v4676 = vunpack.c.l.b16 %v4644
    %v4677 = vunpack.c.l.b16 %v4645
    %v4678 = vunpack.c.l.b16 %v4646
    %v4679 = vunpack.c.l.b16 %v4647
    %v4680 = vunpack.c.l.b16 %v4648
    %v4681 = vunpack.c.l.b16 %v4649
    %v4682 = vunpack.c.l.b16 %v4650
    %v4683 = vunpack.c.l.b16 %v4651
    %v4684 = vunpack.c.l.b16 %v4652
    %v4685 = vunpack.c.l.b16 %v4653
    %v4686 = vunpack.c.l.b16 %v4654
    %v4687 = vunpack.c.l.b16 %v4655
    %v4688 = vunpack.c.l.b16 %v4656
    %v4689 = vunpack.c.l.b16 %v4657
    %v4690 = vpack.c.b16 %v4675, %v4674
    %v4691 = vpack.c.b16 %v4677, %v4676
    %v4692 = vpack.c.b16 %v4679, %v4678
    %v4693 = vpack.c.b16 %v4681, %v4680
    %v4694 = vpack.c.b16 %v4683, %v4682
    %v4695 = vpack.c.b16 %v4685, %v4684
    %v4696 = vpack.c.b16 %v4687, %v4686
    %v4697 = vpack.c.b16 %v4689, %v4688
    %4706 = vmatprep.subr.bf16.mxu0 0
    %4707 = vmatpush1.bf16.msra.mxu0 %v4690
    %4708 = vmatprep.subr.bf16.mxu0 0
    %4709 = vmatpush1.bf16.msra.mxu0 %v4691
    %4710 = vmatprep.subr.bf16.mxu0 0
    %4711 = vmatpush1.bf16.msra.mxu0 %v4692
    %4712 = vmatprep.subr.bf16.mxu0 0
    %4713 = vmatpush1.bf16.msra.mxu0 %v4693
    %4714 = vmatprep.subr.bf16.mxu0 0
    %4715 = vmatpush1.bf16.msra.mxu0 %v4694
    %4716 = vmatprep.subr.bf16.mxu0 0
    %4717 = vmatpush1.bf16.msra.mxu0 %v4695
    %4718 = vmatprep.subr.bf16.mxu0 0
    %4719 = vmatpush1.bf16.msra.mxu0 %v4696
    %4720 = vmatprep.subr.bf16.mxu0 0
    %4721 = vmatpush1.bf16.msra.mxu0 %v4697
    %4722 = vmatprep.subr.bf16.mxu0 0
    %4723 = vmatpush1.bf16.msra.mxu0 0
    %4724 = vmatprep.subr.bf16.mxu0 0
    %4725 = vmatpush1.bf16.msra.mxu0 0
    %4726 = vmatprep.subr.bf16.mxu0 0
    %4727 = vmatpush1.bf16.msra.mxu0 0
    %4728 = vmatprep.subr.bf16.mxu0 0
    %4729 = vmatpush1.bf16.msra.mxu0 0
    %4730 = vmatprep.subr.bf16.mxu0 0
    %4731 = vmatpush1.bf16.msra.mxu0 0
    %4732 = vmatprep.subr.bf16.mxu0 0
    %4733 = vmatpush1.bf16.msra.mxu0 0
    %4734 = vmatprep.subr.bf16.mxu0 0
    %4735 = vmatpush1.bf16.msra.mxu0 0
    %4736 = vmatprep.subr.bf16.mxu0 0
    %4737 = vmatpush1.bf16.msra.mxu0 0
    %4738 = vmatprep.mubr.bf16.mxu0 0
    %4739 = vmatmul.mubr.bf16.gmra.mrb[0].mxu0 %v4640
    %v4740 = vpop.f32.mrb[0].mxu0
    %v4741 = vadd.f32 0.0, %v4740
    %v4742 = vpop.f32.mrb[0].mxu0
    %v4743 = vpop.f32.mrb[0].mxu0
    %v4744 = vpop.f32.mrb[0].mxu0
    %4745 = vdwg.mxu0
    %v4762 = vunpack.c.l.b16 %v4611
    %v4763 = vunpack.c.l.b16 %v4612
    %v4764 = vunpack.c.l.b16 %v4613
    %v4765 = vunpack.c.l.b16 %v4614
    %v4766 = vunpack.c.l.b16 %v4615
    %v4767 = vunpack.c.l.b16 %v4616
    %v4768 = vunpack.c.l.b16 %v4617
    %v4769 = vunpack.c.l.b16 %v4618
    %v4770 = vunpack.c.l.b16 %v4619
    %v4771 = vunpack.c.l.b16 %v4620
    %v4772 = vunpack.c.l.b16 %v4621
    %v4773 = vunpack.c.l.b16 %v4622
    %v4774 = vunpack.c.l.b16 %v4623
    %v4775 = vunpack.c.l.b16 %v4624
    %v4776 = vunpack.c.l.b16 %v4625
    %v4777 = vunpack.c.l.b16 %v4626
    %v4778 = vpack.c.b16 %v4763, %v4762
    %v4779 = vpack.c.b16 %v4765, %v4764
    %v4780 = vpack.c.b16 %v4767, %v4766
    %v4781 = vpack.c.b16 %v4769, %v4768
    %v4782 = vpack.c.b16 %v4771, %v4770
    %v4783 = vpack.c.b16 %v4773, %v4772
    %v4784 = vpack.c.b16 %v4775, %v4774
    %v4785 = vpack.c.b16 %v4777, %v4776
    %4794 = vmatprep.subr.bf16.mxu0 0
    %4795 = vmatpush1.bf16.msra.mxu0 %v4778
    %4796 = vmatprep.subr.bf16.mxu0 0
    %4797 = vmatpush1.bf16.msra.mxu0 %v4779
    %4798 = vmatprep.subr.bf16.mxu0 0
    %4799 = vmatpush1.bf16.msra.mxu0 %v4780
    %4800 = vmatprep.subr.bf16.mxu0 0
    %4801 = vmatpush1.bf16.msra.mxu0 %v4781
    %4802 = vmatprep.subr.bf16.mxu0 0
    %4803 = vmatpush1.bf16.msra.mxu0 %v4782
    %4804 = vmatprep.subr.bf16.mxu0 0
    %4805 = vmatpush1.bf16.msra.mxu0 %v4783
    %4806 = vmatprep.subr.bf16.mxu0 0
    %4807 = vmatpush1.bf16.msra.mxu0 %v4784
    %4808 = vmatprep.subr.bf16.mxu0 0
    %4809 = vmatpush1.bf16.msra.mxu0 %v4785
    %4810 = vmatprep.subr.bf16.mxu0 0
    %4811 = vmatpush1.bf16.msra.mxu0 0
    %4812 = vmatprep.subr.bf16.mxu0 0
    %4813 = vmatpush1.bf16.msra.mxu0 0
    %4814 = vmatprep.subr.bf16.mxu0 0
    %4815 = vmatpush1.bf16.msra.mxu0 0
    %4816 = vmatprep.subr.bf16.mxu0 0
    %4817 = vmatpush1.bf16.msra.mxu0 0
    %4818 = vmatprep.subr.bf16.mxu0 0
    %4819 = vmatpush1.bf16.msra.mxu0 0
    %4820 = vmatprep.subr.bf16.mxu0 0
    %4821 = vmatpush1.bf16.msra.mxu0 0
    %4822 = vmatprep.subr.bf16.mxu0 0
    %4823 = vmatpush1.bf16.msra.mxu0 0
    %4824 = vmatprep.subr.bf16.mxu0 0
    %4825 = vmatpush1.bf16.msra.mxu0 0
    %4826 = vmatprep.mubr.bf16.mxu0 0
    %4827 = vmatmul.mubr.bf16.gmra.mrb[0].mxu0 %v4610
    %v4828 = vpop.f32.mrb[0].mxu0
    %v4829 = vadd.f32 %v4741, %v4828
    %v4830 = vpop.f32.mrb[0].mxu0
    %v4831 = vpop.f32.mrb[0].mxu0
    %v4832 = vpop.f32.mrb[0].mxu0
    %4833 = vdwg.mxu0
    %v4834 = vld [vmem:[#allocation5 + $0x2] sm:$0x3]
    %v4835 = vld [vmem:[#allocation5 + $0x6] sm:$0x3]
    %v4838 = vcombine.low %v4834, %v4835
    %v4840 = vunpack.c.l.s4 1983009808
    %v4841 = vunpack.c.0.s8 %v4840
    %v4842 = vlaneseq
    %v4843 = vshrl.u32 %v4842, 7
    %v4844 = vsub.s32 %v4841, %v4843
    %v4845 = vrot.slane %v4838, %v4844
    %v4847 = vpack.c.bf16 %v4845, %v4845
    %s4848 = scalar_lea.vmem %s10, 128
    %v4849 = vld [vmem:[%s4848] sm:$0xf]
    %v4850 = vld [vmem:[%s4848 + $0x4] sm:$0xf]
    %v4851 = vld [vmem:[%s4848 + $0x8] sm:$0xf]
    %v4852 = vld [vmem:[%s4848 + $0xc] sm:$0xf]
    %v4853 = vld [vmem:[%s4848 + $0x10] sm:$0xf]
    %v4854 = vld [vmem:[%s4848 + $0x14] sm:$0xf]
    %v4855 = vld [vmem:[%s4848 + $0x18] sm:$0xf]
    %v4856 = vld [vmem:[%s4848 + $0x1c] sm:$0xf]
    %v4857 = vld [vmem:[%s4848 + $0x20] sm:$0xf]
    %v4858 = vld [vmem:[%s4848 + $0x24] sm:$0xf]
    %v4859 = vld [vmem:[%s4848 + $0x28] sm:$0xf]
    %v4860 = vld [vmem:[%s4848 + $0x2c] sm:$0xf]
    %v4861 = vld [vmem:[%s4848 + $0x30] sm:$0xf]
    %v4862 = vld [vmem:[%s4848 + $0x34] sm:$0xf]
    %v4863 = vld [vmem:[%s4848 + $0x38] sm:$0xf]
    %v4864 = vld [vmem:[%s4848 + $0x3c] sm:$0xf]
    %v4881 = vunpack.c.l.b16 %v4849
    %v4882 = vunpack.c.l.b16 %v4850
    %v4883 = vunpack.c.l.b16 %v4851
    %v4884 = vunpack.c.l.b16 %v4852
    %v4885 = vunpack.c.l.b16 %v4853
    %v4886 = vunpack.c.l.b16 %v4854
    %v4887 = vunpack.c.l.b16 %v4855
    %v4888 = vunpack.c.l.b16 %v4856
    %v4889 = vunpack.c.l.b16 %v4857
    %v4890 = vunpack.c.l.b16 %v4858
    %v4891 = vunpack.c.l.b16 %v4859
    %v4892 = vunpack.c.l.b16 %v4860
    %v4893 = vunpack.c.l.b16 %v4861
    %v4894 = vunpack.c.l.b16 %v4862
    %v4895 = vunpack.c.l.b16 %v4863
    %v4896 = vunpack.c.l.b16 %v4864
    %v4897 = vpack.c.b16 %v4882, %v4881
    %v4898 = vpack.c.b16 %v4884, %v4883
    %v4899 = vpack.c.b16 %v4886, %v4885
    %v4900 = vpack.c.b16 %v4888, %v4887
    %v4901 = vpack.c.b16 %v4890, %v4889
    %v4902 = vpack.c.b16 %v4892, %v4891
    %v4903 = vpack.c.b16 %v4894, %v4893
    %v4904 = vpack.c.b16 %v4896, %v4895
    %4913 = vmatprep.subr.bf16.mxu0 0
    %4914 = vmatpush1.bf16.msra.mxu0 %v4897
    %4915 = vmatprep.subr.bf16.mxu0 0
    %4916 = vmatpush1.bf16.msra.mxu0 %v4898
    %4917 = vmatprep.subr.bf16.mxu0 0
    %4918 = vmatpush1.bf16.msra.mxu0 %v4899
    %4919 = vmatprep.subr.bf16.mxu0 0
    %4920 = vmatpush1.bf16.msra.mxu0 %v4900
    %4921 = vmatprep.subr.bf16.mxu0 0
    %4922 = vmatpush1.bf16.msra.mxu0 %v4901
    %4923 = vmatprep.subr.bf16.mxu0 0
    %4924 = vmatpush1.bf16.msra.mxu0 %v4902
    %4925 = vmatprep.subr.bf16.mxu0 0
    %4926 = vmatpush1.bf16.msra.mxu0 %v4903
    %4927 = vmatprep.subr.bf16.mxu0 0
    %4928 = vmatpush1.bf16.msra.mxu0 %v4904
    %4929 = vmatprep.subr.bf16.mxu0 0
    %4930 = vmatpush1.bf16.msra.mxu0 0
    %4931 = vmatprep.subr.bf16.mxu0 0
    %4932 = vmatpush1.bf16.msra.mxu0 0
    %4933 = vmatprep.subr.bf16.mxu0 0
    %4934 = vmatpush1.bf16.msra.mxu0 0
    %4935 = vmatprep.subr.bf16.mxu0 0
    %4936 = vmatpush1.bf16.msra.mxu0 0
    %4937 = vmatprep.subr.bf16.mxu0 0
    %4938 = vmatpush1.bf16.msra.mxu0 0
    %4939 = vmatprep.subr.bf16.mxu0 0
    %4940 = vmatpush1.bf16.msra.mxu0 0
    %4941 = vmatprep.subr.bf16.mxu0 0
    %4942 = vmatpush1.bf16.msra.mxu0 0
    %4943 = vmatprep.subr.bf16.mxu0 0
    %4944 = vmatpush1.bf16.msra.mxu0 0
    %4945 = vmatprep.mubr.bf16.mxu0 0
    %4946 = vmatmul.mubr.bf16.gmra.mrb[0].mxu0 %v4847
    %v4947 = vpop.f32.mrb[0].mxu0
    %v4948 = vadd.f32 0.0, %v4947
    %v4949 = vpop.f32.mrb[0].mxu0
    %v4950 = vpop.f32.mrb[0].mxu0
    %v4951 = vpop.f32.mrb[0].mxu0
    %4952 = vdwg.mxu0
    %v4953 = vadd.f32 %v4829, %v4948
    %v4954 = vld [vmem:[%s11] sm:$0x1]
    %v4956 = vlaneseq
    %v4957 = vshrl.u32 %v4956, 7
    %v4958 = vsub.s32 0, %v4957
    %v4959 = vrot.slane %v4954, %v4958
    %v4961 = vmul.f32 %v4953, %v4959
    %v4962 = vld [vmem:[%s12] sm:$0x1]
    %v4964 = vlaneseq
    %v4965 = vshrl.u32 %v4964, 7
    %v4966 = vsub.s32 0, %v4965
    %v4967 = vrot.slane %v4962, %v4966
    %v4969 = vadd.f32 %v4961, %v4967
    %v4970 = vmax.f32 %v4969, 0.0
    %4972 = vrot.lane.b32.xlu0 %v4970, 96
    %v4973 = vpop.permute.xlu0 %4972
    %v4975 = vadd.f32 %v4970, %v4973
    %v4978 = vunpack.c.l.s4 1983009808
    %v4979 = vunpack.c.0.s8 %v4978
    %v4980 = vlaneseq
    %v4981 = vshrl.u32 %v4980, 7
    %v4982 = vsub.s32 %v4979, %v4981
    %v4983 = vrot.slane %v4975, %v4982
    %v4984 = vcombine.high %v4983, %v4983
    %v4987 = vrot.slane %v4983, 7
    %v4988 = vrot.slane %v4987, 2
    %v4989 = vrot.slane %v4984, 7
    %v4990 = vrot.slane %v4989, 2
    %v4993 = vadd.f32 %v4983, %v4988
    %v4994 = vadd.f32 %v4984, %v4990
    %v4995 = vmul.f32 %v4993, 0.25
    %v4996 = vmul.f32 %v4994, 0.25
    %v4999 = vlaneseq
    %v5000 = vshrl.u32 %v4999, 7
    %v5001 = vsub.s32 0, %v5000
    %v5002 = vrot.slane %v4995, %v5001
    %v5003 = vlaneseq
    %v5004 = vshrl.u32 %v5003, 7
    %v5005 = vsub.s32 0, %v5004
    %v5006 = vrot.slane %v4996, %v5005
    %v5007 = vsel %vm1412, %v5006, %v5002
    %vm5009 = vcmask 254976
    %5010 = vst.msk [vmem:[#allocation13] sm:$0x3] %vm5009, %v5007
    %v5011 = vld [vmem:[%s13] sm:$0x1]
    %v5013 = vlaneseq
    %v5014 = vshrl.u32 %v5013, 7
    %v5015 = vsub.s32 0, %v5014
    %v5016 = vrot.slane %v5011, %v5015
    %v5018 = vunpack.c.l.s4 1983009808
    %v5019 = vunpack.c.0.s8 %v5018
    %v5020 = vlaneseq
    %v5021 = vshrl.u32 %v5020, 7
    %v5022 = vsub.s32 %v5019, %v5021
    %v5023 = vrot.slane %v5016, %v5022
    %v5024 = vrot.slane %v5023, 1
    %v5027 = vmul.f32 %v4995, %v5023
    %v5028 = vmul.f32 %v4996, %v5024
    %v5029 = vld [vmem:[%s14] sm:$0x1]
    %v5031 = vlaneseq
    %v5032 = vshrl.u32 %v5031, 7
    %v5033 = vsub.s32 0, %v5032
    %v5034 = vrot.slane %v5029, %v5033
    %v5036 = vunpack.c.l.s4 1983009808
    %v5037 = vunpack.c.0.s8 %v5036
    %v5038 = vlaneseq
    %v5039 = vshrl.u32 %v5038, 7
    %v5040 = vsub.s32 %v5037, %v5039
    %v5041 = vrot.slane %v5034, %v5040
    %v5042 = vrot.slane %v5041, 1
    %v5045 = vadd.f32 %v5027, %v5041
    %v5046 = vadd.f32 %v5028, %v5042
    %v5047 = vpack.c.bf16 %v5045, %v5045
    %v5048 = vpack.c.bf16 %v5046, %v5046
    %v5049 = vld [vmem:[%s15] sm:$0xf]
    %v5050 = vld [vmem:[%s15 + $0x4] sm:$0xf]
    %v5051 = vld [vmem:[%s15 + $0x8] sm:$0xf]
    %v5052 = vld [vmem:[%s15 + $0xc] sm:$0xf]
    %v5053 = vld [vmem:[%s16] sm:$0x1]
    %v5055 = vlaneseq
    %v5056 = vshrl.u32 %v5055, 7
    %v5057 = vsub.s32 0, %v5056
    %v5058 = vrot.slane %v5053, %v5057
    %v5062 = vunpack.c.l.b16 %v5047
    %v5063 = vunpack.c.l.b16 %v5048
    %v5064 = vrot.slane %v5063, 7
    %v5065 = vsel %vm1412, %v5064, %v5062
    %v5066 = vpack.c.b16 %v5065, %v5065
    %v5071 = vunpack.c.l.b16 %v5049
    %v5072 = vunpack.c.l.b16 %v5050
    %v5073 = vunpack.c.l.b16 %v5051
    %v5074 = vunpack.c.l.b16 %v5052
    %v5075 = vpack.c.b16 %v5072, %v5071
    %v5076 = vpack.c.b16 %v5074, %v5073
    %vm5079 = vcmask 261120
    %v5081 = vsel %vm5079, %v5066, 0
    %5083 = vmatprep.subr.bf16.mxu0 0
    %5084 = vmatpush1.bf16.msra.mxu0 %v5075
    %5085 = vmatprep.subr.bf16.mxu0 0
    %5086 = vmatpush1.bf16.msra.mxu0 %v5076
    %5087 = vmatprep.subr.bf16.mxu0 0
    %5088 = vmatpush1.bf16.msra.mxu0 0
    %5089 = vmatprep.subr.bf16.mxu0 0
    %5090 = vmatpush1.bf16.msra.mxu0 0
    %5091 = vmatprep.subr.bf16.mxu0 0
    %5092 = vmatpush1.bf16.msra.mxu0 0
    %5093 = vmatprep.subr.bf16.mxu0 0
    %5094 = vmatpush1.bf16.msra.mxu0 0
    %5095 = vmatprep.subr.bf16.mxu0 0
    %5096 = vmatpush1.bf16.msra.mxu0 0
    %5097 = vmatprep.subr.bf16.mxu0 0
    %5098 = vmatpush1.bf16.msra.mxu0 0
    %5099 = vmatprep.subr.bf16.mxu0 0
    %5100 = vmatpush1.bf16.msra.mxu0 0
    %5101 = vmatprep.subr.bf16.mxu0 0
    %5102 = vmatpush1.bf16.msra.mxu0 0
    %5103 = vmatprep.subr.bf16.mxu0 0
    %5104 = vmatpush1.bf16.msra.mxu0 0
    %5105 = vmatprep.subr.bf16.mxu0 0
    %5106 = vmatpush1.bf16.msra.mxu0 0
    %5107 = vmatprep.subr.bf16.mxu0 0
    %5108 = vmatpush1.bf16.msra.mxu0 0
    %5109 = vmatprep.subr.bf16.mxu0 0
    %5110 = vmatpush1.bf16.msra.mxu0 0
    %5111 = vmatprep.subr.bf16.mxu0 0
    %5112 = vmatpush1.bf16.msra.mxu0 0
    %5113 = vmatprep.subr.bf16.mxu0 0
    %5114 = vmatpush1.bf16.msra.mxu0 0
    %5115 = vmatprep.mubr.bf16.mxu0 0
    %5116 = vmatmul.mubr.bf16.gmra.mrb[0].mxu0 %v5081
    %v5117 = vpop.f32.mrb[0].mxu0
    %v5118 = vadd.f32 %v5058, %v5117
    %v5119 = vpop.f32.mrb[0].mxu0
    %v5120 = vpop.f32.mrb[0].mxu0
    %v5121 = vpop.f32.mrb[0].mxu0
    %5122 = vdwg.mxu0
    %5123 = vst [vmem:[#allocation12] sm:$0x3] %v5118
    // Predicated region
    $region82: #{tpu_custom_call.1} parent=1 // pred_check
      _
    $region83: #{tpu_custom_call.1} parent=1 // pred_check_branch
      %5125 = sbr.rel (0) target = $region85
    $region84: #{tpu_custom_call.1} parent=1 // pred_region
      %s5127 = ssub.s32 32, 32
      %5128 = vsyncadd [#allocation8], %s5127
      %s5130 = sshll.u32 [#allocation12], 4
      %s5131 = int_to_ptr.vmem [resolvable:$true] %s5130
      %5133 = dma.vmem_to_hbm [thread:$0]  %s5131, 32, %s17, [#allocation8]
    $region85: #{tpu_custom_call.1} parent=1 // pred_fallthru
      _
    // Predicated region
    $region86: #{tpu_custom_call.1} parent=1 // pred_check
      _
    $region87: #{tpu_custom_call.1} parent=1 // pred_check_branch
      %5135 = sbr.rel (0) target = $region89
    $region88: #{tpu_custom_call.1} parent=1 // pred_region
      %s5137 = ssub.s32 32, 32
      %5138 = vsyncadd [#allocation14], %s5137
      %s5140 = sshll.u32 [#allocation13], 4
      %s5141 = int_to_ptr.vmem [resolvable:$true] %s5140
      %5143 = dma.vmem_to_hbm [thread:$0]  %s5141, 32, %s18, [#allocation14]
    $region89: #{tpu_custom_call.1} parent=1 // pred_fallthru
      _
    // Predicated region
    $region90: #{tpu_custom_call.1} parent=1 // pred_check
      _
    $region91: #{tpu_custom_call.1} parent=1 // pred_check_branch
      %5145 = sbr.rel (0) target = $region93
    $region92: #{tpu_custom_call.1} parent=1 // pred_region
      %5146 = dma.done [#allocation8], 32
    $region93: #{tpu_custom_call.1} parent=1 // pred_fallthru
      _
    // Predicated region
    $region94: #{tpu_custom_call.1} parent=1 // pred_check
      _
    $region95: #{tpu_custom_call.1} parent=1 // pred_check_branch
      %5148 = sbr.rel (0) target = $region97
    $region96: #{tpu_custom_call.1} parent=1 // pred_region
      %5149 = dma.done [#allocation14], 32
    $region97: #{tpu_custom_call.1} parent=1 // pred_fallthru
      _
    %5150 = vsyncpa [#allocation7], 1
    %5151 = vsyncpa [#allocation10], 1
    %5152 = vsyncpa [#allocation8], 1
    %5153 = vsyncpa [#allocation14], 1

</llo_original>
